<compile_context>
chip_gen: v7x
topology: tpu7x:2x2x1
jax: 0.10.0
libtpu: 0.0.40
codegen_flags: <defaults>
</compile_context>

<pallas_src>
import functools
import math

import jax
import jax.numpy as jnp
from jax import lax
from jax.experimental import pallas as pl
from jax.experimental.pallas import tpu as pltpu


# --------------------- fully fused decoder-block kernel ---------------------

def _decoder_block_kernel(enc_valid_ref,
                          x_ref, kv_ref, enc_ref,
                          wq1_ref, wkv1_ref, wo1_ref,
                          wq2_ref, wkv2_ref, wo2_ref,
                          w1_ref, b1_ref, w2_ref, b2_ref,
                          g1_ref, bln1_ref, g2_ref, bln2_ref, g3_ref, bln3_ref,
                          o_ref, *, num_heads, bb, causal_self):
    f32 = jnp.float32
    bf16 = jnp.bfloat16

    x = x_ref[...].astype(f32)        # (bb*Sq, D)  queries / residual
    kv = kv_ref[...].astype(f32)      # (bb*Sk, D)  self-attn key/value input
    enc = enc_ref[...].astype(f32)    # (bb*Se, D)  encoder outputs

    rows, D = x.shape
    Sq = rows // bb
    Sk = kv.shape[0] // bb
    Se = enc.shape[0] // bb
    hd = D // num_heads
    scale = f32(1.0 / math.sqrt(hd))

    def layernorm(s, g_ref, b_ref):
        mean = jnp.mean(s, axis=-1, keepdims=True)
        c = s - mean
        var = jnp.mean(c * c, axis=-1, keepdims=True)
        return c * lax.rsqrt(var + 1e-5) * g_ref[...] + b_ref[...]

    def mha(q_in, kv_in, s_kv, wq_ref, wkv_ref, wo_ref, mask_fn):
        # Batched projections over all bb batches: MXU-shaped matmuls, bf16 in,
        # f32 accumulation.
        q = jnp.dot(q_in.astype(bf16), wq_ref[...],
                    preferred_element_type=f32)                  # (bb*Sq, D)
        kvp = jnp.dot(kv_in.astype(bf16), wkv_ref[...],
                      preferred_element_type=f32)                # (bb*Sk, 2D)
        qb = q.astype(bf16)
        kb = kvp[:, :D].astype(bf16)
        vb = kvp[:, D:].astype(bf16)
        wo = wo_ref[...]                                         # (D, D) bf16
        outs = []
        for b in range(bb):                  # unrolled at trace time
            mask = mask_fn(b)                # (Sq, s_kv) bool or None
            acc = jnp.zeros((Sq, D), f32)
            for h in range(num_heads):       # unrolled at trace time
                qh = qb[b * Sq:(b + 1) * Sq, h * hd:(h + 1) * hd]
                kh = kb[b * s_kv:(b + 1) * s_kv, h * hd:(h + 1) * hd]
                vh = vb[b * s_kv:(b + 1) * s_kv, h * hd:(h + 1) * hd]
                # q @ k^T without materializing a transpose.
                s = lax.dot_general(qh, kh, (((1,), (1,)), ((), ())),
                                    preferred_element_type=f32) * scale
                if mask is not None:
                    s = jnp.where(mask, s, f32(-1e6))
                m = jnp.max(s, axis=-1, keepdims=True)
                p = jnp.exp(s - m)
                p = p * pl.reciprocal(jnp.sum(p, axis=-1, keepdims=True),
                                      approx=False)
                o = jnp.dot(p.astype(bf16), vh,
                            preferred_element_type=f32)          # (Sq, hd)
                # Fold Wo into the head loop: no per-head concat needed.
                acc = acc + jnp.dot(o.astype(bf16),
                                    wo[h * hd:(h + 1) * hd, :],
                                    preferred_element_type=f32)  # (Sq, D)
            outs.append(acc)
        return jnp.concatenate(outs, axis=0) if bb > 1 else outs[0]

    # ---- masked self-attention + Add&Norm ----
    if causal_self:
        row_i = lax.broadcasted_iota(jnp.int32, (Sq, Sk), 0)
        col_i = lax.broadcasted_iota(jnp.int32, (Sq, Sk), 1)
        causal_mask = col_i <= row_i + (Sk - Sq)
        self_mask = lambda b: causal_mask          # same for every batch
    else:
        self_mask = lambda b: None                 # eval: no masking
    y = mha(x, kv, Sk, wq1_ref, wkv1_ref, wo1_ref, self_mask)
    y = layernorm(x + y, g1_ref, bln1_ref)

    # ---- encoder-decoder cross attention + Add&Norm ----
    enc_col = lax.broadcasted_iota(jnp.int32, (Sq, Se), 1)
    base = pl.program_id(0) * bb
    enc_mask = lambda b: enc_col < enc_valid_ref[base + b]   # SMEM scalar read
    z = mha(y, enc, Se, wq2_ref, wkv2_ref, wo2_ref, enc_mask)
    z = layernorm(y + z, g2_ref, bln2_ref)

    # ---- position-wise FFN + Add&Norm (hidden never leaves VMEM) ----
    h = jnp.dot(z.astype(bf16), w1_ref[...],
                preferred_element_type=f32) + b1_ref[...]
    h = jnp.maximum(h, 0.0)
    f = jnp.dot(h.astype(bf16), w2_ref[...],
                preferred_element_type=f32) + b2_ref[...]
    o_ref[...] = layernorm(z + f, g3_ref, bln3_ref).astype(o_ref.dtype)


def _batch_block(B, seq_lens, row_budget=256):
    """Largest divisor bb of B whose per-block row counts fit the row budget and
    respect (8, *) sublane tiling; falls back to the smallest legal block."""
    candidates = [bb for bb in range(1, B + 1)
                  if B % bb == 0 and
                  (bb == B or all((bb * s) % 8 == 0 for s in seq_lens))]
    fitting = [bb for bb in candidates if bb * max(seq_lens) <= row_budget]
    return max(fitting) if fitting else min(candidates)


def decoder_block_pallas(X, key_values, enc_outputs, enc_valid_lens, kp,
                         num_heads, causal_self):
    B, Sq, D = X.shape
    Sk = key_values.shape[1]
    Se = enc_outputs.shape[1]
    Fh = kp["w1"].shape[1]

    bb = _batch_block(B, (Sq, Sk, Se))
    nb = B // bb
    # TODO(synk): with bb == B the grid is 1, so a v7x chip uses one TensorCore;
    #             for larger B the grid naturally exposes >= 2 parallel steps.

    x2 = X.reshape(B * Sq, D)                       # free row-major reshapes
    kv2 = key_values.reshape(B * Sk, D)
    enc2 = enc_outputs.reshape(B * Se, D)
    ev = enc_valid_lens.astype(jnp.int32).reshape(B)

    res = lambda shape: pl.BlockSpec(shape, lambda i: (0, 0))   # resident block

    out = pl.pallas_call(
        functools.partial(_decoder_block_kernel, num_heads=num_heads, bb=bb,
                          causal_self=causal_self),
        out_shape=jax.ShapeDtypeStruct((B * Sq, D), X.dtype),
        grid=(nb,),
        in_specs=[
            pl.BlockSpec(memory_space=pltpu.MemorySpace.SMEM),  # enc valid lens
            pl.BlockSpec((bb * Sq, D), lambda i: (i, 0)),       # X (residual)
            pl.BlockSpec((bb * Sk, D), lambda i: (i, 0)),       # key/values
            pl.BlockSpec((bb * Se, D), lambda i: (i, 0)),       # enc outputs
            res((D, D)), res((D, 2 * D)), res((D, D)),          # attn1 weights
            res((D, D)), res((D, 2 * D)), res((D, D)),          # attn2 weights
            res((D, Fh)), res((1, Fh)), res((Fh, D)), res((1, D)),  # FFN
            res((1, D)), res((1, D)),                           # LN1
            res((1, D)), res((1, D)),                           # LN2
            res((1, D)), res((1, D)),                           # LN3
        ],
        out_specs=pl.BlockSpec((bb * Sq, D), lambda i: (i, 0)),
        compiler_params=pltpu.CompilerParams(
            dimension_semantics=("parallel",)),
    )(ev, x2, kv2, enc2,
      kp["wq1"], kp["wkv1"], kp["wo1"],
      kp["wq2"], kp["wkv2"], kp["wo2"],
      kp["w1"], kp["b1"], kp["w2"], kp["b2"],
      kp["g1"], kp["b_ln1"], kp["g2"], kp["b_ln2"], kp["g3"], kp["b_ln3"])
    return out.reshape(B, Sq, D)


# ------------------------------ module glue --------------------------------

def prepare_kernel_params(params):
    """One-time prep: concat Wk|Wv, cast matmul weights to bf16, reshape biases."""
    bf16 = jnp.bfloat16
    D = params["attn1"]["Wq"].shape[0]
    Fh = params["ffn"]["W1"].shape[1]

    def attn(p):
        return (p["Wq"].astype(bf16),
                jnp.concatenate([p["Wk"], p["Wv"]], axis=1).astype(bf16),
                p["Wo"].astype(bf16))

    wq1, wkv1, wo1 = attn(params["attn1"])
    wq2, wkv2, wo2 = attn(params["attn2"])
    return {
        "wq1": wq1, "wkv1": wkv1, "wo1": wo1,
        "wq2": wq2, "wkv2": wkv2, "wo2": wo2,
        "w1": params["ffn"]["W1"].astype(bf16),
        "b1": params["ffn"]["b1"].reshape(1, Fh),           # f32 (VPU add)
        "w2": params["ffn"]["W2"].astype(bf16),
        "b2": params["ffn"]["b2"].reshape(1, D),
        "g1": params["ln1_g"].reshape(1, D), "b_ln1": params["ln1_b"].reshape(1, D),
        "g2": params["ln2_g"].reshape(1, D), "b_ln2": params["ln2_b"].reshape(1, D),
        "g3": params["ln3_g"].reshape(1, D), "b_ln3": params["ln3_b"].reshape(1, D),
    }


def decoder_block_forward(X, state, kparams, num_heads, block_i=0, training=True):
    """Mirrors DecoderBlock.forward. state = (enc_outputs, enc_valid_lens, caches)."""
    enc_outputs, enc_valid_lens, caches = state
    if caches[block_i] is None:
        key_values = X
    else:
        key_values = jnp.concatenate([caches[block_i], X], axis=1)
    caches = list(caches)
    caches[block_i] = key_values

    out = decoder_block_pallas(X, key_values, enc_outputs, enc_valid_lens,
                               kparams, num_heads, causal_self=training)
    return out, (enc_outputs, enc_valid_lens, caches)


# --------------------------- pure-JAX reference -----------------------------

def _ref_forward(X, enc_outputs, enc_valid_lens, params, num_heads):
    B, S, D = X.shape
    H = num_heads
    hd = D // H

    def mha_ref(qi, ki, vi, valid, p):
        Sq, Sk = qi.shape[1], ki.shape[1]
        q, k, v = qi @ p["Wq"], ki @ p["Wk"], vi @ p["Wv"]

        def split(x, Sx):
            return (x.reshape(B, Sx, H, hd).transpose(0, 2, 1, 3)
                     .reshape(B * H, Sx, hd))
        qh, kh, vh = split(q, Sq), split(k, Sk), split(v, Sk)
        scores = jnp.einsum("bqd,bkd->bqk", qh, kh) / math.sqrt(hd)
        mask = jnp.arange(Sk)[None, None, :] < valid[:, :, None]
        scores = jnp.where(mask, scores, -1e6)
        attn = jax.nn.softmax(scores, axis=-1)
        out = jnp.einsum("bqk,bkd->bqd", attn, vh)
        out = (out.reshape(B, H, Sq, hd).transpose(0, 2, 1, 3)
                  .reshape(B, Sq, D))
        return out @ p["Wo"]

    def ln(x, g, b):
        m = x.mean(-1, keepdims=True)
        v = ((x - m) ** 2).mean(-1, keepdims=True)
        return (x - m) / jnp.sqrt(v + 1e-5) * g + b

    dec_valid = jnp.broadcast_to(jnp.arange(1, S + 1)[None, :], (B * H, S))
    X2 = mha_ref(X, X, X, dec_valid, params["attn1"])
    Y = ln(X + X2, params["ln1_g"], params["ln1_b"])
    enc_valid = jnp.broadcast_to(
        jnp.repeat(enc_valid_lens, H)[:, None], (B * H, S))
    Y2 = mha_ref(Y, enc_outputs, enc_outputs, enc_valid, params["attn2"])
    Z = ln(Y + Y2, params["ln2_g"], params["ln2_b"])
    h = jnp.maximum(Z @ params["ffn"]["W1"] + params["ffn"]["b1"], 0.0)
    F = h @ params["ffn"]["W2"] + params["ffn"]["b2"]
    return ln(Z + F, params["ln3_g"], params["ln3_b"])


# --------------------------------- main -------------------------------------

def make_params(key, D, ffn_hidden):
    ks = jax.random.split(key, 12)
    s = 0.1

    def attn_p(k0, k1, k2, k3):
        return {"Wq": jax.random.normal(k0, (D, D), jnp.float32) * s,
                "Wk": jax.random.normal(k1, (D, D), jnp.float32) * s,
                "Wv": jax.random.normal(k2, (D, D), jnp.float32) * s,
                "Wo": jax.random.normal(k3, (D, D), jnp.float32) * s}

    return {
        "attn1": attn_p(ks[0], ks[1], ks[2], ks[3]),
        "attn2": attn_p(ks[4], ks[5], ks[6], ks[7]),
        "ffn": {"W1": jax.random.normal(ks[8], (D, ffn_hidden), jnp.float32) * s,
                "b1": jax.random.normal(ks[9], (ffn_hidden,), jnp.float32) * s,
                "W2": jax.random.normal(ks[10], (ffn_hidden, D), jnp.float32) * s,
                "b2": jax.random.normal(ks[11], (D,), jnp.float32) * s},
        # nn.LayerNorm default init: weight=1, bias=0
        "ln1_g": jnp.ones((D,), jnp.float32), "ln1_b": jnp.zeros((D,), jnp.float32),
        "ln2_g": jnp.ones((D,), jnp.float32), "ln2_b": jnp.zeros((D,), jnp.float32),
        "ln3_g": jnp.ones((D,), jnp.float32), "ln3_b": jnp.zeros((D,), jnp.float32),
    }


if __name__ == "__main__":
    B, S, D, H = 2, 8, 32, 4          # batch, num_steps, num_hiddens, heads
    FFN_HIDDEN = 64
    SE = 8                            # encoder sequence length

    key = jax.random.PRNGKey(0)
    kx, ke, kp = jax.random.split(key, 3)
    X = jax.random.normal(kx, (B, S, D), jnp.float32)
    enc_outputs = jax.random.normal(ke, (B, SE, D), jnp.float32)
    enc_valid_lens = jnp.array([5, 8], jnp.int32)
    params = make_params(kp, D, FFN_HIDDEN)
    kparams = prepare_kernel_params(params)

    state = (enc_outputs, enc_valid_lens, [None])
    out, new_state = decoder_block_forward(X, state, kparams, num_heads=H,
                                           block_i=0, training=True)
    out = jax.block_until_ready(out)

    ref = _ref_forward(X, enc_outputs, enc_valid_lens, params, H)
    assert out.shape == (B, S, D)
    err = float(jnp.max(jnp.abs(out - ref)))
    # Tolerance 5e-2: MXU operands are bfloat16 (f32 accumulation); softmax /
    # LayerNorm are exact f32.  Observed error is well inside this bound.
    assert jnp.allclose(out, ref, atol=5e-2, rtol=5e-2), f"max abs diff {err}"
    # state cache updated with key_values == X (first call)
    assert jnp.allclose(new_state[2][0], X)

    # TODO(synk): dropout layers are identity (p=0.0); no stochastic path implemented.
    print("KERNEL_OK")
</pallas_src>

<mosaic_0001>
module attributes {stable_mosaic.version = 11 : i64} {
  func.func @_decoder_block_kernel(%arg0: i32, %arg1: memref<2xi32, #tpu.memory_space<smem>>, %arg2: memref<16x32xf32, #tpu.memory_space<vmem>>, %arg3: memref<16x32xf32, #tpu.memory_space<vmem>>, %arg4: memref<16x32xf32, #tpu.memory_space<vmem>>, %arg5: memref<32x32xbf16, #tpu.memory_space<vmem>>, %arg6: memref<32x64xbf16, #tpu.memory_space<vmem>>, %arg7: memref<32x32xbf16, #tpu.memory_space<vmem>>, %arg8: memref<32x32xbf16, #tpu.memory_space<vmem>>, %arg9: memref<32x64xbf16, #tpu.memory_space<vmem>>, %arg10: memref<32x32xbf16, #tpu.memory_space<vmem>>, %arg11: memref<32x64xbf16, #tpu.memory_space<vmem>>, %arg12: memref<1x64xf32, #tpu.memory_space<vmem>>, %arg13: memref<64x32xbf16, #tpu.memory_space<vmem>>, %arg14: memref<1x32xf32, #tpu.memory_space<vmem>>, %arg15: memref<1x32xf32, #tpu.memory_space<vmem>>, %arg16: memref<1x32xf32, #tpu.memory_space<vmem>>, %arg17: memref<1x32xf32, #tpu.memory_space<vmem>>, %arg18: memref<1x32xf32, #tpu.memory_space<vmem>>, %arg19: memref<1x32xf32, #tpu.memory_space<vmem>>, %arg20: memref<1x32xf32, #tpu.memory_space<vmem>>, %arg21: memref<16x32xf32, #tpu.memory_space<vmem>>) attributes {dimension_semantics = [#tpu.dimension_semantics<parallel>], iteration_bounds = array<i64: 1>, scalar_prefetch = 0 : i64, scratch_operands = 0 : i64, tpu.core_type = #tpu.core_type<tc>, window_params = [{transform_indices = @transform_0, window_bounds = array<i64: 2>}, {transform_indices = @transform_1, window_bounds = array<i64: 16, 32>}, {transform_indices = @transform_2, window_bounds = array<i64: 16, 32>}, {transform_indices = @transform_3, window_bounds = array<i64: 16, 32>}, {pipeline_mode = #tpu.pipeline_mode<synchronous>, transform_indices = @transform_4, window_bounds = array<i64: 32, 32>}, {pipeline_mode = #tpu.pipeline_mode<synchronous>, transform_indices = @transform_5, window_bounds = array<i64: 32, 64>}, {pipeline_mode = #tpu.pipeline_mode<synchronous>, transform_indices = @transform_6, window_bounds = array<i64: 32, 32>}, {pipeline_mode = #tpu.pipeline_mode<synchronous>, transform_indices = @transform_7, window_bounds = array<i64: 32, 32>}, {pipeline_mode = #tpu.pipeline_mode<synchronous>, transform_indices = @transform_8, window_bounds = array<i64: 32, 64>}, {pipeline_mode = #tpu.pipeline_mode<synchronous>, transform_indices = @transform_9, window_bounds = array<i64: 32, 32>}, {pipeline_mode = #tpu.pipeline_mode<synchronous>, transform_indices = @transform_10, window_bounds = array<i64: 32, 64>}, {pipeline_mode = #tpu.pipeline_mode<synchronous>, transform_indices = @transform_11, window_bounds = array<i64: 1, 64>}, {pipeline_mode = #tpu.pipeline_mode<synchronous>, transform_indices = @transform_12, window_bounds = array<i64: 64, 32>}, {pipeline_mode = #tpu.pipeline_mode<synchronous>, transform_indices = @transform_13, window_bounds = array<i64: 1, 32>}, {pipeline_mode = #tpu.pipeline_mode<synchronous>, transform_indices = @transform_14, window_bounds = array<i64: 1, 32>}, {pipeline_mode = #tpu.pipeline_mode<synchronous>, transform_indices = @transform_15, window_bounds = array<i64: 1, 32>}, {pipeline_mode = #tpu.pipeline_mode<synchronous>, transform_indices = @transform_16, window_bounds = array<i64: 1, 32>}, {pipeline_mode = #tpu.pipeline_mode<synchronous>, transform_indices = @transform_17, window_bounds = array<i64: 1, 32>}, {pipeline_mode = #tpu.pipeline_mode<synchronous>, transform_indices = @transform_18, window_bounds = array<i64: 1, 32>}, {pipeline_mode = #tpu.pipeline_mode<synchronous>, transform_indices = @transform_19, window_bounds = array<i64: 1, 32>}, {transform_indices = @transform_20, window_bounds = array<i64: 16, 32>}]} {
    %c0 = arith.constant 0 : index
    %c0_0 = arith.constant 0 : index
    %0 = vector.load %arg2[%c0, %c0_0] : memref<16x32xf32, #tpu.memory_space<vmem>>, vector<16x32xf32>
    %c0_1 = arith.constant 0 : index
    %c0_2 = arith.constant 0 : index
    %1 = vector.load %arg3[%c0_1, %c0_2] : memref<16x32xf32, #tpu.memory_space<vmem>>, vector<16x32xf32>
    %c0_3 = arith.constant 0 : index
    %c0_4 = arith.constant 0 : index
    %2 = vector.load %arg4[%c0_3, %c0_4] : memref<16x32xf32, #tpu.memory_space<vmem>>, vector<16x32xf32>
    %3 = tpu.iota {dimensions = array<i32: 0>} : vector<8x8xi32>
    %4 = tpu.iota {dimensions = array<i32: 1>} : vector<8x8xi32>
    %c0_i32 = arith.constant 0 : i32
    %5 = vector.broadcast %c0_i32 : i32 to vector<8x8xi32>
    %6 = arith.addi %3, %5 : vector<8x8xi32>
    %7 = arith.cmpi sle, %4, %6 : vector<8x8xi32>
    %8 = arith.truncf %0 : vector<16x32xf32> to vector<16x32xbf16>
    %c0_5 = arith.constant 0 : index
    %c0_6 = arith.constant 0 : index
    %9 = vector.load %arg5[%c0_5, %c0_6] : memref<32x32xbf16, #tpu.memory_space<vmem>>, vector<32x32xbf16>
    %cst = arith.constant dense<0.000000e+00> : vector<16x32xf32>
    %10 = tpu.matmul %8, %9, %cst {dimension_numbers = #tpu.dot_dimension_numbers<[1], [0], [0], [1], [0, 0, 1, 1], [], []>} : vector<16x32xbf16>, vector<32x32xbf16>, vector<16x32xf32> -> vector<16x32xf32>
    %11 = arith.truncf %1 : vector<16x32xf32> to vector<16x32xbf16>
    %c0_7 = arith.constant 0 : index
    %c0_8 = arith.constant 0 : index
    %12 = vector.load %arg6[%c0_7, %c0_8] : memref<32x64xbf16, #tpu.memory_space<vmem>>, vector<32x64xbf16>
    %cst_9 = arith.constant dense<0.000000e+00> : vector<16x64xf32>
    %13 = tpu.matmul %11, %12, %cst_9 {dimension_numbers = #tpu.dot_dimension_numbers<[1], [0], [0], [1], [0, 0, 1, 1], [], []>} : vector<16x32xbf16>, vector<32x64xbf16>, vector<16x64xf32> -> vector<16x64xf32>
    %14 = arith.truncf %10 : vector<16x32xf32> to vector<16x32xbf16>
    %15 = vector.extract_strided_slice %13 {offsets = [0, 0], sizes = [16, 32], strides = [1, 1]} : vector<16x64xf32> to vector<16x32xf32>
    %16 = arith.truncf %15 : vector<16x32xf32> to vector<16x32xbf16>
    %17 = vector.extract_strided_slice %13 {offsets = [0, 32], sizes = [16, 32], strides = [1, 1]} : vector<16x64xf32> to vector<16x32xf32>
    %18 = arith.truncf %17 : vector<16x32xf32> to vector<16x32xbf16>
    %c0_10 = arith.constant 0 : index
    %c0_11 = arith.constant 0 : index
    %19 = vector.load %arg7[%c0_10, %c0_11] : memref<32x32xbf16, #tpu.memory_space<vmem>>, vector<32x32xbf16>
    %cst_12 = arith.constant 0.000000e+00 : f32
    %20 = vector.broadcast %cst_12 : f32 to vector<8x32xf32>
    %21 = vector.extract_strided_slice %14 {offsets = [0, 0], sizes = [8, 8], strides = [1, 1]} : vector<16x32xbf16> to vector<8x8xbf16>
    %22 = vector.extract_strided_slice %16 {offsets = [0, 0], sizes = [8, 8], strides = [1, 1]} : vector<16x32xbf16> to vector<8x8xbf16>
    %23 = vector.extract_strided_slice %18 {offsets = [0, 0], sizes = [8, 8], strides = [1, 1]} : vector<16x32xbf16> to vector<8x8xbf16>
    %cst_13 = arith.constant dense<0.000000e+00> : vector<8x8xf32>
    %24 = tpu.matmul %21, %22, %cst_13 {dimension_numbers = #tpu.dot_dimension_numbers<[1], [1], [0], [0], [0, 0, 1, 0], [], []>} : vector<8x8xbf16>, vector<8x8xbf16>, vector<8x8xf32> -> vector<8x8xf32>
    %cst_14 = arith.constant 0.353553385 : f32
    %25 = vector.broadcast %cst_14 : f32 to vector<8x8xf32>
    %26 = arith.mulf %24, %25 : vector<8x8xf32>
    %cst_15 = arith.constant -1.000000e+06 : f32
    %27 = vector.broadcast %cst_15 : f32 to vector<8x8xf32>
    %28 = arith.select %7, %26, %27 : vector<8x8xi1>, vector<8x8xf32>
    %cst_16 = arith.constant dense<0xFF800000> : vector<8xf32>
    %29 = vector.multi_reduction <maximumf>, %28, %cst_16 [1] : vector<8x8xf32> to vector<8xf32>
    %30 = vector.shape_cast %29 : vector<8xf32> to vector<8x1xf32>
    %31 = vector.broadcast %30 : vector<8x1xf32> to vector<8x8xf32>
    %32 = arith.subf %28, %31 : vector<8x8xf32>
    %33 = math.exp %32 : vector<8x8xf32>
    %cst_17 = arith.constant dense<0.000000e+00> : vector<8xf32>
    %34 = vector.multi_reduction <add>, %33, %cst_17 [1] : vector<8x8xf32> to vector<8xf32>
    %35 = vector.shape_cast %34 : vector<8xf32> to vector<8x1xf32>
    %36 = tpu.reciprocal %35 : vector<8x1xf32> -> vector<8x1xf32>
    %37 = vector.broadcast %36 : vector<8x1xf32> to vector<8x8xf32>
    %38 = arith.mulf %33, %37 : vector<8x8xf32>
    %39 = arith.truncf %38 : vector<8x8xf32> to vector<8x8xbf16>
    %cst_18 = arith.constant dense<0.000000e+00> : vector<8x8xf32>
    %40 = tpu.matmul %39, %23, %cst_18 {dimension_numbers = #tpu.dot_dimension_numbers<[1], [0], [0], [1], [0, 0, 1, 1], [], []>} : vector<8x8xbf16>, vector<8x8xbf16>, vector<8x8xf32> -> vector<8x8xf32>
    %41 = arith.truncf %40 : vector<8x8xf32> to vector<8x8xbf16>
    %42 = vector.extract_strided_slice %19 {offsets = [0, 0], sizes = [8, 32], strides = [1, 1]} : vector<32x32xbf16> to vector<8x32xbf16>
    %cst_19 = arith.constant dense<0.000000e+00> : vector<8x32xf32>
    %43 = tpu.matmul %41, %42, %cst_19 {dimension_numbers = #tpu.dot_dimension_numbers<[1], [0], [0], [1], [0, 0, 1, 1], [], []>} : vector<8x8xbf16>, vector<8x32xbf16>, vector<8x32xf32> -> vector<8x32xf32>
    %44 = arith.addf %20, %43 : vector<8x32xf32>
    %45 = vector.extract_strided_slice %14 {offsets = [0, 8], sizes = [8, 8], strides = [1, 1]} : vector<16x32xbf16> to vector<8x8xbf16>
    %46 = vector.extract_strided_slice %16 {offsets = [0, 8], sizes = [8, 8], strides = [1, 1]} : vector<16x32xbf16> to vector<8x8xbf16>
    %47 = vector.extract_strided_slice %18 {offsets = [0, 8], sizes = [8, 8], strides = [1, 1]} : vector<16x32xbf16> to vector<8x8xbf16>
    %cst_20 = arith.constant dense<0.000000e+00> : vector<8x8xf32>
    %48 = tpu.matmul %45, %46, %cst_20 {dimension_numbers = #tpu.dot_dimension_numbers<[1], [1], [0], [0], [0, 0, 1, 0], [], []>} : vector<8x8xbf16>, vector<8x8xbf16>, vector<8x8xf32> -> vector<8x8xf32>
    %cst_21 = arith.constant 0.353553385 : f32
    %49 = vector.broadcast %cst_21 : f32 to vector<8x8xf32>
    %50 = arith.mulf %48, %49 : vector<8x8xf32>
    %cst_22 = arith.constant -1.000000e+06 : f32
    %51 = vector.broadcast %cst_22 : f32 to vector<8x8xf32>
    %52 = arith.select %7, %50, %51 : vector<8x8xi1>, vector<8x8xf32>
    %cst_23 = arith.constant dense<0xFF800000> : vector<8xf32>
    %53 = vector.multi_reduction <maximumf>, %52, %cst_23 [1] : vector<8x8xf32> to vector<8xf32>
    %54 = vector.shape_cast %53 : vector<8xf32> to vector<8x1xf32>
    %55 = vector.broadcast %54 : vector<8x1xf32> to vector<8x8xf32>
    %56 = arith.subf %52, %55 : vector<8x8xf32>
    %57 = math.exp %56 : vector<8x8xf32>
    %cst_24 = arith.constant dense<0.000000e+00> : vector<8xf32>
    %58 = vector.multi_reduction <add>, %57, %cst_24 [1] : vector<8x8xf32> to vector<8xf32>
    %59 = vector.shape_cast %58 : vector<8xf32> to vector<8x1xf32>
    %60 = tpu.reciprocal %59 : vector<8x1xf32> -> vector<8x1xf32>
    %61 = vector.broadcast %60 : vector<8x1xf32> to vector<8x8xf32>
    %62 = arith.mulf %57, %61 : vector<8x8xf32>
    %63 = arith.truncf %62 : vector<8x8xf32> to vector<8x8xbf16>
    %cst_25 = arith.constant dense<0.000000e+00> : vector<8x8xf32>
    %64 = tpu.matmul %63, %47, %cst_25 {dimension_numbers = #tpu.dot_dimension_numbers<[1], [0], [0], [1], [0, 0, 1, 1], [], []>} : vector<8x8xbf16>, vector<8x8xbf16>, vector<8x8xf32> -> vector<8x8xf32>
    %65 = arith.truncf %64 : vector<8x8xf32> to vector<8x8xbf16>
    %66 = vector.extract_strided_slice %19 {offsets = [8, 0], sizes = [8, 32], strides = [1, 1]} : vector<32x32xbf16> to vector<8x32xbf16>
    %cst_26 = arith.constant dense<0.000000e+00> : vector<8x32xf32>
    %67 = tpu.matmul %65, %66, %cst_26 {dimension_numbers = #tpu.dot_dimension_numbers<[1], [0], [0], [1], [0, 0, 1, 1], [], []>} : vector<8x8xbf16>, vector<8x32xbf16>, vector<8x32xf32> -> vector<8x32xf32>
    %68 = arith.addf %44, %67 : vector<8x32xf32>
    %69 = vector.extract_strided_slice %14 {offsets = [0, 16], sizes = [8, 8], strides = [1, 1]} : vector<16x32xbf16> to vector<8x8xbf16>
    %70 = vector.extract_strided_slice %16 {offsets = [0, 16], sizes = [8, 8], strides = [1, 1]} : vector<16x32xbf16> to vector<8x8xbf16>
    %71 = vector.extract_strided_slice %18 {offsets = [0, 16], sizes = [8, 8], strides = [1, 1]} : vector<16x32xbf16> to vector<8x8xbf16>
    %cst_27 = arith.constant dense<0.000000e+00> : vector<8x8xf32>
    %72 = tpu.matmul %69, %70, %cst_27 {dimension_numbers = #tpu.dot_dimension_numbers<[1], [1], [0], [0], [0, 0, 1, 0], [], []>} : vector<8x8xbf16>, vector<8x8xbf16>, vector<8x8xf32> -> vector<8x8xf32>
    %cst_28 = arith.constant 0.353553385 : f32
    %73 = vector.broadcast %cst_28 : f32 to vector<8x8xf32>
    %74 = arith.mulf %72, %73 : vector<8x8xf32>
    %cst_29 = arith.constant -1.000000e+06 : f32
    %75 = vector.broadcast %cst_29 : f32 to vector<8x8xf32>
    %76 = arith.select %7, %74, %75 : vector<8x8xi1>, vector<8x8xf32>
    %cst_30 = arith.constant dense<0xFF800000> : vector<8xf32>
    %77 = vector.multi_reduction <maximumf>, %76, %cst_30 [1] : vector<8x8xf32> to vector<8xf32>
    %78 = vector.shape_cast %77 : vector<8xf32> to vector<8x1xf32>
    %79 = vector.broadcast %78 : vector<8x1xf32> to vector<8x8xf32>
    %80 = arith.subf %76, %79 : vector<8x8xf32>
    %81 = math.exp %80 : vector<8x8xf32>
    %cst_31 = arith.constant dense<0.000000e+00> : vector<8xf32>
    %82 = vector.multi_reduction <add>, %81, %cst_31 [1] : vector<8x8xf32> to vector<8xf32>
    %83 = vector.shape_cast %82 : vector<8xf32> to vector<8x1xf32>
    %84 = tpu.reciprocal %83 : vector<8x1xf32> -> vector<8x1xf32>
    %85 = vector.broadcast %84 : vector<8x1xf32> to vector<8x8xf32>
    %86 = arith.mulf %81, %85 : vector<8x8xf32>
    %87 = arith.truncf %86 : vector<8x8xf32> to vector<8x8xbf16>
    %cst_32 = arith.constant dense<0.000000e+00> : vector<8x8xf32>
    %88 = tpu.matmul %87, %71, %cst_32 {dimension_numbers = #tpu.dot_dimension_numbers<[1], [0], [0], [1], [0, 0, 1, 1], [], []>} : vector<8x8xbf16>, vector<8x8xbf16>, vector<8x8xf32> -> vector<8x8xf32>
    %89 = arith.truncf %88 : vector<8x8xf32> to vector<8x8xbf16>
    %90 = vector.extract_strided_slice %19 {offsets = [16, 0], sizes = [8, 32], strides = [1, 1]} : vector<32x32xbf16> to vector<8x32xbf16>
    %cst_33 = arith.constant dense<0.000000e+00> : vector<8x32xf32>
    %91 = tpu.matmul %89, %90, %cst_33 {dimension_numbers = #tpu.dot_dimension_numbers<[1], [0], [0], [1], [0, 0, 1, 1], [], []>} : vector<8x8xbf16>, vector<8x32xbf16>, vector<8x32xf32> -> vector<8x32xf32>
    %92 = arith.addf %68, %91 : vector<8x32xf32>
    %93 = vector.extract_strided_slice %14 {offsets = [0, 24], sizes = [8, 8], strides = [1, 1]} : vector<16x32xbf16> to vector<8x8xbf16>
    %94 = vector.extract_strided_slice %16 {offsets = [0, 24], sizes = [8, 8], strides = [1, 1]} : vector<16x32xbf16> to vector<8x8xbf16>
    %95 = vector.extract_strided_slice %18 {offsets = [0, 24], sizes = [8, 8], strides = [1, 1]} : vector<16x32xbf16> to vector<8x8xbf16>
    %cst_34 = arith.constant dense<0.000000e+00> : vector<8x8xf32>
    %96 = tpu.matmul %93, %94, %cst_34 {dimension_numbers = #tpu.dot_dimension_numbers<[1], [1], [0], [0], [0, 0, 1, 0], [], []>} : vector<8x8xbf16>, vector<8x8xbf16>, vector<8x8xf32> -> vector<8x8xf32>
    %cst_35 = arith.constant 0.353553385 : f32
    %97 = vector.broadcast %cst_35 : f32 to vector<8x8xf32>
    %98 = arith.mulf %96, %97 : vector<8x8xf32>
    %cst_36 = arith.constant -1.000000e+06 : f32
    %99 = vector.broadcast %cst_36 : f32 to vector<8x8xf32>
    %100 = arith.select %7, %98, %99 : vector<8x8xi1>, vector<8x8xf32>
    %cst_37 = arith.constant dense<0xFF800000> : vector<8xf32>
    %101 = vector.multi_reduction <maximumf>, %100, %cst_37 [1] : vector<8x8xf32> to vector<8xf32>
    %102 = vector.shape_cast %101 : vector<8xf32> to vector<8x1xf32>
    %103 = vector.broadcast %102 : vector<8x1xf32> to vector<8x8xf32>
    %104 = arith.subf %100, %103 : vector<8x8xf32>
    %105 = math.exp %104 : vector<8x8xf32>
    %cst_38 = arith.constant dense<0.000000e+00> : vector<8xf32>
    %106 = vector.multi_reduction <add>, %105, %cst_38 [1] : vector<8x8xf32> to vector<8xf32>
    %107 = vector.shape_cast %106 : vector<8xf32> to vector<8x1xf32>
    %108 = tpu.reciprocal %107 : vector<8x1xf32> -> vector<8x1xf32>
    %109 = vector.broadcast %108 : vector<8x1xf32> to vector<8x8xf32>
    %110 = arith.mulf %105, %109 : vector<8x8xf32>
    %111 = arith.truncf %110 : vector<8x8xf32> to vector<8x8xbf16>
    %cst_39 = arith.constant dense<0.000000e+00> : vector<8x8xf32>
    %112 = tpu.matmul %111, %95, %cst_39 {dimension_numbers = #tpu.dot_dimension_numbers<[1], [0], [0], [1], [0, 0, 1, 1], [], []>} : vector<8x8xbf16>, vector<8x8xbf16>, vector<8x8xf32> -> vector<8x8xf32>
    %113 = arith.truncf %112 : vector<8x8xf32> to vector<8x8xbf16>
    %114 = vector.extract_strided_slice %19 {offsets = [24, 0], sizes = [8, 32], strides = [1, 1]} : vector<32x32xbf16> to vector<8x32xbf16>
    %cst_40 = arith.constant dense<0.000000e+00> : vector<8x32xf32>
    %115 = tpu.matmul %113, %114, %cst_40 {dimension_numbers = #tpu.dot_dimension_numbers<[1], [0], [0], [1], [0, 0, 1, 1], [], []>} : vector<8x8xbf16>, vector<8x32xbf16>, vector<8x32xf32> -> vector<8x32xf32>
    %116 = arith.addf %92, %115 : vector<8x32xf32>
    %cst_41 = arith.constant 0.000000e+00 : f32
    %117 = vector.broadcast %cst_41 : f32 to vector<8x32xf32>
    %118 = vector.extract_strided_slice %14 {offsets = [8, 0], sizes = [8, 8], strides = [1, 1]} : vector<16x32xbf16> to vector<8x8xbf16>
    %119 = vector.extract_strided_slice %16 {offsets = [8, 0], sizes = [8, 8], strides = [1, 1]} : vector<16x32xbf16> to vector<8x8xbf16>
    %120 = vector.extract_strided_slice %18 {offsets = [8, 0], sizes = [8, 8], strides = [1, 1]} : vector<16x32xbf16> to vector<8x8xbf16>
    %cst_42 = arith.constant dense<0.000000e+00> : vector<8x8xf32>
    %121 = tpu.matmul %118, %119, %cst_42 {dimension_numbers = #tpu.dot_dimension_numbers<[1], [1], [0], [0], [0, 0, 1, 0], [], []>} : vector<8x8xbf16>, vector<8x8xbf16>, vector<8x8xf32> -> vector<8x8xf32>
    %cst_43 = arith.constant 0.353553385 : f32
    %122 = vector.broadcast %cst_43 : f32 to vector<8x8xf32>
    %123 = arith.mulf %121, %122 : vector<8x8xf32>
    %cst_44 = arith.constant -1.000000e+06 : f32
    %124 = vector.broadcast %cst_44 : f32 to vector<8x8xf32>
    %125 = arith.select %7, %123, %124 : vector<8x8xi1>, vector<8x8xf32>
    %cst_45 = arith.constant dense<0xFF800000> : vector<8xf32>
    %126 = vector.multi_reduction <maximumf>, %125, %cst_45 [1] : vector<8x8xf32> to vector<8xf32>
    %127 = vector.shape_cast %126 : vector<8xf32> to vector<8x1xf32>
    %128 = vector.broadcast %127 : vector<8x1xf32> to vector<8x8xf32>
    %129 = arith.subf %125, %128 : vector<8x8xf32>
    %130 = math.exp %129 : vector<8x8xf32>
    %cst_46 = arith.constant dense<0.000000e+00> : vector<8xf32>
    %131 = vector.multi_reduction <add>, %130, %cst_46 [1] : vector<8x8xf32> to vector<8xf32>
    %132 = vector.shape_cast %131 : vector<8xf32> to vector<8x1xf32>
    %133 = tpu.reciprocal %132 : vector<8x1xf32> -> vector<8x1xf32>
    %134 = vector.broadcast %133 : vector<8x1xf32> to vector<8x8xf32>
    %135 = arith.mulf %130, %134 : vector<8x8xf32>
    %136 = arith.truncf %135 : vector<8x8xf32> to vector<8x8xbf16>
    %cst_47 = arith.constant dense<0.000000e+00> : vector<8x8xf32>
    %137 = tpu.matmul %136, %120, %cst_47 {dimension_numbers = #tpu.dot_dimension_numbers<[1], [0], [0], [1], [0, 0, 1, 1], [], []>} : vector<8x8xbf16>, vector<8x8xbf16>, vector<8x8xf32> -> vector<8x8xf32>
    %138 = arith.truncf %137 : vector<8x8xf32> to vector<8x8xbf16>
    %139 = vector.extract_strided_slice %19 {offsets = [0, 0], sizes = [8, 32], strides = [1, 1]} : vector<32x32xbf16> to vector<8x32xbf16>
    %cst_48 = arith.constant dense<0.000000e+00> : vector<8x32xf32>
    %140 = tpu.matmul %138, %139, %cst_48 {dimension_numbers = #tpu.dot_dimension_numbers<[1], [0], [0], [1], [0, 0, 1, 1], [], []>} : vector<8x8xbf16>, vector<8x32xbf16>, vector<8x32xf32> -> vector<8x32xf32>
    %141 = arith.addf %117, %140 : vector<8x32xf32>
    %142 = vector.extract_strided_slice %14 {offsets = [8, 8], sizes = [8, 8], strides = [1, 1]} : vector<16x32xbf16> to vector<8x8xbf16>
    %143 = vector.extract_strided_slice %16 {offsets = [8, 8], sizes = [8, 8], strides = [1, 1]} : vector<16x32xbf16> to vector<8x8xbf16>
    %144 = vector.extract_strided_slice %18 {offsets = [8, 8], sizes = [8, 8], strides = [1, 1]} : vector<16x32xbf16> to vector<8x8xbf16>
    %cst_49 = arith.constant dense<0.000000e+00> : vector<8x8xf32>
    %145 = tpu.matmul %142, %143, %cst_49 {dimension_numbers = #tpu.dot_dimension_numbers<[1], [1], [0], [0], [0, 0, 1, 0], [], []>} : vector<8x8xbf16>, vector<8x8xbf16>, vector<8x8xf32> -> vector<8x8xf32>
    %cst_50 = arith.constant 0.353553385 : f32
    %146 = vector.broadcast %cst_50 : f32 to vector<8x8xf32>
    %147 = arith.mulf %145, %146 : vector<8x8xf32>
    %cst_51 = arith.constant -1.000000e+06 : f32
    %148 = vector.broadcast %cst_51 : f32 to vector<8x8xf32>
    %149 = arith.select %7, %147, %148 : vector<8x8xi1>, vector<8x8xf32>
    %cst_52 = arith.constant dense<0xFF800000> : vector<8xf32>
    %150 = vector.multi_reduction <maximumf>, %149, %cst_52 [1] : vector<8x8xf32> to vector<8xf32>
    %151 = vector.shape_cast %150 : vector<8xf32> to vector<8x1xf32>
    %152 = vector.broadcast %151 : vector<8x1xf32> to vector<8x8xf32>
    %153 = arith.subf %149, %152 : vector<8x8xf32>
    %154 = math.exp %153 : vector<8x8xf32>
    %cst_53 = arith.constant dense<0.000000e+00> : vector<8xf32>
    %155 = vector.multi_reduction <add>, %154, %cst_53 [1] : vector<8x8xf32> to vector<8xf32>
    %156 = vector.shape_cast %155 : vector<8xf32> to vector<8x1xf32>
    %157 = tpu.reciprocal %156 : vector<8x1xf32> -> vector<8x1xf32>
    %158 = vector.broadcast %157 : vector<8x1xf32> to vector<8x8xf32>
    %159 = arith.mulf %154, %158 : vector<8x8xf32>
    %160 = arith.truncf %159 : vector<8x8xf32> to vector<8x8xbf16>
    %cst_54 = arith.constant dense<0.000000e+00> : vector<8x8xf32>
    %161 = tpu.matmul %160, %144, %cst_54 {dimension_numbers = #tpu.dot_dimension_numbers<[1], [0], [0], [1], [0, 0, 1, 1], [], []>} : vector<8x8xbf16>, vector<8x8xbf16>, vector<8x8xf32> -> vector<8x8xf32>
    %162 = arith.truncf %161 : vector<8x8xf32> to vector<8x8xbf16>
    %163 = vector.extract_strided_slice %19 {offsets = [8, 0], sizes = [8, 32], strides = [1, 1]} : vector<32x32xbf16> to vector<8x32xbf16>
    %cst_55 = arith.constant dense<0.000000e+00> : vector<8x32xf32>
    %164 = tpu.matmul %162, %163, %cst_55 {dimension_numbers = #tpu.dot_dimension_numbers<[1], [0], [0], [1], [0, 0, 1, 1], [], []>} : vector<8x8xbf16>, vector<8x32xbf16>, vector<8x32xf32> -> vector<8x32xf32>
    %165 = arith.addf %141, %164 : vector<8x32xf32>
    %166 = vector.extract_strided_slice %14 {offsets = [8, 16], sizes = [8, 8], strides = [1, 1]} : vector<16x32xbf16> to vector<8x8xbf16>
    %167 = vector.extract_strided_slice %16 {offsets = [8, 16], sizes = [8, 8], strides = [1, 1]} : vector<16x32xbf16> to vector<8x8xbf16>
    %168 = vector.extract_strided_slice %18 {offsets = [8, 16], sizes = [8, 8], strides = [1, 1]} : vector<16x32xbf16> to vector<8x8xbf16>
    %cst_56 = arith.constant dense<0.000000e+00> : vector<8x8xf32>
    %169 = tpu.matmul %166, %167, %cst_56 {dimension_numbers = #tpu.dot_dimension_numbers<[1], [1], [0], [0], [0, 0, 1, 0], [], []>} : vector<8x8xbf16>, vector<8x8xbf16>, vector<8x8xf32> -> vector<8x8xf32>
    %cst_57 = arith.constant 0.353553385 : f32
    %170 = vector.broadcast %cst_57 : f32 to vector<8x8xf32>
    %171 = arith.mulf %169, %170 : vector<8x8xf32>
    %cst_58 = arith.constant -1.000000e+06 : f32
    %172 = vector.broadcast %cst_58 : f32 to vector<8x8xf32>
    %173 = arith.select %7, %171, %172 : vector<8x8xi1>, vector<8x8xf32>
    %cst_59 = arith.constant dense<0xFF800000> : vector<8xf32>
    %174 = vector.multi_reduction <maximumf>, %173, %cst_59 [1] : vector<8x8xf32> to vector<8xf32>
    %175 = vector.shape_cast %174 : vector<8xf32> to vector<8x1xf32>
    %176 = vector.broadcast %175 : vector<8x1xf32> to vector<8x8xf32>
    %177 = arith.subf %173, %176 : vector<8x8xf32>
    %178 = math.exp %177 : vector<8x8xf32>
    %cst_60 = arith.constant dense<0.000000e+00> : vector<8xf32>
    %179 = vector.multi_reduction <add>, %178, %cst_60 [1] : vector<8x8xf32> to vector<8xf32>
    %180 = vector.shape_cast %179 : vector<8xf32> to vector<8x1xf32>
    %181 = tpu.reciprocal %180 : vector<8x1xf32> -> vector<8x1xf32>
    %182 = vector.broadcast %181 : vector<8x1xf32> to vector<8x8xf32>
    %183 = arith.mulf %178, %182 : vector<8x8xf32>
    %184 = arith.truncf %183 : vector<8x8xf32> to vector<8x8xbf16>
    %cst_61 = arith.constant dense<0.000000e+00> : vector<8x8xf32>
    %185 = tpu.matmul %184, %168, %cst_61 {dimension_numbers = #tpu.dot_dimension_numbers<[1], [0], [0], [1], [0, 0, 1, 1], [], []>} : vector<8x8xbf16>, vector<8x8xbf16>, vector<8x8xf32> -> vector<8x8xf32>
    %186 = arith.truncf %185 : vector<8x8xf32> to vector<8x8xbf16>
    %187 = vector.extract_strided_slice %19 {offsets = [16, 0], sizes = [8, 32], strides = [1, 1]} : vector<32x32xbf16> to vector<8x32xbf16>
    %cst_62 = arith.constant dense<0.000000e+00> : vector<8x32xf32>
    %188 = tpu.matmul %186, %187, %cst_62 {dimension_numbers = #tpu.dot_dimension_numbers<[1], [0], [0], [1], [0, 0, 1, 1], [], []>} : vector<8x8xbf16>, vector<8x32xbf16>, vector<8x32xf32> -> vector<8x32xf32>
    %189 = arith.addf %165, %188 : vector<8x32xf32>
    %190 = vector.extract_strided_slice %14 {offsets = [8, 24], sizes = [8, 8], strides = [1, 1]} : vector<16x32xbf16> to vector<8x8xbf16>
    %191 = vector.extract_strided_slice %16 {offsets = [8, 24], sizes = [8, 8], strides = [1, 1]} : vector<16x32xbf16> to vector<8x8xbf16>
    %192 = vector.extract_strided_slice %18 {offsets = [8, 24], sizes = [8, 8], strides = [1, 1]} : vector<16x32xbf16> to vector<8x8xbf16>
    %cst_63 = arith.constant dense<0.000000e+00> : vector<8x8xf32>
    %193 = tpu.matmul %190, %191, %cst_63 {dimension_numbers = #tpu.dot_dimension_numbers<[1], [1], [0], [0], [0, 0, 1, 0], [], []>} : vector<8x8xbf16>, vector<8x8xbf16>, vector<8x8xf32> -> vector<8x8xf32>
    %cst_64 = arith.constant 0.353553385 : f32
    %194 = vector.broadcast %cst_64 : f32 to vector<8x8xf32>
    %195 = arith.mulf %193, %194 : vector<8x8xf32>
    %cst_65 = arith.constant -1.000000e+06 : f32
    %196 = vector.broadcast %cst_65 : f32 to vector<8x8xf32>
    %197 = arith.select %7, %195, %196 : vector<8x8xi1>, vector<8x8xf32>
    %cst_66 = arith.constant dense<0xFF800000> : vector<8xf32>
    %198 = vector.multi_reduction <maximumf>, %197, %cst_66 [1] : vector<8x8xf32> to vector<8xf32>
    %199 = vector.shape_cast %198 : vector<8xf32> to vector<8x1xf32>
    %200 = vector.broadcast %199 : vector<8x1xf32> to vector<8x8xf32>
    %201 = arith.subf %197, %200 : vector<8x8xf32>
    %202 = math.exp %201 : vector<8x8xf32>
    %cst_67 = arith.constant dense<0.000000e+00> : vector<8xf32>
    %203 = vector.multi_reduction <add>, %202, %cst_67 [1] : vector<8x8xf32> to vector<8xf32>
    %204 = vector.shape_cast %203 : vector<8xf32> to vector<8x1xf32>
    %205 = tpu.reciprocal %204 : vector<8x1xf32> -> vector<8x1xf32>
    %206 = vector.broadcast %205 : vector<8x1xf32> to vector<8x8xf32>
    %207 = arith.mulf %202, %206 : vector<8x8xf32>
    %208 = arith.truncf %207 : vector<8x8xf32> to vector<8x8xbf16>
    %cst_68 = arith.constant dense<0.000000e+00> : vector<8x8xf32>
    %209 = tpu.matmul %208, %192, %cst_68 {dimension_numbers = #tpu.dot_dimension_numbers<[1], [0], [0], [1], [0, 0, 1, 1], [], []>} : vector<8x8xbf16>, vector<8x8xbf16>, vector<8x8xf32> -> vector<8x8xf32>
    %210 = arith.truncf %209 : vector<8x8xf32> to vector<8x8xbf16>
    %211 = vector.extract_strided_slice %19 {offsets = [24, 0], sizes = [8, 32], strides = [1, 1]} : vector<32x32xbf16> to vector<8x32xbf16>
    %cst_69 = arith.constant dense<0.000000e+00> : vector<8x32xf32>
    %212 = tpu.matmul %210, %211, %cst_69 {dimension_numbers = #tpu.dot_dimension_numbers<[1], [0], [0], [1], [0, 0, 1, 1], [], []>} : vector<8x8xbf16>, vector<8x32xbf16>, vector<8x32xf32> -> vector<8x32xf32>
    %213 = arith.addf %189, %212 : vector<8x32xf32>
    %214 = tpu.concatenate %116, %213 in 0 : vector<8x32xf32>, vector<8x32xf32> -> vector<16x32xf32>
    %215 = arith.addf %0, %214 : vector<16x32xf32>
    %cst_70 = arith.constant dense<0.000000e+00> : vector<16xf32>
    %216 = vector.multi_reduction <add>, %215, %cst_70 [1] : vector<16x32xf32> to vector<16xf32>
    %217 = vector.shape_cast %216 : vector<16xf32> to vector<16x1xf32>
    %cst_71 = arith.constant 3.200000e+01 : f32
    %218 = vector.broadcast %cst_71 : f32 to vector<16x1xf32>
    %219 = arith.divf %217, %218 : vector<16x1xf32>
    %220 = vector.broadcast %219 : vector<16x1xf32> to vector<16x32xf32>
    %221 = arith.subf %215, %220 : vector<16x32xf32>
    %222 = arith.mulf %221, %221 : vector<16x32xf32>
    %cst_72 = arith.constant dense<0.000000e+00> : vector<16xf32>
    %223 = vector.multi_reduction <add>, %222, %cst_72 [1] : vector<16x32xf32> to vector<16xf32>
    %224 = vector.shape_cast %223 : vector<16xf32> to vector<16x1xf32>
    %cst_73 = arith.constant 3.200000e+01 : f32
    %225 = vector.broadcast %cst_73 : f32 to vector<16x1xf32>
    %226 = arith.divf %224, %225 : vector<16x1xf32>
    %cst_74 = arith.constant 9.99999974E-6 : f32
    %227 = vector.broadcast %cst_74 : f32 to vector<16x1xf32>
    %228 = arith.addf %226, %227 : vector<16x1xf32>
    %229 = math.rsqrt %228 : vector<16x1xf32>
    %230 = vector.broadcast %229 : vector<16x1xf32> to vector<16x32xf32>
    %231 = arith.mulf %221, %230 : vector<16x32xf32>
    %c0_75 = arith.constant 0 : index
    %c0_76 = arith.constant 0 : index
    %232 = vector.load %arg15[%c0_75, %c0_76] : memref<1x32xf32, #tpu.memory_space<vmem>>, vector<1x32xf32>
    %233 = vector.broadcast %232 : vector<1x32xf32> to vector<16x32xf32>
    %234 = arith.mulf %231, %233 : vector<16x32xf32>
    %c0_77 = arith.constant 0 : index
    %c0_78 = arith.constant 0 : index
    %235 = vector.load %arg16[%c0_77, %c0_78] : memref<1x32xf32, #tpu.memory_space<vmem>>, vector<1x32xf32>
    %236 = vector.broadcast %235 : vector<1x32xf32> to vector<16x32xf32>
    %237 = arith.addf %234, %236 : vector<16x32xf32>
    %238 = tpu.iota {dimensions = array<i32: 1>} : vector<8x8xi32>
    %c2_i32 = arith.constant 2 : i32
    %239 = arith.muli %arg0, %c2_i32 : i32
    %240 = arith.truncf %237 : vector<16x32xf32> to vector<16x32xbf16>
    %c0_79 = arith.constant 0 : index
    %c0_80 = arith.constant 0 : index
    %241 = vector.load %arg8[%c0_79, %c0_80] : memref<32x32xbf16, #tpu.memory_space<vmem>>, vector<32x32xbf16>
    %cst_81 = arith.constant dense<0.000000e+00> : vector<16x32xf32>
    %242 = tpu.matmul %240, %241, %cst_81 {dimension_numbers = #tpu.dot_dimension_numbers<[1], [0], [0], [1], [0, 0, 1, 1], [], []>} : vector<16x32xbf16>, vector<32x32xbf16>, vector<16x32xf32> -> vector<16x32xf32>
    %243 = arith.truncf %2 : vector<16x32xf32> to vector<16x32xbf16>
    %c0_82 = arith.constant 0 : index
    %c0_83 = arith.constant 0 : index
    %244 = vector.load %arg9[%c0_82, %c0_83] : memref<32x64xbf16, #tpu.memory_space<vmem>>, vector<32x64xbf16>
    %cst_84 = arith.constant dense<0.000000e+00> : vector<16x64xf32>
    %245 = tpu.matmul %243, %244, %cst_84 {dimension_numbers = #tpu.dot_dimension_numbers<[1], [0], [0], [1], [0, 0, 1, 1], [], []>} : vector<16x32xbf16>, vector<32x64xbf16>, vector<16x64xf32> -> vector<16x64xf32>
    %246 = arith.truncf %242 : vector<16x32xf32> to vector<16x32xbf16>
    %247 = vector.extract_strided_slice %245 {offsets = [0, 0], sizes = [16, 32], strides = [1, 1]} : vector<16x64xf32> to vector<16x32xf32>
    %248 = arith.truncf %247 : vector<16x32xf32> to vector<16x32xbf16>
    %249 = vector.extract_strided_slice %245 {offsets = [0, 32], sizes = [16, 32], strides = [1, 1]} : vector<16x64xf32> to vector<16x32xf32>
    %250 = arith.truncf %249 : vector<16x32xf32> to vector<16x32xbf16>
    %c0_85 = arith.constant 0 : index
    %c0_86 = arith.constant 0 : index
    %251 = vector.load %arg10[%c0_85, %c0_86] : memref<32x32xbf16, #tpu.memory_space<vmem>>, vector<32x32xbf16>
    %c0_i32_87 = arith.constant 0 : i32
    %252 = arith.addi %239, %c0_i32_87 : i32
    %253 = arith.index_cast %252 : i32 to index
    %254 = memref.load %arg1[%253] : memref<2xi32, #tpu.memory_space<smem>>
    %255 = vector.broadcast %254 : i32 to vector<8x8xi32>
    %256 = arith.cmpi slt, %238, %255 : vector<8x8xi32>
    %cst_88 = arith.constant 0.000000e+00 : f32
    %257 = vector.broadcast %cst_88 : f32 to vector<8x32xf32>
    %258 = vector.extract_strided_slice %246 {offsets = [0, 0], sizes = [8, 8], strides = [1, 1]} : vector<16x32xbf16> to vector<8x8xbf16>
    %259 = vector.extract_strided_slice %248 {offsets = [0, 0], sizes = [8, 8], strides = [1, 1]} : vector<16x32xbf16> to vector<8x8xbf16>
    %260 = vector.extract_strided_slice %250 {offsets = [0, 0], sizes = [8, 8], strides = [1, 1]} : vector<16x32xbf16> to vector<8x8xbf16>
    %cst_89 = arith.constant dense<0.000000e+00> : vector<8x8xf32>
    %261 = tpu.matmul %258, %259, %cst_89 {dimension_numbers = #tpu.dot_dimension_numbers<[1], [1], [0], [0], [0, 0, 1, 0], [], []>} : vector<8x8xbf16>, vector<8x8xbf16>, vector<8x8xf32> -> vector<8x8xf32>
    %cst_90 = arith.constant 0.353553385 : f32
    %262 = vector.broadcast %cst_90 : f32 to vector<8x8xf32>
    %263 = arith.mulf %261, %262 : vector<8x8xf32>
    %cst_91 = arith.constant -1.000000e+06 : f32
    %264 = vector.broadcast %cst_91 : f32 to vector<8x8xf32>
    %265 = arith.select %256, %263, %264 : vector<8x8xi1>, vector<8x8xf32>
    %cst_92 = arith.constant dense<0xFF800000> : vector<8xf32>
    %266 = vector.multi_reduction <maximumf>, %265, %cst_92 [1] : vector<8x8xf32> to vector<8xf32>
    %267 = vector.shape_cast %266 : vector<8xf32> to vector<8x1xf32>
    %268 = vector.broadcast %267 : vector<8x1xf32> to vector<8x8xf32>
    %269 = arith.subf %265, %268 : vector<8x8xf32>
    %270 = math.exp %269 : vector<8x8xf32>
    %cst_93 = arith.constant dense<0.000000e+00> : vector<8xf32>
    %271 = vector.multi_reduction <add>, %270, %cst_93 [1] : vector<8x8xf32> to vector<8xf32>
    %272 = vector.shape_cast %271 : vector<8xf32> to vector<8x1xf32>
    %273 = tpu.reciprocal %272 : vector<8x1xf32> -> vector<8x1xf32>
    %274 = vector.broadcast %273 : vector<8x1xf32> to vector<8x8xf32>
    %275 = arith.mulf %270, %274 : vector<8x8xf32>
    %276 = arith.truncf %275 : vector<8x8xf32> to vector<8x8xbf16>
    %cst_94 = arith.constant dense<0.000000e+00> : vector<8x8xf32>
    %277 = tpu.matmul %276, %260, %cst_94 {dimension_numbers = #tpu.dot_dimension_numbers<[1], [0], [0], [1], [0, 0, 1, 1], [], []>} : vector<8x8xbf16>, vector<8x8xbf16>, vector<8x8xf32> -> vector<8x8xf32>
    %278 = arith.truncf %277 : vector<8x8xf32> to vector<8x8xbf16>
    %279 = vector.extract_strided_slice %251 {offsets = [0, 0], sizes = [8, 32], strides = [1, 1]} : vector<32x32xbf16> to vector<8x32xbf16>
    %cst_95 = arith.constant dense<0.000000e+00> : vector<8x32xf32>
    %280 = tpu.matmul %278, %279, %cst_95 {dimension_numbers = #tpu.dot_dimension_numbers<[1], [0], [0], [1], [0, 0, 1, 1], [], []>} : vector<8x8xbf16>, vector<8x32xbf16>, vector<8x32xf32> -> vector<8x32xf32>
    %281 = arith.addf %257, %280 : vector<8x32xf32>
    %282 = vector.extract_strided_slice %246 {offsets = [0, 8], sizes = [8, 8], strides = [1, 1]} : vector<16x32xbf16> to vector<8x8xbf16>
    %283 = vector.extract_strided_slice %248 {offsets = [0, 8], sizes = [8, 8], strides = [1, 1]} : vector<16x32xbf16> to vector<8x8xbf16>
    %284 = vector.extract_strided_slice %250 {offsets = [0, 8], sizes = [8, 8], strides = [1, 1]} : vector<16x32xbf16> to vector<8x8xbf16>
    %cst_96 = arith.constant dense<0.000000e+00> : vector<8x8xf32>
    %285 = tpu.matmul %282, %283, %cst_96 {dimension_numbers = #tpu.dot_dimension_numbers<[1], [1], [0], [0], [0, 0, 1, 0], [], []>} : vector<8x8xbf16>, vector<8x8xbf16>, vector<8x8xf32> -> vector<8x8xf32>
    %cst_97 = arith.constant 0.353553385 : f32
    %286 = vector.broadcast %cst_97 : f32 to vector<8x8xf32>
    %287 = arith.mulf %285, %286 : vector<8x8xf32>
    %cst_98 = arith.constant -1.000000e+06 : f32
    %288 = vector.broadcast %cst_98 : f32 to vector<8x8xf32>
    %289 = arith.select %256, %287, %288 : vector<8x8xi1>, vector<8x8xf32>
    %cst_99 = arith.constant dense<0xFF800000> : vector<8xf32>
    %290 = vector.multi_reduction <maximumf>, %289, %cst_99 [1] : vector<8x8xf32> to vector<8xf32>
    %291 = vector.shape_cast %290 : vector<8xf32> to vector<8x1xf32>
    %292 = vector.broadcast %291 : vector<8x1xf32> to vector<8x8xf32>
    %293 = arith.subf %289, %292 : vector<8x8xf32>
    %294 = math.exp %293 : vector<8x8xf32>
    %cst_100 = arith.constant dense<0.000000e+00> : vector<8xf32>
    %295 = vector.multi_reduction <add>, %294, %cst_100 [1] : vector<8x8xf32> to vector<8xf32>
    %296 = vector.shape_cast %295 : vector<8xf32> to vector<8x1xf32>
    %297 = tpu.reciprocal %296 : vector<8x1xf32> -> vector<8x1xf32>
    %298 = vector.broadcast %297 : vector<8x1xf32> to vector<8x8xf32>
    %299 = arith.mulf %294, %298 : vector<8x8xf32>
    %300 = arith.truncf %299 : vector<8x8xf32> to vector<8x8xbf16>
    %cst_101 = arith.constant dense<0.000000e+00> : vector<8x8xf32>
    %301 = tpu.matmul %300, %284, %cst_101 {dimension_numbers = #tpu.dot_dimension_numbers<[1], [0], [0], [1], [0, 0, 1, 1], [], []>} : vector<8x8xbf16>, vector<8x8xbf16>, vector<8x8xf32> -> vector<8x8xf32>
    %302 = arith.truncf %301 : vector<8x8xf32> to vector<8x8xbf16>
    %303 = vector.extract_strided_slice %251 {offsets = [8, 0], sizes = [8, 32], strides = [1, 1]} : vector<32x32xbf16> to vector<8x32xbf16>
    %cst_102 = arith.constant dense<0.000000e+00> : vector<8x32xf32>
    %304 = tpu.matmul %302, %303, %cst_102 {dimension_numbers = #tpu.dot_dimension_numbers<[1], [0], [0], [1], [0, 0, 1, 1], [], []>} : vector<8x8xbf16>, vector<8x32xbf16>, vector<8x32xf32> -> vector<8x32xf32>
    %305 = arith.addf %281, %304 : vector<8x32xf32>
    %306 = vector.extract_strided_slice %246 {offsets = [0, 16], sizes = [8, 8], strides = [1, 1]} : vector<16x32xbf16> to vector<8x8xbf16>
    %307 = vector.extract_strided_slice %248 {offsets = [0, 16], sizes = [8, 8], strides = [1, 1]} : vector<16x32xbf16> to vector<8x8xbf16>
    %308 = vector.extract_strided_slice %250 {offsets = [0, 16], sizes = [8, 8], strides = [1, 1]} : vector<16x32xbf16> to vector<8x8xbf16>
    %cst_103 = arith.constant dense<0.000000e+00> : vector<8x8xf32>
    %309 = tpu.matmul %306, %307, %cst_103 {dimension_numbers = #tpu.dot_dimension_numbers<[1], [1], [0], [0], [0, 0, 1, 0], [], []>} : vector<8x8xbf16>, vector<8x8xbf16>, vector<8x8xf32> -> vector<8x8xf32>
    %cst_104 = arith.constant 0.353553385 : f32
    %310 = vector.broadcast %cst_104 : f32 to vector<8x8xf32>
    %311 = arith.mulf %309, %310 : vector<8x8xf32>
    %cst_105 = arith.constant -1.000000e+06 : f32
    %312 = vector.broadcast %cst_105 : f32 to vector<8x8xf32>
    %313 = arith.select %256, %311, %312 : vector<8x8xi1>, vector<8x8xf32>
    %cst_106 = arith.constant dense<0xFF800000> : vector<8xf32>
    %314 = vector.multi_reduction <maximumf>, %313, %cst_106 [1] : vector<8x8xf32> to vector<8xf32>
    %315 = vector.shape_cast %314 : vector<8xf32> to vector<8x1xf32>
    %316 = vector.broadcast %315 : vector<8x1xf32> to vector<8x8xf32>
    %317 = arith.subf %313, %316 : vector<8x8xf32>
    %318 = math.exp %317 : vector<8x8xf32>
    %cst_107 = arith.constant dense<0.000000e+00> : vector<8xf32>
    %319 = vector.multi_reduction <add>, %318, %cst_107 [1] : vector<8x8xf32> to vector<8xf32>
    %320 = vector.shape_cast %319 : vector<8xf32> to vector<8x1xf32>
    %321 = tpu.reciprocal %320 : vector<8x1xf32> -> vector<8x1xf32>
    %322 = vector.broadcast %321 : vector<8x1xf32> to vector<8x8xf32>
    %323 = arith.mulf %318, %322 : vector<8x8xf32>
    %324 = arith.truncf %323 : vector<8x8xf32> to vector<8x8xbf16>
    %cst_108 = arith.constant dense<0.000000e+00> : vector<8x8xf32>
    %325 = tpu.matmul %324, %308, %cst_108 {dimension_numbers = #tpu.dot_dimension_numbers<[1], [0], [0], [1], [0, 0, 1, 1], [], []>} : vector<8x8xbf16>, vector<8x8xbf16>, vector<8x8xf32> -> vector<8x8xf32>
    %326 = arith.truncf %325 : vector<8x8xf32> to vector<8x8xbf16>
    %327 = vector.extract_strided_slice %251 {offsets = [16, 0], sizes = [8, 32], strides = [1, 1]} : vector<32x32xbf16> to vector<8x32xbf16>
    %cst_109 = arith.constant dense<0.000000e+00> : vector<8x32xf32>
    %328 = tpu.matmul %326, %327, %cst_109 {dimension_numbers = #tpu.dot_dimension_numbers<[1], [0], [0], [1], [0, 0, 1, 1], [], []>} : vector<8x8xbf16>, vector<8x32xbf16>, vector<8x32xf32> -> vector<8x32xf32>
    %329 = arith.addf %305, %328 : vector<8x32xf32>
    %330 = vector.extract_strided_slice %246 {offsets = [0, 24], sizes = [8, 8], strides = [1, 1]} : vector<16x32xbf16> to vector<8x8xbf16>
    %331 = vector.extract_strided_slice %248 {offsets = [0, 24], sizes = [8, 8], strides = [1, 1]} : vector<16x32xbf16> to vector<8x8xbf16>
    %332 = vector.extract_strided_slice %250 {offsets = [0, 24], sizes = [8, 8], strides = [1, 1]} : vector<16x32xbf16> to vector<8x8xbf16>
    %cst_110 = arith.constant dense<0.000000e+00> : vector<8x8xf32>
    %333 = tpu.matmul %330, %331, %cst_110 {dimension_numbers = #tpu.dot_dimension_numbers<[1], [1], [0], [0], [0, 0, 1, 0], [], []>} : vector<8x8xbf16>, vector<8x8xbf16>, vector<8x8xf32> -> vector<8x8xf32>
    %cst_111 = arith.constant 0.353553385 : f32
    %334 = vector.broadcast %cst_111 : f32 to vector<8x8xf32>
    %335 = arith.mulf %333, %334 : vector<8x8xf32>
    %cst_112 = arith.constant -1.000000e+06 : f32
    %336 = vector.broadcast %cst_112 : f32 to vector<8x8xf32>
    %337 = arith.select %256, %335, %336 : vector<8x8xi1>, vector<8x8xf32>
    %cst_113 = arith.constant dense<0xFF800000> : vector<8xf32>
    %338 = vector.multi_reduction <maximumf>, %337, %cst_113 [1] : vector<8x8xf32> to vector<8xf32>
    %339 = vector.shape_cast %338 : vector<8xf32> to vector<8x1xf32>
    %340 = vector.broadcast %339 : vector<8x1xf32> to vector<8x8xf32>
    %341 = arith.subf %337, %340 : vector<8x8xf32>
    %342 = math.exp %341 : vector<8x8xf32>
    %cst_114 = arith.constant dense<0.000000e+00> : vector<8xf32>
    %343 = vector.multi_reduction <add>, %342, %cst_114 [1] : vector<8x8xf32> to vector<8xf32>
    %344 = vector.shape_cast %343 : vector<8xf32> to vector<8x1xf32>
    %345 = tpu.reciprocal %344 : vector<8x1xf32> -> vector<8x1xf32>
    %346 = vector.broadcast %345 : vector<8x1xf32> to vector<8x8xf32>
    %347 = arith.mulf %342, %346 : vector<8x8xf32>
    %348 = arith.truncf %347 : vector<8x8xf32> to vector<8x8xbf16>
    %cst_115 = arith.constant dense<0.000000e+00> : vector<8x8xf32>
    %349 = tpu.matmul %348, %332, %cst_115 {dimension_numbers = #tpu.dot_dimension_numbers<[1], [0], [0], [1], [0, 0, 1, 1], [], []>} : vector<8x8xbf16>, vector<8x8xbf16>, vector<8x8xf32> -> vector<8x8xf32>
    %350 = arith.truncf %349 : vector<8x8xf32> to vector<8x8xbf16>
    %351 = vector.extract_strided_slice %251 {offsets = [24, 0], sizes = [8, 32], strides = [1, 1]} : vector<32x32xbf16> to vector<8x32xbf16>
    %cst_116 = arith.constant dense<0.000000e+00> : vector<8x32xf32>
    %352 = tpu.matmul %350, %351, %cst_116 {dimension_numbers = #tpu.dot_dimension_numbers<[1], [0], [0], [1], [0, 0, 1, 1], [], []>} : vector<8x8xbf16>, vector<8x32xbf16>, vector<8x32xf32> -> vector<8x32xf32>
    %353 = arith.addf %329, %352 : vector<8x32xf32>
    %c1_i32 = arith.constant 1 : i32
    %354 = arith.addi %239, %c1_i32 : i32
    %355 = arith.index_cast %354 : i32 to index
    %356 = memref.load %arg1[%355] : memref<2xi32, #tpu.memory_space<smem>>
    %357 = vector.broadcast %356 : i32 to vector<8x8xi32>
    %358 = arith.cmpi slt, %238, %357 : vector<8x8xi32>
    %cst_117 = arith.constant 0.000000e+00 : f32
    %359 = vector.broadcast %cst_117 : f32 to vector<8x32xf32>
    %360 = vector.extract_strided_slice %246 {offsets = [8, 0], sizes = [8, 8], strides = [1, 1]} : vector<16x32xbf16> to vector<8x8xbf16>
    %361 = vector.extract_strided_slice %248 {offsets = [8, 0], sizes = [8, 8], strides = [1, 1]} : vector<16x32xbf16> to vector<8x8xbf16>
    %362 = vector.extract_strided_slice %250 {offsets = [8, 0], sizes = [8, 8], strides = [1, 1]} : vector<16x32xbf16> to vector<8x8xbf16>
    %cst_118 = arith.constant dense<0.000000e+00> : vector<8x8xf32>
    %363 = tpu.matmul %360, %361, %cst_118 {dimension_numbers = #tpu.dot_dimension_numbers<[1], [1], [0], [0], [0, 0, 1, 0], [], []>} : vector<8x8xbf16>, vector<8x8xbf16>, vector<8x8xf32> -> vector<8x8xf32>
    %cst_119 = arith.constant 0.353553385 : f32
    %364 = vector.broadcast %cst_119 : f32 to vector<8x8xf32>
    %365 = arith.mulf %363, %364 : vector<8x8xf32>
    %cst_120 = arith.constant -1.000000e+06 : f32
    %366 = vector.broadcast %cst_120 : f32 to vector<8x8xf32>
    %367 = arith.select %358, %365, %366 : vector<8x8xi1>, vector<8x8xf32>
    %cst_121 = arith.constant dense<0xFF800000> : vector<8xf32>
    %368 = vector.multi_reduction <maximumf>, %367, %cst_121 [1] : vector<8x8xf32> to vector<8xf32>
    %369 = vector.shape_cast %368 : vector<8xf32> to vector<8x1xf32>
    %370 = vector.broadcast %369 : vector<8x1xf32> to vector<8x8xf32>
    %371 = arith.subf %367, %370 : vector<8x8xf32>
    %372 = math.exp %371 : vector<8x8xf32>
    %cst_122 = arith.constant dense<0.000000e+00> : vector<8xf32>
    %373 = vector.multi_reduction <add>, %372, %cst_122 [1] : vector<8x8xf32> to vector<8xf32>
    %374 = vector.shape_cast %373 : vector<8xf32> to vector<8x1xf32>
    %375 = tpu.reciprocal %374 : vector<8x1xf32> -> vector<8x1xf32>
    %376 = vector.broadcast %375 : vector<8x1xf32> to vector<8x8xf32>
    %377 = arith.mulf %372, %376 : vector<8x8xf32>
    %378 = arith.truncf %377 : vector<8x8xf32> to vector<8x8xbf16>
    %cst_123 = arith.constant dense<0.000000e+00> : vector<8x8xf32>
    %379 = tpu.matmul %378, %362, %cst_123 {dimension_numbers = #tpu.dot_dimension_numbers<[1], [0], [0], [1], [0, 0, 1, 1], [], []>} : vector<8x8xbf16>, vector<8x8xbf16>, vector<8x8xf32> -> vector<8x8xf32>
    %380 = arith.truncf %379 : vector<8x8xf32> to vector<8x8xbf16>
    %381 = vector.extract_strided_slice %251 {offsets = [0, 0], sizes = [8, 32], strides = [1, 1]} : vector<32x32xbf16> to vector<8x32xbf16>
    %cst_124 = arith.constant dense<0.000000e+00> : vector<8x32xf32>
    %382 = tpu.matmul %380, %381, %cst_124 {dimension_numbers = #tpu.dot_dimension_numbers<[1], [0], [0], [1], [0, 0, 1, 1], [], []>} : vector<8x8xbf16>, vector<8x32xbf16>, vector<8x32xf32> -> vector<8x32xf32>
    %383 = arith.addf %359, %382 : vector<8x32xf32>
    %384 = vector.extract_strided_slice %246 {offsets = [8, 8], sizes = [8, 8], strides = [1, 1]} : vector<16x32xbf16> to vector<8x8xbf16>
    %385 = vector.extract_strided_slice %248 {offsets = [8, 8], sizes = [8, 8], strides = [1, 1]} : vector<16x32xbf16> to vector<8x8xbf16>
    %386 = vector.extract_strided_slice %250 {offsets = [8, 8], sizes = [8, 8], strides = [1, 1]} : vector<16x32xbf16> to vector<8x8xbf16>
    %cst_125 = arith.constant dense<0.000000e+00> : vector<8x8xf32>
    %387 = tpu.matmul %384, %385, %cst_125 {dimension_numbers = #tpu.dot_dimension_numbers<[1], [1], [0], [0], [0, 0, 1, 0], [], []>} : vector<8x8xbf16>, vector<8x8xbf16>, vector<8x8xf32> -> vector<8x8xf32>
    %cst_126 = arith.constant 0.353553385 : f32
    %388 = vector.broadcast %cst_126 : f32 to vector<8x8xf32>
    %389 = arith.mulf %387, %388 : vector<8x8xf32>
    %cst_127 = arith.constant -1.000000e+06 : f32
    %390 = vector.broadcast %cst_127 : f32 to vector<8x8xf32>
    %391 = arith.select %358, %389, %390 : vector<8x8xi1>, vector<8x8xf32>
    %cst_128 = arith.constant dense<0xFF800000> : vector<8xf32>
    %392 = vector.multi_reduction <maximumf>, %391, %cst_128 [1] : vector<8x8xf32> to vector<8xf32>
    %393 = vector.shape_cast %392 : vector<8xf32> to vector<8x1xf32>
    %394 = vector.broadcast %393 : vector<8x1xf32> to vector<8x8xf32>
    %395 = arith.subf %391, %394 : vector<8x8xf32>
    %396 = math.exp %395 : vector<8x8xf32>
    %cst_129 = arith.constant dense<0.000000e+00> : vector<8xf32>
    %397 = vector.multi_reduction <add>, %396, %cst_129 [1] : vector<8x8xf32> to vector<8xf32>
    %398 = vector.shape_cast %397 : vector<8xf32> to vector<8x1xf32>
    %399 = tpu.reciprocal %398 : vector<8x1xf32> -> vector<8x1xf32>
    %400 = vector.broadcast %399 : vector<8x1xf32> to vector<8x8xf32>
    %401 = arith.mulf %396, %400 : vector<8x8xf32>
    %402 = arith.truncf %401 : vector<8x8xf32> to vector<8x8xbf16>
    %cst_130 = arith.constant dense<0.000000e+00> : vector<8x8xf32>
    %403 = tpu.matmul %402, %386, %cst_130 {dimension_numbers = #tpu.dot_dimension_numbers<[1], [0], [0], [1], [0, 0, 1, 1], [], []>} : vector<8x8xbf16>, vector<8x8xbf16>, vector<8x8xf32> -> vector<8x8xf32>
    %404 = arith.truncf %403 : vector<8x8xf32> to vector<8x8xbf16>
    %405 = vector.extract_strided_slice %251 {offsets = [8, 0], sizes = [8, 32], strides = [1, 1]} : vector<32x32xbf16> to vector<8x32xbf16>
    %cst_131 = arith.constant dense<0.000000e+00> : vector<8x32xf32>
    %406 = tpu.matmul %404, %405, %cst_131 {dimension_numbers = #tpu.dot_dimension_numbers<[1], [0], [0], [1], [0, 0, 1, 1], [], []>} : vector<8x8xbf16>, vector<8x32xbf16>, vector<8x32xf32> -> vector<8x32xf32>
    %407 = arith.addf %383, %406 : vector<8x32xf32>
    %408 = vector.extract_strided_slice %246 {offsets = [8, 16], sizes = [8, 8], strides = [1, 1]} : vector<16x32xbf16> to vector<8x8xbf16>
    %409 = vector.extract_strided_slice %248 {offsets = [8, 16], sizes = [8, 8], strides = [1, 1]} : vector<16x32xbf16> to vector<8x8xbf16>
    %410 = vector.extract_strided_slice %250 {offsets = [8, 16], sizes = [8, 8], strides = [1, 1]} : vector<16x32xbf16> to vector<8x8xbf16>
    %cst_132 = arith.constant dense<0.000000e+00> : vector<8x8xf32>
    %411 = tpu.matmul %408, %409, %cst_132 {dimension_numbers = #tpu.dot_dimension_numbers<[1], [1], [0], [0], [0, 0, 1, 0], [], []>} : vector<8x8xbf16>, vector<8x8xbf16>, vector<8x8xf32> -> vector<8x8xf32>
    %cst_133 = arith.constant 0.353553385 : f32
    %412 = vector.broadcast %cst_133 : f32 to vector<8x8xf32>
    %413 = arith.mulf %411, %412 : vector<8x8xf32>
    %cst_134 = arith.constant -1.000000e+06 : f32
    %414 = vector.broadcast %cst_134 : f32 to vector<8x8xf32>
    %415 = arith.select %358, %413, %414 : vector<8x8xi1>, vector<8x8xf32>
    %cst_135 = arith.constant dense<0xFF800000> : vector<8xf32>
    %416 = vector.multi_reduction <maximumf>, %415, %cst_135 [1] : vector<8x8xf32> to vector<8xf32>
    %417 = vector.shape_cast %416 : vector<8xf32> to vector<8x1xf32>
    %418 = vector.broadcast %417 : vector<8x1xf32> to vector<8x8xf32>
    %419 = arith.subf %415, %418 : vector<8x8xf32>
    %420 = math.exp %419 : vector<8x8xf32>
    %cst_136 = arith.constant dense<0.000000e+00> : vector<8xf32>
    %421 = vector.multi_reduction <add>, %420, %cst_136 [1] : vector<8x8xf32> to vector<8xf32>
    %422 = vector.shape_cast %421 : vector<8xf32> to vector<8x1xf32>
    %423 = tpu.reciprocal %422 : vector<8x1xf32> -> vector<8x1xf32>
    %424 = vector.broadcast %423 : vector<8x1xf32> to vector<8x8xf32>
    %425 = arith.mulf %420, %424 : vector<8x8xf32>
    %426 = arith.truncf %425 : vector<8x8xf32> to vector<8x8xbf16>
    %cst_137 = arith.constant dense<0.000000e+00> : vector<8x8xf32>
    %427 = tpu.matmul %426, %410, %cst_137 {dimension_numbers = #tpu.dot_dimension_numbers<[1], [0], [0], [1], [0, 0, 1, 1], [], []>} : vector<8x8xbf16>, vector<8x8xbf16>, vector<8x8xf32> -> vector<8x8xf32>
    %428 = arith.truncf %427 : vector<8x8xf32> to vector<8x8xbf16>
    %429 = vector.extract_strided_slice %251 {offsets = [16, 0], sizes = [8, 32], strides = [1, 1]} : vector<32x32xbf16> to vector<8x32xbf16>
    %cst_138 = arith.constant dense<0.000000e+00> : vector<8x32xf32>
    %430 = tpu.matmul %428, %429, %cst_138 {dimension_numbers = #tpu.dot_dimension_numbers<[1], [0], [0], [1], [0, 0, 1, 1], [], []>} : vector<8x8xbf16>, vector<8x32xbf16>, vector<8x32xf32> -> vector<8x32xf32>
    %431 = arith.addf %407, %430 : vector<8x32xf32>
    %432 = vector.extract_strided_slice %246 {offsets = [8, 24], sizes = [8, 8], strides = [1, 1]} : vector<16x32xbf16> to vector<8x8xbf16>
    %433 = vector.extract_strided_slice %248 {offsets = [8, 24], sizes = [8, 8], strides = [1, 1]} : vector<16x32xbf16> to vector<8x8xbf16>
    %434 = vector.extract_strided_slice %250 {offsets = [8, 24], sizes = [8, 8], strides = [1, 1]} : vector<16x32xbf16> to vector<8x8xbf16>
    %cst_139 = arith.constant dense<0.000000e+00> : vector<8x8xf32>
    %435 = tpu.matmul %432, %433, %cst_139 {dimension_numbers = #tpu.dot_dimension_numbers<[1], [1], [0], [0], [0, 0, 1, 0], [], []>} : vector<8x8xbf16>, vector<8x8xbf16>, vector<8x8xf32> -> vector<8x8xf32>
    %cst_140 = arith.constant 0.353553385 : f32
    %436 = vector.broadcast %cst_140 : f32 to vector<8x8xf32>
    %437 = arith.mulf %435, %436 : vector<8x8xf32>
    %cst_141 = arith.constant -1.000000e+06 : f32
    %438 = vector.broadcast %cst_141 : f32 to vector<8x8xf32>
    %439 = arith.select %358, %437, %438 : vector<8x8xi1>, vector<8x8xf32>
    %cst_142 = arith.constant dense<0xFF800000> : vector<8xf32>
    %440 = vector.multi_reduction <maximumf>, %439, %cst_142 [1] : vector<8x8xf32> to vector<8xf32>
    %441 = vector.shape_cast %440 : vector<8xf32> to vector<8x1xf32>
    %442 = vector.broadcast %441 : vector<8x1xf32> to vector<8x8xf32>
    %443 = arith.subf %439, %442 : vector<8x8xf32>
    %444 = math.exp %443 : vector<8x8xf32>
    %cst_143 = arith.constant dense<0.000000e+00> : vector<8xf32>
    %445 = vector.multi_reduction <add>, %444, %cst_143 [1] : vector<8x8xf32> to vector<8xf32>
    %446 = vector.shape_cast %445 : vector<8xf32> to vector<8x1xf32>
    %447 = tpu.reciprocal %446 : vector<8x1xf32> -> vector<8x1xf32>
    %448 = vector.broadcast %447 : vector<8x1xf32> to vector<8x8xf32>
    %449 = arith.mulf %444, %448 : vector<8x8xf32>
    %450 = arith.truncf %449 : vector<8x8xf32> to vector<8x8xbf16>
    %cst_144 = arith.constant dense<0.000000e+00> : vector<8x8xf32>
    %451 = tpu.matmul %450, %434, %cst_144 {dimension_numbers = #tpu.dot_dimension_numbers<[1], [0], [0], [1], [0, 0, 1, 1], [], []>} : vector<8x8xbf16>, vector<8x8xbf16>, vector<8x8xf32> -> vector<8x8xf32>
    %452 = arith.truncf %451 : vector<8x8xf32> to vector<8x8xbf16>
    %453 = vector.extract_strided_slice %251 {offsets = [24, 0], sizes = [8, 32], strides = [1, 1]} : vector<32x32xbf16> to vector<8x32xbf16>
    %cst_145 = arith.constant dense<0.000000e+00> : vector<8x32xf32>
    %454 = tpu.matmul %452, %453, %cst_145 {dimension_numbers = #tpu.dot_dimension_numbers<[1], [0], [0], [1], [0, 0, 1, 1], [], []>} : vector<8x8xbf16>, vector<8x32xbf16>, vector<8x32xf32> -> vector<8x32xf32>
    %455 = arith.addf %431, %454 : vector<8x32xf32>
    %456 = tpu.concatenate %353, %455 in 0 : vector<8x32xf32>, vector<8x32xf32> -> vector<16x32xf32>
    %457 = arith.addf %237, %456 : vector<16x32xf32>
    %cst_146 = arith.constant dense<0.000000e+00> : vector<16xf32>
    %458 = vector.multi_reduction <add>, %457, %cst_146 [1] : vector<16x32xf32> to vector<16xf32>
    %459 = vector.shape_cast %458 : vector<16xf32> to vector<16x1xf32>
    %cst_147 = arith.constant 3.200000e+01 : f32
    %460 = vector.broadcast %cst_147 : f32 to vector<16x1xf32>
    %461 = arith.divf %459, %460 : vector<16x1xf32>
    %462 = vector.broadcast %461 : vector<16x1xf32> to vector<16x32xf32>
    %463 = arith.subf %457, %462 : vector<16x32xf32>
    %464 = arith.mulf %463, %463 : vector<16x32xf32>
    %cst_148 = arith.constant dense<0.000000e+00> : vector<16xf32>
    %465 = vector.multi_reduction <add>, %464, %cst_148 [1] : vector<16x32xf32> to vector<16xf32>
    %466 = vector.shape_cast %465 : vector<16xf32> to vector<16x1xf32>
    %cst_149 = arith.constant 3.200000e+01 : f32
    %467 = vector.broadcast %cst_149 : f32 to vector<16x1xf32>
    %468 = arith.divf %466, %467 : vector<16x1xf32>
    %cst_150 = arith.constant 9.99999974E-6 : f32
    %469 = vector.broadcast %cst_150 : f32 to vector<16x1xf32>
    %470 = arith.addf %468, %469 : vector<16x1xf32>
    %471 = math.rsqrt %470 : vector<16x1xf32>
    %472 = vector.broadcast %471 : vector<16x1xf32> to vector<16x32xf32>
    %473 = arith.mulf %463, %472 : vector<16x32xf32>
    %c0_151 = arith.constant 0 : index
    %c0_152 = arith.constant 0 : index
    %474 = vector.load %arg17[%c0_151, %c0_152] : memref<1x32xf32, #tpu.memory_space<vmem>>, vector<1x32xf32>
    %475 = vector.broadcast %474 : vector<1x32xf32> to vector<16x32xf32>
    %476 = arith.mulf %473, %475 : vector<16x32xf32>
    %c0_153 = arith.constant 0 : index
    %c0_154 = arith.constant 0 : index
    %477 = vector.load %arg18[%c0_153, %c0_154] : memref<1x32xf32, #tpu.memory_space<vmem>>, vector<1x32xf32>
    %478 = vector.broadcast %477 : vector<1x32xf32> to vector<16x32xf32>
    %479 = arith.addf %476, %478 : vector<16x32xf32>
    %480 = arith.truncf %479 : vector<16x32xf32> to vector<16x32xbf16>
    %c0_155 = arith.constant 0 : index
    %c0_156 = arith.constant 0 : index
    %481 = vector.load %arg11[%c0_155, %c0_156] : memref<32x64xbf16, #tpu.memory_space<vmem>>, vector<32x64xbf16>
    %cst_157 = arith.constant dense<0.000000e+00> : vector<16x64xf32>
    %482 = tpu.matmul %480, %481, %cst_157 {dimension_numbers = #tpu.dot_dimension_numbers<[1], [0], [0], [1], [0, 0, 1, 1], [], []>} : vector<16x32xbf16>, vector<32x64xbf16>, vector<16x64xf32> -> vector<16x64xf32>
    %c0_158 = arith.constant 0 : index
    %c0_159 = arith.constant 0 : index
    %483 = vector.load %arg12[%c0_158, %c0_159] : memref<1x64xf32, #tpu.memory_space<vmem>>, vector<1x64xf32>
    %484 = vector.broadcast %483 : vector<1x64xf32> to vector<16x64xf32>
    %485 = arith.addf %482, %484 : vector<16x64xf32>
    %cst_160 = arith.constant 0.000000e+00 : f32
    %486 = vector.broadcast %cst_160 : f32 to vector<16x64xf32>
    %487 = arith.maximumf %485, %486 : vector<16x64xf32>
    %488 = arith.truncf %487 : vector<16x64xf32> to vector<16x64xbf16>
    %c0_161 = arith.constant 0 : index
    %c0_162 = arith.constant 0 : index
    %489 = vector.load %arg13[%c0_161, %c0_162] : memref<64x32xbf16, #tpu.memory_space<vmem>>, vector<64x32xbf16>
    %cst_163 = arith.constant dense<0.000000e+00> : vector<16x32xf32>
    %490 = tpu.matmul %488, %489, %cst_163 {dimension_numbers = #tpu.dot_dimension_numbers<[1], [0], [0], [1], [0, 0, 1, 1], [], []>} : vector<16x64xbf16>, vector<64x32xbf16>, vector<16x32xf32> -> vector<16x32xf32>
    %c0_164 = arith.constant 0 : index
    %c0_165 = arith.constant 0 : index
    %491 = vector.load %arg14[%c0_164, %c0_165] : memref<1x32xf32, #tpu.memory_space<vmem>>, vector<1x32xf32>
    %492 = vector.broadcast %491 : vector<1x32xf32> to vector<16x32xf32>
    %493 = arith.addf %490, %492 : vector<16x32xf32>
    %494 = arith.addf %479, %493 : vector<16x32xf32>
    %cst_166 = arith.constant dense<0.000000e+00> : vector<16xf32>
    %495 = vector.multi_reduction <add>, %494, %cst_166 [1] : vector<16x32xf32> to vector<16xf32>
    %496 = vector.shape_cast %495 : vector<16xf32> to vector<16x1xf32>
    %cst_167 = arith.constant 3.200000e+01 : f32
    %497 = vector.broadcast %cst_167 : f32 to vector<16x1xf32>
    %498 = arith.divf %496, %497 : vector<16x1xf32>
    %499 = vector.broadcast %498 : vector<16x1xf32> to vector<16x32xf32>
    %500 = arith.subf %494, %499 : vector<16x32xf32>
    %501 = arith.mulf %500, %500 : vector<16x32xf32>
    %cst_168 = arith.constant dense<0.000000e+00> : vector<16xf32>
    %502 = vector.multi_reduction <add>, %501, %cst_168 [1] : vector<16x32xf32> to vector<16xf32>
    %503 = vector.shape_cast %502 : vector<16xf32> to vector<16x1xf32>
    %cst_169 = arith.constant 3.200000e+01 : f32
    %504 = vector.broadcast %cst_169 : f32 to vector<16x1xf32>
    %505 = arith.divf %503, %504 : vector<16x1xf32>
    %cst_170 = arith.constant 9.99999974E-6 : f32
    %506 = vector.broadcast %cst_170 : f32 to vector<16x1xf32>
    %507 = arith.addf %505, %506 : vector<16x1xf32>
    %508 = math.rsqrt %507 : vector<16x1xf32>
    %509 = vector.broadcast %508 : vector<16x1xf32> to vector<16x32xf32>
    %510 = arith.mulf %500, %509 : vector<16x32xf32>
    %c0_171 = arith.constant 0 : index
    %c0_172 = arith.constant 0 : index
    %511 = vector.load %arg19[%c0_171, %c0_172] : memref<1x32xf32, #tpu.memory_space<vmem>>, vector<1x32xf32>
    %512 = vector.broadcast %511 : vector<1x32xf32> to vector<16x32xf32>
    %513 = arith.mulf %510, %512 : vector<16x32xf32>
    %c0_173 = arith.constant 0 : index
    %c0_174 = arith.constant 0 : index
    %514 = vector.load %arg20[%c0_173, %c0_174] : memref<1x32xf32, #tpu.memory_space<vmem>>, vector<1x32xf32>
    %515 = vector.broadcast %514 : vector<1x32xf32> to vector<16x32xf32>
    %516 = arith.addf %513, %515 : vector<16x32xf32>
    %c0_175 = arith.constant 0 : index
    %c0_176 = arith.constant 0 : index
    %517 = vector.load %arg21[%c0_175, %c0_176] : memref<16x32xf32, #tpu.memory_space<vmem>>, vector<16x32xf32>
    tpu.vector_store %arg21[%c0_175, %c0_176], %516 {strides = array<i32>} : memref<16x32xf32, #tpu.memory_space<vmem>>, vector<16x32xf32>,
    return
  }
  func.func @transform_0(%arg0: i32) -> i32 {
    %c0_i32 = arith.constant 0 : i32
    %c0_i32_0 = arith.constant 0 : i32
    return %c0_i32 : i32
  }
  func.func @transform_1(%arg0: i32) -> (i32, i32) {
    %c0_i32 = arith.constant 0 : i32
    %c0_i32_0 = arith.constant 0 : i32
    return %arg0, %c0_i32 : i32, i32
  }
  func.func @transform_2(%arg0: i32) -> (i32, i32) {
    %c0_i32 = arith.constant 0 : i32
    %c0_i32_0 = arith.constant 0 : i32
    return %arg0, %c0_i32 : i32, i32
  }
  func.func @transform_3(%arg0: i32) -> (i32, i32) {
    %c0_i32 = arith.constant 0 : i32
    %c0_i32_0 = arith.constant 0 : i32
    return %arg0, %c0_i32 : i32, i32
  }
  func.func @transform_4(%arg0: i32) -> (i32, i32) {
    %c0_i32 = arith.constant 0 : i32
    %c0_i32_0 = arith.constant 0 : i32
    %c0_i32_1 = arith.constant 0 : i32
    return %c0_i32, %c0_i32_0 : i32, i32
  }
  func.func @transform_5(%arg0: i32) -> (i32, i32) {
    %c0_i32 = arith.constant 0 : i32
    %c0_i32_0 = arith.constant 0 : i32
    %c0_i32_1 = arith.constant 0 : i32
    return %c0_i32, %c0_i32_0 : i32, i32
  }
  func.func @transform_6(%arg0: i32) -> (i32, i32) {
    %c0_i32 = arith.constant 0 : i32
    %c0_i32_0 = arith.constant 0 : i32
    %c0_i32_1 = arith.constant 0 : i32
    return %c0_i32, %c0_i32_0 : i32, i32
  }
  func.func @transform_7(%arg0: i32) -> (i32, i32) {
    %c0_i32 = arith.constant 0 : i32
    %c0_i32_0 = arith.constant 0 : i32
    %c0_i32_1 = arith.constant 0 : i32
    return %c0_i32, %c0_i32_0 : i32, i32
  }
  func.func @transform_8(%arg0: i32) -> (i32, i32) {
    %c0_i32 = arith.constant 0 : i32
    %c0_i32_0 = arith.constant 0 : i32
    %c0_i32_1 = arith.constant 0 : i32
    return %c0_i32, %c0_i32_0 : i32, i32
  }
  func.func @transform_9(%arg0: i32) -> (i32, i32) {
    %c0_i32 = arith.constant 0 : i32
    %c0_i32_0 = arith.constant 0 : i32
    %c0_i32_1 = arith.constant 0 : i32
    return %c0_i32, %c0_i32_0 : i32, i32
  }
  func.func @transform_10(%arg0: i32) -> (i32, i32) {
    %c0_i32 = arith.constant 0 : i32
    %c0_i32_0 = arith.constant 0 : i32
    %c0_i32_1 = arith.constant 0 : i32
    return %c0_i32, %c0_i32_0 : i32, i32
  }
  func.func @transform_11(%arg0: i32) -> (i32, i32) {
    %c0_i32 = arith.constant 0 : i32
    %c0_i32_0 = arith.constant 0 : i32
    %c0_i32_1 = arith.constant 0 : i32
    return %c0_i32, %c0_i32_0 : i32, i32
  }
  func.func @transform_12(%arg0: i32) -> (i32, i32) {
    %c0_i32 = arith.constant 0 : i32
    %c0_i32_0 = arith.constant 0 : i32
    %c0_i32_1 = arith.constant 0 : i32
    return %c0_i32, %c0_i32_0 : i32, i32
  }
  func.func @transform_13(%arg0: i32) -> (i32, i32) {
    %c0_i32 = arith.constant 0 : i32
    %c0_i32_0 = arith.constant 0 : i32
    %c0_i32_1 = arith.constant 0 : i32
    return %c0_i32, %c0_i32_0 : i32, i32
  }
  func.func @transform_14(%arg0: i32) -> (i32, i32) {
    %c0_i32 = arith.constant 0 : i32
    %c0_i32_0 = arith.constant 0 : i32
    %c0_i32_1 = arith.constant 0 : i32
    return %c0_i32, %c0_i32_0 : i32, i32
  }
  func.func @transform_15(%arg0: i32) -> (i32, i32) {
    %c0_i32 = arith.constant 0 : i32
    %c0_i32_0 = arith.constant 0 : i32
    %c0_i32_1 = arith.constant 0 : i32
    return %c0_i32, %c0_i32_0 : i32, i32
  }
  func.func @transform_16(%arg0: i32) -> (i32, i32) {
    %c0_i32 = arith.constant 0 : i32
    %c0_i32_0 = arith.constant 0 : i32
    %c0_i32_1 = arith.constant 0 : i32
    return %c0_i32, %c0_i32_0 : i32, i32
  }
  func.func @transform_17(%arg0: i32) -> (i32, i32) {
    %c0_i32 = arith.constant 0 : i32
    %c0_i32_0 = arith.constant 0 : i32
    %c0_i32_1 = arith.constant 0 : i32
    return %c0_i32, %c0_i32_0 : i32, i32
  }
  func.func @transform_18(%arg0: i32) -> (i32, i32) {
    %c0_i32 = arith.constant 0 : i32
    %c0_i32_0 = arith.constant 0 : i32
    %c0_i32_1 = arith.constant 0 : i32
    return %c0_i32, %c0_i32_0 : i32, i32
  }
  func.func @transform_19(%arg0: i32) -> (i32, i32) {
    %c0_i32 = arith.constant 0 : i32
    %c0_i32_0 = arith.constant 0 : i32
    %c0_i32_1 = arith.constant 0 : i32
    return %c0_i32, %c0_i32_0 : i32, i32
  }
  func.func @transform_20(%arg0: i32) -> (i32, i32) {
    %c0_i32 = arith.constant 0 : i32
    %c0_i32_0 = arith.constant 0 : i32
    return %arg0, %c0_i32 : i32, i32
  }
}

</mosaic_0001>

<llo_original>
// kernel: tpu_custom_call.1
$region0: #{tpu_custom_call.1}
  #allocation0 [shape = 'u32[]', space=smem, size = 0x4, offset = 0x4, fixed_abs, tag = 'smem constant byte address 0x4 - core index']
  #allocation1 [shape = 'u32[144,128]{1,0:T(1,128)}', space=vmem, size = 0x12000, scoped, tag = 'internal scratch']
  %s0 = inlined_call_operand.hbm [shape: s32[2], index: 0, kind: input, shape index: {}]
  %s1 = inlined_call_operand.vmem [shape: f32[16,32], index: 1, kind: input, shape index: {}]
  %s2 = inlined_call_operand.vmem [shape: f32[16,32], index: 2, kind: input, shape index: {}]
  %s3 = inlined_call_operand.vmem [shape: f32[16,32], index: 3, kind: input, shape index: {}]
  %s4 = inlined_call_operand.hbm [shape: bf16[32,32], index: 4, kind: input, shape index: {}]
  %s5 = inlined_call_operand.hbm [shape: bf16[32,64], index: 5, kind: input, shape index: {}]
  %s6 = inlined_call_operand.hbm [shape: bf16[32,32], index: 6, kind: input, shape index: {}]
  %s7 = inlined_call_operand.hbm [shape: bf16[32,32], index: 7, kind: input, shape index: {}]
  %s8 = inlined_call_operand.hbm [shape: bf16[32,64], index: 8, kind: input, shape index: {}]
  %s9 = inlined_call_operand.vmem [shape: bf16[32,32], index: 9, kind: input, shape index: {}]
  %s10 = inlined_call_operand.hbm [shape: bf16[32,64], index: 10, kind: input, shape index: {}]
  %s11 = inlined_call_operand.vmem [shape: f32[1,64], index: 11, kind: input, shape index: {}]
  %s12 = inlined_call_operand.vmem [shape: bf16[64,32], index: 12, kind: input, shape index: {}]
  %s13 = inlined_call_operand.vmem [shape: f32[1,32], index: 13, kind: input, shape index: {}]
  %s14 = inlined_call_operand.vmem [shape: f32[1,32], index: 14, kind: input, shape index: {}]
  %s15 = inlined_call_operand.vmem [shape: f32[1,32], index: 15, kind: input, shape index: {}]
  %s16 = inlined_call_operand.vmem [shape: f32[1,32], index: 16, kind: input, shape index: {}]
  %s17 = inlined_call_operand.vmem [shape: f32[1,32], index: 17, kind: input, shape index: {}]
  %s18 = inlined_call_operand.vmem [shape: f32[1,32], index: 18, kind: input, shape index: {}]
  %s19 = inlined_call_operand.vmem [shape: f32[1,32], index: 19, kind: input, shape index: {}]
  %s20 = inlined_call_operand.hbm [shape: f32[16,32], index: 20, kind: output, shape index: {}]
  %s21 = sld [smem:[#allocation0]]
  $region118: #{tpu_custom_call.1} parent=0
    _
  %s23 = ssub.s32 1, %s21
  %s24 = scalar_select 0, %s23, %s21
  $region1: #{tpu_custom_call.1} parent=0
    #allocation2 [shape = 'u8[512]{0}', space=smem, size = 0x200, scoped, tag = 'input window, operand 0, single buffered']
    #allocation3 [shape = 's32[1]{0}', space=sflag, size = 0x4, scoped, tag = 'scoped memory for tpu_custom_call.1']
    #allocation4 [shape = 's32[1]{0}', space=sflag, size = 0x4, scoped, tag = 'scoped memory for tpu_custom_call.1']
    #allocation5 [shape = 's32[1]{0}', space=sflag, size = 0x4, scoped, tag = 'scoped memory for tpu_custom_call.1']
    #allocation6 [shape = 'u8[8192]{0}', space=vmem, size = 0x2000, scoped, tag = 'input window, operand 4, single buffered']
    #allocation7 [shape = 'u8[8192]{0}', space=vmem, size = 0x2000, scoped, tag = 'input window, operand 5, single buffered']
    #allocation8 [shape = 's32[1]{0}', space=sflag, size = 0x4, scoped, tag = 'scoped memory for tpu_custom_call.1']
    #allocation9 [shape = 'u8[8192]{0}', space=vmem, size = 0x2000, scoped, tag = 'input window, operand 6, single buffered']
    #allocation10 [shape = 'u8[8192]{0}', space=vmem, size = 0x2000, scoped, tag = 'input window, operand 7, single buffered']
    #allocation11 [shape = 's32[1]{0}', space=sflag, size = 0x4, scoped, tag = 'scoped memory for tpu_custom_call.1']
    #allocation12 [shape = 'u8[8192]{0}', space=vmem, size = 0x2000, scoped, tag = 'input window, operand 8, single buffered']
    #allocation13 [shape = 'u8[8192]{0}', space=vmem, size = 0x2000, scoped, tag = 'input window, operand 10, single buffered']
    #allocation14 [shape = 's32[1]{0}', space=sflag, size = 0x4, scoped, tag = 'scoped memory for tpu_custom_call.1']
    #allocation15 [shape = 'u8[8192]{0}', space=vmem, size = 0x2000, scoped, tag = 'output window, operand 0, single buffered']
    %25 = vsyncpa [#allocation5], 0
    %26 = vsyncpa [#allocation3], 0
    %27 = vsyncpa [#allocation8], 0
    %28 = vsyncpa [#allocation11], 0
    %29 = vsyncpa [#allocation14], 0
    %30 = vsyncpa [#allocation4], 0
    // Predicated region
    $region2: #{tpu_custom_call.1} parent=1 // pred_check
      _
    $region3: #{tpu_custom_call.1} parent=1 // pred_check_branch
      %32 = sbr.rel (0) target = $region5
    $region4: #{tpu_custom_call.1} parent=1 // pred_region
      %s34 = ssub.s32 16, 16
      %35 = vsyncadd [#allocation5], %s34
      %38 = dma.hbm_to_smem %s0, 16, [#allocation2], [#allocation5]
    $region5: #{tpu_custom_call.1} parent=1 // pred_fallthru
      _
    // Predicated region
    $region6: #{tpu_custom_call.1} parent=1 // pred_check
      _
    $region7: #{tpu_custom_call.1} parent=1 // pred_check_branch
      %40 = sbr.rel (0) target = $region9
    $region8: #{tpu_custom_call.1} parent=1 // pred_region
      _
    $region9: #{tpu_custom_call.1} parent=1 // pred_fallthru
      _
    // Predicated region
    $region10: #{tpu_custom_call.1} parent=1 // pred_check
      _
    $region11: #{tpu_custom_call.1} parent=1 // pred_check_branch
      %42 = sbr.rel (0) target = $region13
    $region12: #{tpu_custom_call.1} parent=1 // pred_region
      _
    $region13: #{tpu_custom_call.1} parent=1 // pred_fallthru
      _
    // Predicated region
    $region14: #{tpu_custom_call.1} parent=1 // pred_check
      _
    $region15: #{tpu_custom_call.1} parent=1 // pred_check_branch
      %44 = sbr.rel (0) target = $region17
    $region16: #{tpu_custom_call.1} parent=1 // pred_region
      _
    $region17: #{tpu_custom_call.1} parent=1 // pred_fallthru
      _
    // Predicated region
    $region18: #{tpu_custom_call.1} parent=1 // pred_check
      _
    $region19: #{tpu_custom_call.1} parent=1 // pred_check_branch
      %46 = sbr.rel (0) target = $region21
    $region20: #{tpu_custom_call.1} parent=1 // pred_region
      %s48 = ssub.s32 256, 256
      %49 = vsyncadd [#allocation3], %s48
      %s50 = sshll.u32 [#allocation6], 4
      %s51 = int_to_ptr.vmem [resolvable:$true] %s50
      %56 = dma.hbm_to_vmem [thread:$0]  %s4, 256, %s51, [#allocation3], 64, 64, 4
    $region21: #{tpu_custom_call.1} parent=1 // pred_fallthru
      _
    // Predicated region
    $region22: #{tpu_custom_call.1} parent=1 // pred_check
      _
    $region23: #{tpu_custom_call.1} parent=1 // pred_check_branch
      %58 = sbr.rel (0) target = $region25
    $region24: #{tpu_custom_call.1} parent=1 // pred_region
      %s60 = ssub.s32 256, 256
      %61 = vsyncadd [#allocation8], %s60
      %s62 = sshll.u32 [#allocation7], 4
      %s63 = int_to_ptr.vmem [resolvable:$true] %s62
      %68 = dma.hbm_to_vmem [thread:$0]  %s5, 256, %s63, [#allocation8], 64, 64, 4
    $region25: #{tpu_custom_call.1} parent=1 // pred_fallthru
      _
    // Predicated region
    $region26: #{tpu_custom_call.1} parent=1 // pred_check
      _
    $region27: #{tpu_custom_call.1} parent=1 // pred_check_branch
      %70 = sbr.rel (0) target = $region29
    $region28: #{tpu_custom_call.1} parent=1 // pred_region
      %s72 = ssub.s32 256, 256
      %73 = vsyncadd [#allocation8], %s72
      %s74 = sshll.u32 [#allocation9], 4
      %s75 = int_to_ptr.vmem [resolvable:$true] %s74
      %80 = dma.hbm_to_vmem [thread:$0]  %s6, 256, %s75, [#allocation8], 64, 64, 4
    $region29: #{tpu_custom_call.1} parent=1 // pred_fallthru
      _
    // Predicated region
    $region30: #{tpu_custom_call.1} parent=1 // pred_check
      _
    $region31: #{tpu_custom_call.1} parent=1 // pred_check_branch
      %82 = sbr.rel (0) target = $region33
    $region32: #{tpu_custom_call.1} parent=1 // pred_region
      %s84 = ssub.s32 256, 256
      %85 = vsyncadd [#allocation11], %s84
      %s86 = sshll.u32 [#allocation10], 4
      %s87 = int_to_ptr.vmem [resolvable:$true] %s86
      %92 = dma.hbm_to_vmem [thread:$0]  %s7, 256, %s87, [#allocation11], 64, 64, 4
    $region33: #{tpu_custom_call.1} parent=1 // pred_fallthru
      _
    // Predicated region
    $region34: #{tpu_custom_call.1} parent=1 // pred_check
      _
    $region35: #{tpu_custom_call.1} parent=1 // pred_check_branch
      %94 = sbr.rel (0) target = $region37
    $region36: #{tpu_custom_call.1} parent=1 // pred_region
      %s96 = ssub.s32 256, 256
      %97 = vsyncadd [#allocation11], %s96
      %s98 = sshll.u32 [#allocation12], 4
      %s99 = int_to_ptr.vmem [resolvable:$true] %s98
      %104 = dma.hbm_to_vmem [thread:$0]  %s8, 256, %s99, [#allocation11], 64, 64, 4
    $region37: #{tpu_custom_call.1} parent=1 // pred_fallthru
      _
    // Predicated region
    $region38: #{tpu_custom_call.1} parent=1 // pred_check
      _
    $region39: #{tpu_custom_call.1} parent=1 // pred_check_branch
      %106 = sbr.rel (0) target = $region41
    $region40: #{tpu_custom_call.1} parent=1 // pred_region
      _
    $region41: #{tpu_custom_call.1} parent=1 // pred_fallthru
      _
    // Predicated region
    $region42: #{tpu_custom_call.1} parent=1 // pred_check
      _
    $region43: #{tpu_custom_call.1} parent=1 // pred_check_branch
      %108 = sbr.rel (0) target = $region45
    $region44: #{tpu_custom_call.1} parent=1 // pred_region
      %s110 = ssub.s32 256, 256
      %111 = vsyncadd [#allocation14], %s110
      %s112 = sshll.u32 [#allocation13], 4
      %s113 = int_to_ptr.vmem [resolvable:$true] %s112
      %118 = dma.hbm_to_vmem [thread:$0]  %s10, 256, %s113, [#allocation14], 64, 64, 4
    $region45: #{tpu_custom_call.1} parent=1 // pred_fallthru
      _
    // Predicated region
    $region46: #{tpu_custom_call.1} parent=1 // pred_check
      _
    $region47: #{tpu_custom_call.1} parent=1 // pred_check_branch
      %120 = sbr.rel (0) target = $region49
    $region48: #{tpu_custom_call.1} parent=1 // pred_region
      _
    $region49: #{tpu_custom_call.1} parent=1 // pred_fallthru
      _
    // Predicated region
    $region50: #{tpu_custom_call.1} parent=1 // pred_check
      _
    $region51: #{tpu_custom_call.1} parent=1 // pred_check_branch
      %122 = sbr.rel (0) target = $region53
    $region52: #{tpu_custom_call.1} parent=1 // pred_region
      _
    $region53: #{tpu_custom_call.1} parent=1 // pred_fallthru
      _
    // Predicated region
    $region54: #{tpu_custom_call.1} parent=1 // pred_check
      _
    $region55: #{tpu_custom_call.1} parent=1 // pred_check_branch
      %124 = sbr.rel (0) target = $region57
    $region56: #{tpu_custom_call.1} parent=1 // pred_region
      _
    $region57: #{tpu_custom_call.1} parent=1 // pred_fallthru
      _
    // Predicated region
    $region58: #{tpu_custom_call.1} parent=1 // pred_check
      _
    $region59: #{tpu_custom_call.1} parent=1 // pred_check_branch
      %126 = sbr.rel (0) target = $region61
    $region60: #{tpu_custom_call.1} parent=1 // pred_region
      _
    $region61: #{tpu_custom_call.1} parent=1 // pred_fallthru
      _
    // Predicated region
    $region62: #{tpu_custom_call.1} parent=1 // pred_check
      _
    $region63: #{tpu_custom_call.1} parent=1 // pred_check_branch
      %128 = sbr.rel (0) target = $region65
    $region64: #{tpu_custom_call.1} parent=1 // pred_region
      _
    $region65: #{tpu_custom_call.1} parent=1 // pred_fallthru
      _
    // Predicated region
    $region66: #{tpu_custom_call.1} parent=1 // pred_check
      _
    $region67: #{tpu_custom_call.1} parent=1 // pred_check_branch
      %130 = sbr.rel (0) target = $region69
    $region68: #{tpu_custom_call.1} parent=1 // pred_region
      _
    $region69: #{tpu_custom_call.1} parent=1 // pred_fallthru
      _
    // Predicated region
    $region70: #{tpu_custom_call.1} parent=1 // pred_check
      _
    $region71: #{tpu_custom_call.1} parent=1 // pred_check_branch
      %132 = sbr.rel (0) target = $region73
    $region72: #{tpu_custom_call.1} parent=1 // pred_region
      _
    $region73: #{tpu_custom_call.1} parent=1 // pred_fallthru
      _
    // Predicated region
    $region74: #{tpu_custom_call.1} parent=1 // pred_check
      _
    $region75: #{tpu_custom_call.1} parent=1 // pred_check_branch
      %134 = sbr.rel (0) target = $region77
    $region76: #{tpu_custom_call.1} parent=1 // pred_region
      _
    $region77: #{tpu_custom_call.1} parent=1 // pred_fallthru
      _
    // Predicated region
    $region78: #{tpu_custom_call.1} parent=1 // pred_check
      _
    $region79: #{tpu_custom_call.1} parent=1 // pred_check_branch
      %136 = sbr.rel (0) target = $region81
    $region80: #{tpu_custom_call.1} parent=1 // pred_region
      _
    $region81: #{tpu_custom_call.1} parent=1 // pred_fallthru
      _
    // Predicated region
    $region82: #{tpu_custom_call.1} parent=1 // pred_check
      _
    $region83: #{tpu_custom_call.1} parent=1 // pred_check_branch
      %138 = sbr.rel (0) target = $region85
    $region84: #{tpu_custom_call.1} parent=1 // pred_region
      %139 = dma.done [#allocation5], 16
    $region85: #{tpu_custom_call.1} parent=1 // pred_fallthru
      _
    // Predicated region
    $region86: #{tpu_custom_call.1} parent=1 // pred_check
      _
    $region87: #{tpu_custom_call.1} parent=1 // pred_check_branch
      %141 = sbr.rel (0) target = $region89
    $region88: #{tpu_custom_call.1} parent=1 // pred_region
      %142 = dma.done [#allocation3], 256
    $region89: #{tpu_custom_call.1} parent=1 // pred_fallthru
      _
    // Predicated region
    $region90: #{tpu_custom_call.1} parent=1 // pred_check
      _
    $region91: #{tpu_custom_call.1} parent=1 // pred_check_branch
      %144 = sbr.rel (0) target = $region93
    $region92: #{tpu_custom_call.1} parent=1 // pred_region
      %145 = dma.done [#allocation8], 256
    $region93: #{tpu_custom_call.1} parent=1 // pred_fallthru
      _
    // Predicated region
    $region94: #{tpu_custom_call.1} parent=1 // pred_check
      _
    $region95: #{tpu_custom_call.1} parent=1 // pred_check_branch
      %147 = sbr.rel (0) target = $region97
    $region96: #{tpu_custom_call.1} parent=1 // pred_region
      %148 = dma.done [#allocation8], 256
    $region97: #{tpu_custom_call.1} parent=1 // pred_fallthru
      _
    // Predicated region
    $region98: #{tpu_custom_call.1} parent=1 // pred_check
      _
    $region99: #{tpu_custom_call.1} parent=1 // pred_check_branch
      %150 = sbr.rel (0) target = $region101
    $region100: #{tpu_custom_call.1} parent=1 // pred_region
      %151 = dma.done [#allocation11], 256
    $region101: #{tpu_custom_call.1} parent=1 // pred_fallthru
      _
    // Predicated region
    $region102: #{tpu_custom_call.1} parent=1 // pred_check
      _
    $region103: #{tpu_custom_call.1} parent=1 // pred_check_branch
      %153 = sbr.rel (0) target = $region105
    $region104: #{tpu_custom_call.1} parent=1 // pred_region
      %154 = dma.done [#allocation11], 256
    $region105: #{tpu_custom_call.1} parent=1 // pred_fallthru
      _
    // Predicated region
    $region106: #{tpu_custom_call.1} parent=1 // pred_check
      _
    $region107: #{tpu_custom_call.1} parent=1 // pred_check_branch
      %156 = sbr.rel (0) target = $region109
    $region108: #{tpu_custom_call.1} parent=1 // pred_region
      %157 = dma.done [#allocation14], 256
    $region109: #{tpu_custom_call.1} parent=1 // pred_fallthru
      _
    %158 = sfence
    %v160 = vld [vmem:[%s1] sm:$0xff]
    %v161 = vld [vmem:[%s1 + $0x8] sm:$0xff]
    %v162 = vld [vmem:[%s2] sm:$0xff]
    %v163 = vld [vmem:[%s2 + $0x8] sm:$0xff]
    %v164 = vld [vmem:[%s3] sm:$0xff]
    %v165 = vld [vmem:[%s3 + $0x8] sm:$0xff]
    %v166 = vlaneseq
    %v167 = vshrl.u32 %v166, 7
    %v168 = vlaneseq
    %v169 = vand.u32 %v168, 127
    %vm170 = vcmp.le.s32.totalorder %v169, %v167
    %v171 = vpack.c.bf16 %v161, %v160
    %v172 = vld [vmem:[#allocation6] sm:$0xf]
    %v173 = vld [vmem:[#allocation6 + $0x4] sm:$0xf]
    %v174 = vld [vmem:[#allocation6 + $0x8] sm:$0xf]
    %v175 = vld [vmem:[#allocation6 + $0xc] sm:$0xf]
    %v180 = vunpack.c.l.b16 %v172
    %v181 = vunpack.c.l.b16 %v173
    %v182 = vunpack.c.l.b16 %v174
    %v183 = vunpack.c.l.b16 %v175
    %v184 = vpack.c.b16 %v181, %v180
    %v185 = vpack.c.b16 %v183, %v182
    %vm188 = vcmask 261120
    %v190 = vsel %vm188, %v171, 0
    %192 = vmatprep.subr.bf16.mxu0 0
    %193 = vmatpush1.bf16.msra.mxu0 %v184
    %194 = vmatprep.subr.bf16.mxu0 0
    %195 = vmatpush1.bf16.msra.mxu0 %v185
    %196 = vmatprep.subr.bf16.mxu0 0
    %197 = vmatpush1.bf16.msra.mxu0 0
    %198 = vmatprep.subr.bf16.mxu0 0
    %199 = vmatpush1.bf16.msra.mxu0 0
    %200 = vmatprep.subr.bf16.mxu0 0
    %201 = vmatpush1.bf16.msra.mxu0 0
    %202 = vmatprep.subr.bf16.mxu0 0
    %203 = vmatpush1.bf16.msra.mxu0 0
    %204 = vmatprep.subr.bf16.mxu0 0
    %205 = vmatpush1.bf16.msra.mxu0 0
    %206 = vmatprep.subr.bf16.mxu0 0
    %207 = vmatpush1.bf16.msra.mxu0 0
    %208 = vmatprep.subr.bf16.mxu0 0
    %209 = vmatpush1.bf16.msra.mxu0 0
    %210 = vmatprep.subr.bf16.mxu0 0
    %211 = vmatpush1.bf16.msra.mxu0 0
    %212 = vmatprep.subr.bf16.mxu0 0
    %213 = vmatpush1.bf16.msra.mxu0 0
    %214 = vmatprep.subr.bf16.mxu0 0
    %215 = vmatpush1.bf16.msra.mxu0 0
    %216 = vmatprep.subr.bf16.mxu0 0
    %217 = vmatpush1.bf16.msra.mxu0 0
    %218 = vmatprep.subr.bf16.mxu0 0
    %219 = vmatpush1.bf16.msra.mxu0 0
    %220 = vmatprep.subr.bf16.mxu0 0
    %221 = vmatpush1.bf16.msra.mxu0 0
    %222 = vmatprep.subr.bf16.mxu0 0
    %223 = vmatpush1.bf16.msra.mxu0 0
    %224 = vmatprep.mubr.bf16.mxu0 0
    %225 = vmatmul.mubr.bf16.gmra.mrb[0].mxu0 %v190
    %v226 = vpop.f32.mrb[0].mxu0
    %v227 = vadd.f32 0.0, %v226
    %v228 = vpop.f32.mrb[0].mxu0
    %v229 = vpop.f32.mrb[0].mxu0
    %v230 = vadd.f32 0.0, %v229
    %v231 = vpop.f32.mrb[0].mxu0
    %232 = vdwg.mxu0
    %v233 = vpack.c.bf16 %v163, %v162
    %v234 = vld [vmem:[#allocation7] sm:$0xf]
    %v235 = vld [vmem:[#allocation7 + $0x4] sm:$0xf]
    %v236 = vld [vmem:[#allocation7 + $0x8] sm:$0xf]
    %v237 = vld [vmem:[#allocation7 + $0xc] sm:$0xf]
    %v242 = vunpack.c.l.b16 %v234
    %v243 = vunpack.c.l.b16 %v235
    %v244 = vunpack.c.l.b16 %v236
    %v245 = vunpack.c.l.b16 %v237
    %v246 = vpack.c.b16 %v243, %v242
    %v247 = vpack.c.b16 %v245, %v244
    %v251 = vsel %vm188, %v233, 0
    %253 = vmatprep.subr.bf16.mxu0 0
    %254 = vmatpush1.bf16.msra.mxu0 %v246
    %255 = vmatprep.subr.bf16.mxu0 0
    %256 = vmatpush1.bf16.msra.mxu0 %v247
    %257 = vmatprep.subr.bf16.mxu0 0
    %258 = vmatpush1.bf16.msra.mxu0 0
    %259 = vmatprep.subr.bf16.mxu0 0
    %260 = vmatpush1.bf16.msra.mxu0 0
    %261 = vmatprep.subr.bf16.mxu0 0
    %262 = vmatpush1.bf16.msra.mxu0 0
    %263 = vmatprep.subr.bf16.mxu0 0
    %264 = vmatpush1.bf16.msra.mxu0 0
    %265 = vmatprep.subr.bf16.mxu0 0
    %266 = vmatpush1.bf16.msra.mxu0 0
    %267 = vmatprep.subr.bf16.mxu0 0
    %268 = vmatpush1.bf16.msra.mxu0 0
    %269 = vmatprep.subr.bf16.mxu0 0
    %270 = vmatpush1.bf16.msra.mxu0 0
    %271 = vmatprep.subr.bf16.mxu0 0
    %272 = vmatpush1.bf16.msra.mxu0 0
    %273 = vmatprep.subr.bf16.mxu0 0
    %274 = vmatpush1.bf16.msra.mxu0 0
    %275 = vmatprep.subr.bf16.mxu0 0
    %276 = vmatpush1.bf16.msra.mxu0 0
    %277 = vmatprep.subr.bf16.mxu0 0
    %278 = vmatpush1.bf16.msra.mxu0 0
    %279 = vmatprep.subr.bf16.mxu0 0
    %280 = vmatpush1.bf16.msra.mxu0 0
    %281 = vmatprep.subr.bf16.mxu0 0
    %282 = vmatpush1.bf16.msra.mxu0 0
    %283 = vmatprep.subr.bf16.mxu0 0
    %284 = vmatpush1.bf16.msra.mxu0 0
    %285 = vmatprep.mubr.bf16.mxu0 0
    %286 = vmatmul.mubr.bf16.gmra.mrb[0].mxu0 %v251
    %v287 = vpop.f32.mrb[0].mxu0
    %v288 = vadd.f32 0.0, %v287
    %v289 = vpop.f32.mrb[0].mxu0
    %v290 = vpop.f32.mrb[0].mxu0
    %v291 = vadd.f32 0.0, %v290
    %v292 = vpop.f32.mrb[0].mxu0
    %293 = vdwg.mxu0
    %v294 = vpack.c.bf16 %v230, %v227
    %v295 = vpack.c.bf16 %v291, %v288
    %v296 = vld [vmem:[#allocation9] sm:$0xf]
    %v297 = vld [vmem:[#allocation9 + $0x4] sm:$0xf]
    %v298 = vld [vmem:[#allocation9 + $0x8] sm:$0xf]
    %v299 = vld [vmem:[#allocation9 + $0xc] sm:$0xf]
    %vm300 = vcmask 64512
    %v302 = vsel %vm300, %v294, 0
    %v305 = vsel %vm300, %v295, 0
    %307 = vmatprep.subr.bf16.mxu0 0
    %308 = vmatpush1.bf16.xpose.msra.mxu0 %v305
    %309 = vmatprep.subr.bf16.mxu0 0
    %310 = vmatpush1.bf16.xpose.msra.mxu0 0
    %311 = vmatprep.subr.bf16.mxu0 0
    %312 = vmatpush1.bf16.xpose.msra.mxu0 0
    %313 = vmatprep.subr.bf16.mxu0 0
    %314 = vmatpush1.bf16.xpose.msra.mxu0 0
    %315 = vmatprep.subr.bf16.mxu0 0
    %316 = vmatpush1.bf16.xpose.msra.mxu0 0
    %317 = vmatprep.subr.bf16.mxu0 0
    %318 = vmatpush1.bf16.xpose.msra.mxu0 0
    %319 = vmatprep.subr.bf16.mxu0 0
    %320 = vmatpush1.bf16.xpose.msra.mxu0 0
    %321 = vmatprep.subr.bf16.mxu0 0
    %322 = vmatpush1.bf16.xpose.msra.mxu0 0
    %323 = vmatprep.subr.bf16.mxu0 0
    %324 = vmatpush1.bf16.xpose.msra.mxu0 0
    %325 = vmatprep.subr.bf16.mxu0 0
    %326 = vmatpush1.bf16.xpose.msra.mxu0 0
    %327 = vmatprep.subr.bf16.mxu0 0
    %328 = vmatpush1.bf16.xpose.msra.mxu0 0
    %329 = vmatprep.subr.bf16.mxu0 0
    %330 = vmatpush1.bf16.xpose.msra.mxu0 0
    %331 = vmatprep.subr.bf16.mxu0 0
    %332 = vmatpush1.bf16.xpose.msra.mxu0 0
    %333 = vmatprep.subr.bf16.mxu0 0
    %334 = vmatpush1.bf16.xpose.msra.mxu0 0
    %335 = vmatprep.subr.bf16.mxu0 0
    %336 = vmatpush1.bf16.xpose.msra.mxu0 0
    %337 = vmatprep.subr.bf16.mxu0 0
    %338 = vmatpush1.bf16.xpose.msra.mxu0 0
    %339 = vmatprep.mubr.bf16.mxu0 0
    %340 = vmatmul.mubr.bf16.gmra.mrb[0].mxu0 %v302
    %v341 = vpop.f32.mrb[0].mxu0
    %v342 = vadd.f32 0.0, %v341
    %v343 = vpop.f32.mrb[0].mxu0
    %v344 = vpop.f32.mrb[0].mxu0
    %v345 = vpop.f32.mrb[0].mxu0
    %346 = vdwg.mxu0
    %v347 = vmul.f32 %v342, 0.35355338
    %v348 = vsel %vm170, %v347, -1000000.0
    %v349 = vsel %vm300, %v348, -inf
    %350 = vmax.xlane.f32.xlu0 %v349
    %v351 = vpop.xlane.xlu0 %350
    %v352 = vsub.f32 %v348, %v351
    %v353 = vmul.f32 %v352, 1.442695
    %v354 = vpow.pop %v353
    %v355 = vsel %vm300, %v354, 0.0
    %356 = vadd.xlane.f32.xlu0 %v355
    %v357 = vpop.xlane.xlu0 %356
    %v358 = vrcp.pop %v357
    %v359 = vmul.f32 %v354, %v358
    %v360 = vpack.c.bf16 %v359, %v359
    %362 = vrot.lane.b32.xlu0 %v295, 96
    %v363 = vpop.permute.xlu0 %362
    %v365 = vsel %vm300, %v360, 0
    %vm367 = vcmask 1043456
    %v369 = vsel %vm367, %v363, 0
    %371 = vmatprep.subr.bf16.mxu0 0
    %372 = vmatpush1.bf16.msra.mxu0 %v369
    %373 = vmatprep.subr.bf16.mxu0 0
    %374 = vmatpush1.bf16.msra.mxu0 0
    %375 = vmatprep.subr.bf16.mxu0 0
    %376 = vmatpush1.bf16.msra.mxu0 0
    %377 = vmatprep.subr.bf16.mxu0 0
    %378 = vmatpush1.bf16.msra.mxu0 0
    %379 = vmatprep.subr.bf16.mxu0 0
    %380 = vmatpush1.bf16.msra.mxu0 0
    %381 = vmatprep.subr.bf16.mxu0 0
    %382 = vmatpush1.bf16.msra.mxu0 0
    %383 = vmatprep.subr.bf16.mxu0 0
    %384 = vmatpush1.bf16.msra.mxu0 0
    %385 = vmatprep.subr.bf16.mxu0 0
    %386 = vmatpush1.bf16.msra.mxu0 0
    %387 = vmatprep.subr.bf16.mxu0 0
    %388 = vmatpush1.bf16.msra.mxu0 0
    %389 = vmatprep.subr.bf16.mxu0 0
    %390 = vmatpush1.bf16.msra.mxu0 0
    %391 = vmatprep.subr.bf16.mxu0 0
    %392 = vmatpush1.bf16.msra.mxu0 0
    %393 = vmatprep.subr.bf16.mxu0 0
    %394 = vmatpush1.bf16.msra.mxu0 0
    %395 = vmatprep.subr.bf16.mxu0 0
    %396 = vmatpush1.bf16.msra.mxu0 0
    %397 = vmatprep.subr.bf16.mxu0 0
    %398 = vmatpush1.bf16.msra.mxu0 0
    %399 = vmatprep.subr.bf16.mxu0 0
    %400 = vmatpush1.bf16.msra.mxu0 0
    %401 = vmatprep.subr.bf16.mxu0 0
    %402 = vmatpush1.bf16.msra.mxu0 0
    %403 = vmatprep.mubr.bf16.mxu0 0
    %404 = vmatmul.mubr.bf16.gmra.mrb[0].mxu0 %v365
    %v405 = vpop.f32.mrb[0].mxu0
    %v406 = vadd.f32 0.0, %v405
    %v407 = vpop.f32.mrb[0].mxu0
    %v408 = vpop.f32.mrb[0].mxu0
    %v409 = vpop.f32.mrb[0].mxu0
    %410 = vdwg.mxu0
    %v411 = vpack.c.bf16 %v406, %v406
    %413 = vrot.lane.b32.xlu0 %v294, 120
    %v414 = vpop.permute.xlu0 %413
    %415 = vrot.lane.b32.xlu0 %v295, 120
    %v416 = vpop.permute.xlu0 %415
    %v418 = vsel %vm300, %v414, 0
    %v421 = vsel %vm300, %v416, 0
    %423 = vmatprep.subr.bf16.mxu0 0
    %424 = vmatpush1.bf16.xpose.msra.mxu0 %v421
    %425 = vmatprep.subr.bf16.mxu0 0
    %426 = vmatpush1.bf16.xpose.msra.mxu0 0
    %427 = vmatprep.subr.bf16.mxu0 0
    %428 = vmatpush1.bf16.xpose.msra.mxu0 0
    %429 = vmatprep.subr.bf16.mxu0 0
    %430 = vmatpush1.bf16.xpose.msra.mxu0 0
    %431 = vmatprep.subr.bf16.mxu0 0
    %432 = vmatpush1.bf16.xpose.msra.mxu0 0
    %433 = vmatprep.subr.bf16.mxu0 0
    %434 = vmatpush1.bf16.xpose.msra.mxu0 0
    %435 = vmatprep.subr.bf16.mxu0 0
    %436 = vmatpush1.bf16.xpose.msra.mxu0 0
    %437 = vmatprep.subr.bf16.mxu0 0
    %438 = vmatpush1.bf16.xpose.msra.mxu0 0
    %439 = vmatprep.subr.bf16.mxu0 0
    %440 = vmatpush1.bf16.xpose.msra.mxu0 0
    %441 = vmatprep.subr.bf16.mxu0 0
    %442 = vmatpush1.bf16.xpose.msra.mxu0 0
    %443 = vmatprep.subr.bf16.mxu0 0
    %444 = vmatpush1.bf16.xpose.msra.mxu0 0
    %445 = vmatprep.subr.bf16.mxu0 0
    %446 = vmatpush1.bf16.xpose.msra.mxu0 0
    %447 = vmatprep.subr.bf16.mxu0 0
    %448 = vmatpush1.bf16.xpose.msra.mxu0 0
    %449 = vmatprep.subr.bf16.mxu0 0
    %450 = vmatpush1.bf16.xpose.msra.mxu0 0
    %451 = vmatprep.subr.bf16.mxu0 0
    %452 = vmatpush1.bf16.xpose.msra.mxu0 0
    %453 = vmatprep.subr.bf16.mxu0 0
    %454 = vmatpush1.bf16.xpose.msra.mxu0 0
    %455 = vmatprep.mubr.bf16.mxu0 0
    %456 = vmatmul.mubr.bf16.gmra.mrb[0].mxu0 %v418
    %v457 = vpop.f32.mrb[0].mxu0
    %v458 = vadd.f32 0.0, %v457
    %v459 = vpop.f32.mrb[0].mxu0
    %v460 = vpop.f32.mrb[0].mxu0
    %v461 = vpop.f32.mrb[0].mxu0
    %462 = vdwg.mxu0
    %v463 = vmul.f32 %v458, 0.35355338
    %v464 = vsel %vm170, %v463, -1000000.0
    %v465 = vsel %vm300, %v464, -inf
    %466 = vmax.xlane.f32.xlu0 %v465
    %v467 = vpop.xlane.xlu0 %466
    %v468 = vsub.f32 %v464, %v467
    %v469 = vmul.f32 %v468, 1.442695
    %v470 = vpow.pop %v469
    %v471 = vsel %vm300, %v470, 0.0
    %472 = vadd.xlane.f32.xlu0 %v471
    %v473 = vpop.xlane.xlu0 %472
    %v474 = vrcp.pop %v473
    %v475 = vmul.f32 %v470, %v474
    %v476 = vpack.c.bf16 %v475, %v475
    %477 = vrot.lane.b32.xlu0 %v295, 88
    %v478 = vpop.permute.xlu0 %477
    %v480 = vsel %vm300, %v476, 0
    %v483 = vsel %vm367, %v478, 0
    %485 = vmatprep.subr.bf16.mxu0 0
    %486 = vmatpush1.bf16.msra.mxu0 %v483
    %487 = vmatprep.subr.bf16.mxu0 0
    %488 = vmatpush1.bf16.msra.mxu0 0
    %489 = vmatprep.subr.bf16.mxu0 0
    %490 = vmatpush1.bf16.msra.mxu0 0
    %491 = vmatprep.subr.bf16.mxu0 0
    %492 = vmatpush1.bf16.msra.mxu0 0
    %493 = vmatprep.subr.bf16.mxu0 0
    %494 = vmatpush1.bf16.msra.mxu0 0
    %495 = vmatprep.subr.bf16.mxu0 0
    %496 = vmatpush1.bf16.msra.mxu0 0
    %497 = vmatprep.subr.bf16.mxu0 0
    %498 = vmatpush1.bf16.msra.mxu0 0
    %499 = vmatprep.subr.bf16.mxu0 0
    %500 = vmatpush1.bf16.msra.mxu0 0
    %501 = vmatprep.subr.bf16.mxu0 0
    %502 = vmatpush1.bf16.msra.mxu0 0
    %503 = vmatprep.subr.bf16.mxu0 0
    %504 = vmatpush1.bf16.msra.mxu0 0
    %505 = vmatprep.subr.bf16.mxu0 0
    %506 = vmatpush1.bf16.msra.mxu0 0
    %507 = vmatprep.subr.bf16.mxu0 0
    %508 = vmatpush1.bf16.msra.mxu0 0
    %509 = vmatprep.subr.bf16.mxu0 0
    %510 = vmatpush1.bf16.msra.mxu0 0
    %511 = vmatprep.subr.bf16.mxu0 0
    %512 = vmatpush1.bf16.msra.mxu0 0
    %513 = vmatprep.subr.bf16.mxu0 0
    %514 = vmatpush1.bf16.msra.mxu0 0
    %515 = vmatprep.subr.bf16.mxu0 0
    %516 = vmatpush1.bf16.msra.mxu0 0
    %517 = vmatprep.mubr.bf16.mxu0 0
    %518 = vmatmul.mubr.bf16.gmra.mrb[0].mxu0 %v480
    %v519 = vpop.f32.mrb[0].mxu0
    %v520 = vadd.f32 0.0, %v519
    %v521 = vpop.f32.mrb[0].mxu0
    %v522 = vpop.f32.mrb[0].mxu0
    %v523 = vpop.f32.mrb[0].mxu0
    %524 = vdwg.mxu0
    %v525 = vpack.c.bf16 %v520, %v520
    %v527 = vsel %vm300, %v525, 0
    %v530 = vsel %vm367, %v297, 0
    %532 = vmatprep.subr.bf16.mxu0 0
    %533 = vmatpush1.bf16.msra.mxu0 %v530
    %534 = vmatprep.subr.bf16.mxu0 0
    %535 = vmatpush1.bf16.msra.mxu0 0
    %536 = vmatprep.subr.bf16.mxu0 0
    %537 = vmatpush1.bf16.msra.mxu0 0
    %538 = vmatprep.subr.bf16.mxu0 0
    %539 = vmatpush1.bf16.msra.mxu0 0
    %540 = vmatprep.subr.bf16.mxu0 0
    %541 = vmatpush1.bf16.msra.mxu0 0
    %542 = vmatprep.subr.bf16.mxu0 0
    %543 = vmatpush1.bf16.msra.mxu0 0
    %544 = vmatprep.subr.bf16.mxu0 0
    %545 = vmatpush1.bf16.msra.mxu0 0
    %546 = vmatprep.subr.bf16.mxu0 0
    %547 = vmatpush1.bf16.msra.mxu0 0
    %548 = vmatprep.subr.bf16.mxu0 0
    %549 = vmatpush1.bf16.msra.mxu0 0
    %550 = vmatprep.subr.bf16.mxu0 0
    %551 = vmatpush1.bf16.msra.mxu0 0
    %552 = vmatprep.subr.bf16.mxu0 0
    %553 = vmatpush1.bf16.msra.mxu0 0
    %554 = vmatprep.subr.bf16.mxu0 0
    %555 = vmatpush1.bf16.msra.mxu0 0
    %556 = vmatprep.subr.bf16.mxu0 0
    %557 = vmatpush1.bf16.msra.mxu0 0
    %558 = vmatprep.subr.bf16.mxu0 0
    %559 = vmatpush1.bf16.msra.mxu0 0
    %560 = vmatprep.subr.bf16.mxu0 0
    %561 = vmatpush1.bf16.msra.mxu0 0
    %562 = vmatprep.subr.bf16.mxu0 0
    %563 = vmatpush1.bf16.msra.mxu0 0
    %564 = vmatprep.mubr.bf16.mxu0 0
    %565 = vmatmul.mubr.bf16.gmra.mrb[0].mxu0 %v527
    %v566 = vpop.f32.mrb[0].mxu0
    %v567 = vadd.f32 0.0, %v566
    %v568 = vpop.f32.mrb[0].mxu0
    %v569 = vpop.f32.mrb[0].mxu0
    %v570 = vpop.f32.mrb[0].mxu0
    %571 = vdwg.mxu0
    %v573 = vsel %vm300, %v411, 0
    %v576 = vsel %vm367, %v296, 0
    %578 = vmatprep.subr.bf16.mxu0 0
    %579 = vmatpush1.bf16.msra.mxu0 %v576
    %580 = vmatprep.subr.bf16.mxu0 0
    %581 = vmatpush1.bf16.msra.mxu0 0
    %582 = vmatprep.subr.bf16.mxu0 0
    %583 = vmatpush1.bf16.msra.mxu0 0
    %584 = vmatprep.subr.bf16.mxu0 0
    %585 = vmatpush1.bf16.msra.mxu0 0
    %586 = vmatprep.subr.bf16.mxu0 0
    %587 = vmatpush1.bf16.msra.mxu0 0
    %588 = vmatprep.subr.bf16.mxu0 0
    %589 = vmatpush1.bf16.msra.mxu0 0
    %590 = vmatprep.subr.bf16.mxu0 0
    %591 = vmatpush1.bf16.msra.mxu0 0
    %592 = vmatprep.subr.bf16.mxu0 0
    %593 = vmatpush1.bf16.msra.mxu0 0
    %594 = vmatprep.subr.bf16.mxu0 0
    %595 = vmatpush1.bf16.msra.mxu0 0
    %596 = vmatprep.subr.bf16.mxu0 0
    %597 = vmatpush1.bf16.msra.mxu0 0
    %598 = vmatprep.subr.bf16.mxu0 0
    %599 = vmatpush1.bf16.msra.mxu0 0
    %600 = vmatprep.subr.bf16.mxu0 0
    %601 = vmatpush1.bf16.msra.mxu0 0
    %602 = vmatprep.subr.bf16.mxu0 0
    %603 = vmatpush1.bf16.msra.mxu0 0
    %604 = vmatprep.subr.bf16.mxu0 0
    %605 = vmatpush1.bf16.msra.mxu0 0
    %606 = vmatprep.subr.bf16.mxu0 0
    %607 = vmatpush1.bf16.msra.mxu0 0
    %608 = vmatprep.subr.bf16.mxu0 0
    %609 = vmatpush1.bf16.msra.mxu0 0
    %610 = vmatprep.mubr.bf16.mxu0 0
    %611 = vmatmul.mubr.bf16.gmra.mrb[0].mxu0 %v573
    %v612 = vpop.f32.mrb[0].mxu0
    %v613 = vadd.f32 %v567, %v612
    %v614 = vpop.f32.mrb[0].mxu0
    %v615 = vpop.f32.mrb[0].mxu0
    %v616 = vpop.f32.mrb[0].mxu0
    %617 = vdwg.mxu0
    %618 = vrot.lane.b32.xlu0 %v294, 112
    %v619 = vpop.permute.xlu0 %618
    %620 = vrot.lane.b32.xlu0 %v295, 112
    %v621 = vpop.permute.xlu0 %620
    %v623 = vsel %vm300, %v619, 0
    %v626 = vsel %vm300, %v621, 0
    %628 = vmatprep.subr.bf16.mxu0 0
    %629 = vmatpush1.bf16.xpose.msra.mxu0 %v626
    %630 = vmatprep.subr.bf16.mxu0 0
    %631 = vmatpush1.bf16.xpose.msra.mxu0 0
    %632 = vmatprep.subr.bf16.mxu0 0
    %633 = vmatpush1.bf16.xpose.msra.mxu0 0
    %634 = vmatprep.subr.bf16.mxu0 0
    %635 = vmatpush1.bf16.xpose.msra.mxu0 0
    %636 = vmatprep.subr.bf16.mxu0 0
    %637 = vmatpush1.bf16.xpose.msra.mxu0 0
    %638 = vmatprep.subr.bf16.mxu0 0
    %639 = vmatpush1.bf16.xpose.msra.mxu0 0
    %640 = vmatprep.subr.bf16.mxu0 0
    %641 = vmatpush1.bf16.xpose.msra.mxu0 0
    %642 = vmatprep.subr.bf16.mxu0 0
    %643 = vmatpush1.bf16.xpose.msra.mxu0 0
    %644 = vmatprep.subr.bf16.mxu0 0
    %645 = vmatpush1.bf16.xpose.msra.mxu0 0
    %646 = vmatprep.subr.bf16.mxu0 0
    %647 = vmatpush1.bf16.xpose.msra.mxu0 0
    %648 = vmatprep.subr.bf16.mxu0 0
    %649 = vmatpush1.bf16.xpose.msra.mxu0 0
    %650 = vmatprep.subr.bf16.mxu0 0
    %651 = vmatpush1.bf16.xpose.msra.mxu0 0
    %652 = vmatprep.subr.bf16.mxu0 0
    %653 = vmatpush1.bf16.xpose.msra.mxu0 0
    %654 = vmatprep.subr.bf16.mxu0 0
    %655 = vmatpush1.bf16.xpose.msra.mxu0 0
    %656 = vmatprep.subr.bf16.mxu0 0
    %657 = vmatpush1.bf16.xpose.msra.mxu0 0
    %658 = vmatprep.subr.bf16.mxu0 0
    %659 = vmatpush1.bf16.xpose.msra.mxu0 0
    %660 = vmatprep.mubr.bf16.mxu0 0
    %661 = vmatmul.mubr.bf16.gmra.mrb[0].mxu0 %v623
    %v662 = vpop.f32.mrb[0].mxu0
    %v663 = vadd.f32 0.0, %v662
    %v664 = vpop.f32.mrb[0].mxu0
    %v665 = vpop.f32.mrb[0].mxu0
    %v666 = vpop.f32.mrb[0].mxu0
    %667 = vdwg.mxu0
    %v668 = vmul.f32 %v663, 0.35355338
    %v669 = vsel %vm170, %v668, -1000000.0
    %v670 = vsel %vm300, %v669, -inf
    %671 = vmax.xlane.f32.xlu0 %v670
    %v672 = vpop.xlane.xlu0 %671
    %v673 = vsub.f32 %v669, %v672
    %v674 = vmul.f32 %v673, 1.442695
    %v675 = vpow.pop %v674
    %v676 = vsel %vm300, %v675, 0.0
    %677 = vadd.xlane.f32.xlu0 %v676
    %v678 = vpop.xlane.xlu0 %677
    %v679 = vrcp.pop %v678
    %v680 = vmul.f32 %v675, %v679
    %v681 = vpack.c.bf16 %v680, %v680
    %682 = vrot.lane.b32.xlu0 %v295, 80
    %v683 = vpop.permute.xlu0 %682
    %v685 = vsel %vm300, %v681, 0
    %v688 = vsel %vm367, %v683, 0
    %690 = vmatprep.subr.bf16.mxu0 0
    %691 = vmatpush1.bf16.msra.mxu0 %v688
    %692 = vmatprep.subr.bf16.mxu0 0
    %693 = vmatpush1.bf16.msra.mxu0 0
    %694 = vmatprep.subr.bf16.mxu0 0
    %695 = vmatpush1.bf16.msra.mxu0 0
    %696 = vmatprep.subr.bf16.mxu0 0
    %697 = vmatpush1.bf16.msra.mxu0 0
    %698 = vmatprep.subr.bf16.mxu0 0
    %699 = vmatpush1.bf16.msra.mxu0 0
    %700 = vmatprep.subr.bf16.mxu0 0
    %701 = vmatpush1.bf16.msra.mxu0 0
    %702 = vmatprep.subr.bf16.mxu0 0
    %703 = vmatpush1.bf16.msra.mxu0 0
    %704 = vmatprep.subr.bf16.mxu0 0
    %705 = vmatpush1.bf16.msra.mxu0 0
    %706 = vmatprep.subr.bf16.mxu0 0
    %707 = vmatpush1.bf16.msra.mxu0 0
    %708 = vmatprep.subr.bf16.mxu0 0
    %709 = vmatpush1.bf16.msra.mxu0 0
    %710 = vmatprep.subr.bf16.mxu0 0
    %711 = vmatpush1.bf16.msra.mxu0 0
    %712 = vmatprep.subr.bf16.mxu0 0
    %713 = vmatpush1.bf16.msra.mxu0 0
    %714 = vmatprep.subr.bf16.mxu0 0
    %715 = vmatpush1.bf16.msra.mxu0 0
    %716 = vmatprep.subr.bf16.mxu0 0
    %717 = vmatpush1.bf16.msra.mxu0 0
    %718 = vmatprep.subr.bf16.mxu0 0
    %719 = vmatpush1.bf16.msra.mxu0 0
    %720 = vmatprep.subr.bf16.mxu0 0
    %721 = vmatpush1.bf16.msra.mxu0 0
    %722 = vmatprep.mubr.bf16.mxu0 0
    %723 = vmatmul.mubr.bf16.gmra.mrb[0].mxu0 %v685
    %v724 = vpop.f32.mrb[0].mxu0
    %v725 = vadd.f32 0.0, %v724
    %v726 = vpop.f32.mrb[0].mxu0
    %v727 = vpop.f32.mrb[0].mxu0
    %v728 = vpop.f32.mrb[0].mxu0
    %729 = vdwg.mxu0
    %v730 = vpack.c.bf16 %v725, %v725
    %v732 = vsel %vm300, %v730, 0
    %v735 = vsel %vm367, %v298, 0
    %737 = vmatprep.subr.bf16.mxu0 0
    %738 = vmatpush1.bf16.msra.mxu0 %v735
    %739 = vmatprep.subr.bf16.mxu0 0
    %740 = vmatpush1.bf16.msra.mxu0 0
    %741 = vmatprep.subr.bf16.mxu0 0
    %742 = vmatpush1.bf16.msra.mxu0 0
    %743 = vmatprep.subr.bf16.mxu0 0
    %744 = vmatpush1.bf16.msra.mxu0 0
    %745 = vmatprep.subr.bf16.mxu0 0
    %746 = vmatpush1.bf16.msra.mxu0 0
    %747 = vmatprep.subr.bf16.mxu0 0
    %748 = vmatpush1.bf16.msra.mxu0 0
    %749 = vmatprep.subr.bf16.mxu0 0
    %750 = vmatpush1.bf16.msra.mxu0 0
    %751 = vmatprep.subr.bf16.mxu0 0
    %752 = vmatpush1.bf16.msra.mxu0 0
    %753 = vmatprep.subr.bf16.mxu0 0
    %754 = vmatpush1.bf16.msra.mxu0 0
    %755 = vmatprep.subr.bf16.mxu0 0
    %756 = vmatpush1.bf16.msra.mxu0 0
    %757 = vmatprep.subr.bf16.mxu0 0
    %758 = vmatpush1.bf16.msra.mxu0 0
    %759 = vmatprep.subr.bf16.mxu0 0
    %760 = vmatpush1.bf16.msra.mxu0 0
    %761 = vmatprep.subr.bf16.mxu0 0
    %762 = vmatpush1.bf16.msra.mxu0 0
    %763 = vmatprep.subr.bf16.mxu0 0
    %764 = vmatpush1.bf16.msra.mxu0 0
    %765 = vmatprep.subr.bf16.mxu0 0
    %766 = vmatpush1.bf16.msra.mxu0 0
    %767 = vmatprep.subr.bf16.mxu0 0
    %768 = vmatpush1.bf16.msra.mxu0 0
    %769 = vmatprep.mubr.bf16.mxu0 0
    %770 = vmatmul.mubr.bf16.gmra.mrb[0].mxu0 %v732
    %v771 = vpop.f32.mrb[0].mxu0
    %v772 = vadd.f32 0.0, %v771
    %v773 = vpop.f32.mrb[0].mxu0
    %v774 = vpop.f32.mrb[0].mxu0
    %v775 = vpop.f32.mrb[0].mxu0
    %776 = vdwg.mxu0
    %v777 = vadd.f32 %v613, %v772
    %778 = vrot.lane.b32.xlu0 %v294, 104
    %v779 = vpop.permute.xlu0 %778
    %780 = vrot.lane.b32.xlu0 %v295, 104
    %v781 = vpop.permute.xlu0 %780
    %v783 = vsel %vm300, %v779, 0
    %v786 = vsel %vm300, %v781, 0
    %788 = vmatprep.subr.bf16.mxu0 0
    %789 = vmatpush1.bf16.xpose.msra.mxu0 %v786
    %790 = vmatprep.subr.bf16.mxu0 0
    %791 = vmatpush1.bf16.xpose.msra.mxu0 0
    %792 = vmatprep.subr.bf16.mxu0 0
    %793 = vmatpush1.bf16.xpose.msra.mxu0 0
    %794 = vmatprep.subr.bf16.mxu0 0
    %795 = vmatpush1.bf16.xpose.msra.mxu0 0
    %796 = vmatprep.subr.bf16.mxu0 0
    %797 = vmatpush1.bf16.xpose.msra.mxu0 0
    %798 = vmatprep.subr.bf16.mxu0 0
    %799 = vmatpush1.bf16.xpose.msra.mxu0 0
    %800 = vmatprep.subr.bf16.mxu0 0
    %801 = vmatpush1.bf16.xpose.msra.mxu0 0
    %802 = vmatprep.subr.bf16.mxu0 0
    %803 = vmatpush1.bf16.xpose.msra.mxu0 0
    %804 = vmatprep.subr.bf16.mxu0 0
    %805 = vmatpush1.bf16.xpose.msra.mxu0 0
    %806 = vmatprep.subr.bf16.mxu0 0
    %807 = vmatpush1.bf16.xpose.msra.mxu0 0
    %808 = vmatprep.subr.bf16.mxu0 0
    %809 = vmatpush1.bf16.xpose.msra.mxu0 0
    %810 = vmatprep.subr.bf16.mxu0 0
    %811 = vmatpush1.bf16.xpose.msra.mxu0 0
    %812 = vmatprep.subr.bf16.mxu0 0
    %813 = vmatpush1.bf16.xpose.msra.mxu0 0
    %814 = vmatprep.subr.bf16.mxu0 0
    %815 = vmatpush1.bf16.xpose.msra.mxu0 0
    %816 = vmatprep.subr.bf16.mxu0 0
    %817 = vmatpush1.bf16.xpose.msra.mxu0 0
    %818 = vmatprep.subr.bf16.mxu0 0
    %819 = vmatpush1.bf16.xpose.msra.mxu0 0
    %820 = vmatprep.mubr.bf16.mxu0 0
    %821 = vmatmul.mubr.bf16.gmra.mrb[0].mxu0 %v783
    %v822 = vpop.f32.mrb[0].mxu0
    %v823 = vadd.f32 0.0, %v822
    %v824 = vpop.f32.mrb[0].mxu0
    %v825 = vpop.f32.mrb[0].mxu0
    %v826 = vpop.f32.mrb[0].mxu0
    %827 = vdwg.mxu0
    %v828 = vmul.f32 %v823, 0.35355338
    %v829 = vsel %vm170, %v828, -1000000.0
    %v830 = vsel %vm300, %v829, -inf
    %831 = vmax.xlane.f32.xlu0 %v830
    %v832 = vpop.xlane.xlu0 %831
    %v833 = vsub.f32 %v829, %v832
    %v834 = vmul.f32 %v833, 1.442695
    %v835 = vpow.pop %v834
    %v836 = vsel %vm300, %v835, 0.0
    %837 = vadd.xlane.f32.xlu0 %v836
    %v838 = vpop.xlane.xlu0 %837
    %v839 = vrcp.pop %v838
    %v840 = vmul.f32 %v835, %v839
    %v841 = vpack.c.bf16 %v840, %v840
    %842 = vrot.lane.b32.xlu0 %v295, 72
    %v843 = vpop.permute.xlu0 %842
    %v845 = vsel %vm300, %v841, 0
    %v848 = vsel %vm367, %v843, 0
    %850 = vmatprep.subr.bf16.mxu0 0
    %851 = vmatpush1.bf16.msra.mxu0 %v848
    %852 = vmatprep.subr.bf16.mxu0 0
    %853 = vmatpush1.bf16.msra.mxu0 0
    %854 = vmatprep.subr.bf16.mxu0 0
    %855 = vmatpush1.bf16.msra.mxu0 0
    %856 = vmatprep.subr.bf16.mxu0 0
    %857 = vmatpush1.bf16.msra.mxu0 0
    %858 = vmatprep.subr.bf16.mxu0 0
    %859 = vmatpush1.bf16.msra.mxu0 0
    %860 = vmatprep.subr.bf16.mxu0 0
    %861 = vmatpush1.bf16.msra.mxu0 0
    %862 = vmatprep.subr.bf16.mxu0 0
    %863 = vmatpush1.bf16.msra.mxu0 0
    %864 = vmatprep.subr.bf16.mxu0 0
    %865 = vmatpush1.bf16.msra.mxu0 0
    %866 = vmatprep.subr.bf16.mxu0 0
    %867 = vmatpush1.bf16.msra.mxu0 0
    %868 = vmatprep.subr.bf16.mxu0 0
    %869 = vmatpush1.bf16.msra.mxu0 0
    %870 = vmatprep.subr.bf16.mxu0 0
    %871 = vmatpush1.bf16.msra.mxu0 0
    %872 = vmatprep.subr.bf16.mxu0 0
    %873 = vmatpush1.bf16.msra.mxu0 0
    %874 = vmatprep.subr.bf16.mxu0 0
    %875 = vmatpush1.bf16.msra.mxu0 0
    %876 = vmatprep.subr.bf16.mxu0 0
    %877 = vmatpush1.bf16.msra.mxu0 0
    %878 = vmatprep.subr.bf16.mxu0 0
    %879 = vmatpush1.bf16.msra.mxu0 0
    %880 = vmatprep.subr.bf16.mxu0 0
    %881 = vmatpush1.bf16.msra.mxu0 0
    %882 = vmatprep.mubr.bf16.mxu0 0
    %883 = vmatmul.mubr.bf16.gmra.mrb[0].mxu0 %v845
    %v884 = vpop.f32.mrb[0].mxu0
    %v885 = vadd.f32 0.0, %v884
    %v886 = vpop.f32.mrb[0].mxu0
    %v887 = vpop.f32.mrb[0].mxu0
    %v888 = vpop.f32.mrb[0].mxu0
    %889 = vdwg.mxu0
    %v890 = vpack.c.bf16 %v885, %v885
    %v892 = vsel %vm300, %v890, 0
    %v895 = vsel %vm367, %v299, 0
    %897 = vmatprep.subr.bf16.mxu0 0
    %898 = vmatpush1.bf16.msra.mxu0 %v895
    %899 = vmatprep.subr.bf16.mxu0 0
    %900 = vmatpush1.bf16.msra.mxu0 0
    %901 = vmatprep.subr.bf16.mxu0 0
    %902 = vmatpush1.bf16.msra.mxu0 0
    %903 = vmatprep.subr.bf16.mxu0 0
    %904 = vmatpush1.bf16.msra.mxu0 0
    %905 = vmatprep.subr.bf16.mxu0 0
    %906 = vmatpush1.bf16.msra.mxu0 0
    %907 = vmatprep.subr.bf16.mxu0 0
    %908 = vmatpush1.bf16.msra.mxu0 0
    %909 = vmatprep.subr.bf16.mxu0 0
    %910 = vmatpush1.bf16.msra.mxu0 0
    %911 = vmatprep.subr.bf16.mxu0 0
    %912 = vmatpush1.bf16.msra.mxu0 0
    %913 = vmatprep.subr.bf16.mxu0 0
    %914 = vmatpush1.bf16.msra.mxu0 0
    %915 = vmatprep.subr.bf16.mxu0 0
    %916 = vmatpush1.bf16.msra.mxu0 0
    %917 = vmatprep.subr.bf16.mxu0 0
    %918 = vmatpush1.bf16.msra.mxu0 0
    %919 = vmatprep.subr.bf16.mxu0 0
    %920 = vmatpush1.bf16.msra.mxu0 0
    %921 = vmatprep.subr.bf16.mxu0 0
    %922 = vmatpush1.bf16.msra.mxu0 0
    %923 = vmatprep.subr.bf16.mxu0 0
    %924 = vmatpush1.bf16.msra.mxu0 0
    %925 = vmatprep.subr.bf16.mxu0 0
    %926 = vmatpush1.bf16.msra.mxu0 0
    %927 = vmatprep.subr.bf16.mxu0 0
    %928 = vmatpush1.bf16.msra.mxu0 0
    %929 = vmatprep.mubr.bf16.mxu0 0
    %930 = vmatmul.mubr.bf16.gmra.mrb[0].mxu0 %v892
    %v931 = vpop.f32.mrb[0].mxu0
    %v932 = vadd.f32 0.0, %v931
    %v933 = vpop.f32.mrb[0].mxu0
    %v934 = vpop.f32.mrb[0].mxu0
    %v935 = vpop.f32.mrb[0].mxu0
    %936 = vdwg.mxu0
    %v937 = vadd.f32 %v777, %v932
    %v938 = vrot.slane %v294, 4
    %v939 = vrot.slane %v295, 4
    %v941 = vsel %vm300, %v938, 0
    %v944 = vsel %vm300, %v939, 0
    %946 = vmatprep.subr.bf16.mxu0 0
    %947 = vmatpush1.bf16.xpose.msra.mxu0 %v944
    %948 = vmatprep.subr.bf16.mxu0 0
    %949 = vmatpush1.bf16.xpose.msra.mxu0 0
    %950 = vmatprep.subr.bf16.mxu0 0
    %951 = vmatpush1.bf16.xpose.msra.mxu0 0
    %952 = vmatprep.subr.bf16.mxu0 0
    %953 = vmatpush1.bf16.xpose.msra.mxu0 0
    %954 = vmatprep.subr.bf16.mxu0 0
    %955 = vmatpush1.bf16.xpose.msra.mxu0 0
    %956 = vmatprep.subr.bf16.mxu0 0
    %957 = vmatpush1.bf16.xpose.msra.mxu0 0
    %958 = vmatprep.subr.bf16.mxu0 0
    %959 = vmatpush1.bf16.xpose.msra.mxu0 0
    %960 = vmatprep.subr.bf16.mxu0 0
    %961 = vmatpush1.bf16.xpose.msra.mxu0 0
    %962 = vmatprep.subr.bf16.mxu0 0
    %963 = vmatpush1.bf16.xpose.msra.mxu0 0
    %964 = vmatprep.subr.bf16.mxu0 0
    %965 = vmatpush1.bf16.xpose.msra.mxu0 0
    %966 = vmatprep.subr.bf16.mxu0 0
    %967 = vmatpush1.bf16.xpose.msra.mxu0 0
    %968 = vmatprep.subr.bf16.mxu0 0
    %969 = vmatpush1.bf16.xpose.msra.mxu0 0
    %970 = vmatprep.subr.bf16.mxu0 0
    %971 = vmatpush1.bf16.xpose.msra.mxu0 0
    %972 = vmatprep.subr.bf16.mxu0 0
    %973 = vmatpush1.bf16.xpose.msra.mxu0 0
    %974 = vmatprep.subr.bf16.mxu0 0
    %975 = vmatpush1.bf16.xpose.msra.mxu0 0
    %976 = vmatprep.subr.bf16.mxu0 0
    %977 = vmatpush1.bf16.xpose.msra.mxu0 0
    %978 = vmatprep.mubr.bf16.mxu0 0
    %979 = vmatmul.mubr.bf16.gmra.mrb[0].mxu0 %v941
    %v980 = vpop.f32.mrb[0].mxu0
    %v981 = vadd.f32 0.0, %v980
    %v982 = vpop.f32.mrb[0].mxu0
    %v983 = vpop.f32.mrb[0].mxu0
    %v984 = vpop.f32.mrb[0].mxu0
    %985 = vdwg.mxu0
    %v986 = vmul.f32 %v981, 0.35355338
    %v987 = vsel %vm170, %v986, -1000000.0
    %v988 = vsel %vm300, %v987, -inf
    %989 = vmax.xlane.f32.xlu0 %v988
    %v990 = vpop.xlane.xlu0 %989
    %v991 = vsub.f32 %v987, %v990
    %v992 = vmul.f32 %v991, 1.442695
    %v993 = vpow.pop %v992
    %v994 = vsel %vm300, %v993, 0.0
    %995 = vadd.xlane.f32.xlu0 %v994
    %v996 = vpop.xlane.xlu0 %995
    %v997 = vrcp.pop %v996
    %v998 = vmul.f32 %v993, %v997
    %v999 = vpack.c.bf16 %v998, %v998
    %1000 = vrot.lane.b32.xlu0 %v939, 96
    %v1001 = vpop.permute.xlu0 %1000
    %v1003 = vsel %vm300, %v999, 0
    %v1006 = vsel %vm367, %v1001, 0
    %1008 = vmatprep.subr.bf16.mxu0 0
    %1009 = vmatpush1.bf16.msra.mxu0 %v1006
    %1010 = vmatprep.subr.bf16.mxu0 0
    %1011 = vmatpush1.bf16.msra.mxu0 0
    %1012 = vmatprep.subr.bf16.mxu0 0
    %1013 = vmatpush1.bf16.msra.mxu0 0
    %1014 = vmatprep.subr.bf16.mxu0 0
    %1015 = vmatpush1.bf16.msra.mxu0 0
    %1016 = vmatprep.subr.bf16.mxu0 0
    %1017 = vmatpush1.bf16.msra.mxu0 0
    %1018 = vmatprep.subr.bf16.mxu0 0
    %1019 = vmatpush1.bf16.msra.mxu0 0
    %1020 = vmatprep.subr.bf16.mxu0 0
    %1021 = vmatpush1.bf16.msra.mxu0 0
    %1022 = vmatprep.subr.bf16.mxu0 0
    %1023 = vmatpush1.bf16.msra.mxu0 0
    %1024 = vmatprep.subr.bf16.mxu0 0
    %1025 = vmatpush1.bf16.msra.mxu0 0
    %1026 = vmatprep.subr.bf16.mxu0 0
    %1027 = vmatpush1.bf16.msra.mxu0 0
    %1028 = vmatprep.subr.bf16.mxu0 0
    %1029 = vmatpush1.bf16.msra.mxu0 0
    %1030 = vmatprep.subr.bf16.mxu0 0
    %1031 = vmatpush1.bf16.msra.mxu0 0
    %1032 = vmatprep.subr.bf16.mxu0 0
    %1033 = vmatpush1.bf16.msra.mxu0 0
    %1034 = vmatprep.subr.bf16.mxu0 0
    %1035 = vmatpush1.bf16.msra.mxu0 0
    %1036 = vmatprep.subr.bf16.mxu0 0
    %1037 = vmatpush1.bf16.msra.mxu0 0
    %1038 = vmatprep.subr.bf16.mxu0 0
    %1039 = vmatpush1.bf16.msra.mxu0 0
    %1040 = vmatprep.mubr.bf16.mxu0 0
    %1041 = vmatmul.mubr.bf16.gmra.mrb[0].mxu0 %v1003
    %v1042 = vpop.f32.mrb[0].mxu0
    %v1043 = vadd.f32 0.0, %v1042
    %v1044 = vpop.f32.mrb[0].mxu0
    %v1045 = vpop.f32.mrb[0].mxu0
    %v1046 = vpop.f32.mrb[0].mxu0
    %1047 = vdwg.mxu0
    %v1048 = vpack.c.bf16 %v1043, %v1043
    %1049 = vrot.lane.b32.xlu0 %v938, 120
    %v1050 = vpop.permute.xlu0 %1049
    %1051 = vrot.lane.b32.xlu0 %v939, 120
    %v1052 = vpop.permute.xlu0 %1051
    %v1054 = vsel %vm300, %v1050, 0
    %v1057 = vsel %vm300, %v1052, 0
    %1059 = vmatprep.subr.bf16.mxu0 0
    %1060 = vmatpush1.bf16.xpose.msra.mxu0 %v1057
    %1061 = vmatprep.subr.bf16.mxu0 0
    %1062 = vmatpush1.bf16.xpose.msra.mxu0 0
    %1063 = vmatprep.subr.bf16.mxu0 0
    %1064 = vmatpush1.bf16.xpose.msra.mxu0 0
    %1065 = vmatprep.subr.bf16.mxu0 0
    %1066 = vmatpush1.bf16.xpose.msra.mxu0 0
    %1067 = vmatprep.subr.bf16.mxu0 0
    %1068 = vmatpush1.bf16.xpose.msra.mxu0 0
    %1069 = vmatprep.subr.bf16.mxu0 0
    %1070 = vmatpush1.bf16.xpose.msra.mxu0 0
    %1071 = vmatprep.subr.bf16.mxu0 0
    %1072 = vmatpush1.bf16.xpose.msra.mxu0 0
    %1073 = vmatprep.subr.bf16.mxu0 0
    %1074 = vmatpush1.bf16.xpose.msra.mxu0 0
    %1075 = vmatprep.subr.bf16.mxu0 0
    %1076 = vmatpush1.bf16.xpose.msra.mxu0 0
    %1077 = vmatprep.subr.bf16.mxu0 0
    %1078 = vmatpush1.bf16.xpose.msra.mxu0 0
    %1079 = vmatprep.subr.bf16.mxu0 0
    %1080 = vmatpush1.bf16.xpose.msra.mxu0 0
    %1081 = vmatprep.subr.bf16.mxu0 0
    %1082 = vmatpush1.bf16.xpose.msra.mxu0 0
    %1083 = vmatprep.subr.bf16.mxu0 0
    %1084 = vmatpush1.bf16.xpose.msra.mxu0 0
    %1085 = vmatprep.subr.bf16.mxu0 0
    %1086 = vmatpush1.bf16.xpose.msra.mxu0 0
    %1087 = vmatprep.subr.bf16.mxu0 0
    %1088 = vmatpush1.bf16.xpose.msra.mxu0 0
    %1089 = vmatprep.subr.bf16.mxu0 0
    %1090 = vmatpush1.bf16.xpose.msra.mxu0 0
    %1091 = vmatprep.mubr.bf16.mxu0 0
    %1092 = vmatmul.mubr.bf16.gmra.mrb[0].mxu0 %v1054
    %v1093 = vpop.f32.mrb[0].mxu0
    %v1094 = vadd.f32 0.0, %v1093
    %v1095 = vpop.f32.mrb[0].mxu0
    %v1096 = vpop.f32.mrb[0].mxu0
    %v1097 = vpop.f32.mrb[0].mxu0
    %1098 = vdwg.mxu0
    %v1099 = vmul.f32 %v1094, 0.35355338
    %v1100 = vsel %vm170, %v1099, -1000000.0
    %v1101 = vsel %vm300, %v1100, -inf
    %1102 = vmax.xlane.f32.xlu0 %v1101
    %v1103 = vpop.xlane.xlu0 %1102
    %v1104 = vsub.f32 %v1100, %v1103
    %v1105 = vmul.f32 %v1104, 1.442695
    %v1106 = vpow.pop %v1105
    %v1107 = vsel %vm300, %v1106, 0.0
    %1108 = vadd.xlane.f32.xlu0 %v1107
    %v1109 = vpop.xlane.xlu0 %1108
    %v1110 = vrcp.pop %v1109
    %v1111 = vmul.f32 %v1106, %v1110
    %v1112 = vpack.c.bf16 %v1111, %v1111
    %1113 = vrot.lane.b32.xlu0 %v939, 88
    %v1114 = vpop.permute.xlu0 %1113
    %v1116 = vsel %vm300, %v1112, 0
    %v1119 = vsel %vm367, %v1114, 0
    %1121 = vmatprep.subr.bf16.mxu0 0
    %1122 = vmatpush1.bf16.msra.mxu0 %v1119
    %1123 = vmatprep.subr.bf16.mxu0 0
    %1124 = vmatpush1.bf16.msra.mxu0 0
    %1125 = vmatprep.subr.bf16.mxu0 0
    %1126 = vmatpush1.bf16.msra.mxu0 0
    %1127 = vmatprep.subr.bf16.mxu0 0
    %1128 = vmatpush1.bf16.msra.mxu0 0
    %1129 = vmatprep.subr.bf16.mxu0 0
    %1130 = vmatpush1.bf16.msra.mxu0 0
    %1131 = vmatprep.subr.bf16.mxu0 0
    %1132 = vmatpush1.bf16.msra.mxu0 0
    %1133 = vmatprep.subr.bf16.mxu0 0
    %1134 = vmatpush1.bf16.msra.mxu0 0
    %1135 = vmatprep.subr.bf16.mxu0 0
    %1136 = vmatpush1.bf16.msra.mxu0 0
    %1137 = vmatprep.subr.bf16.mxu0 0
    %1138 = vmatpush1.bf16.msra.mxu0 0
    %1139 = vmatprep.subr.bf16.mxu0 0
    %1140 = vmatpush1.bf16.msra.mxu0 0
    %1141 = vmatprep.subr.bf16.mxu0 0
    %1142 = vmatpush1.bf16.msra.mxu0 0
    %1143 = vmatprep.subr.bf16.mxu0 0
    %1144 = vmatpush1.bf16.msra.mxu0 0
    %1145 = vmatprep.subr.bf16.mxu0 0
    %1146 = vmatpush1.bf16.msra.mxu0 0
    %1147 = vmatprep.subr.bf16.mxu0 0
    %1148 = vmatpush1.bf16.msra.mxu0 0
    %1149 = vmatprep.subr.bf16.mxu0 0
    %1150 = vmatpush1.bf16.msra.mxu0 0
    %1151 = vmatprep.subr.bf16.mxu0 0
    %1152 = vmatpush1.bf16.msra.mxu0 0
    %1153 = vmatprep.mubr.bf16.mxu0 0
    %1154 = vmatmul.mubr.bf16.gmra.mrb[0].mxu0 %v1116
    %v1155 = vpop.f32.mrb[0].mxu0
    %v1156 = vadd.f32 0.0, %v1155
    %v1157 = vpop.f32.mrb[0].mxu0
    %v1158 = vpop.f32.mrb[0].mxu0
    %v1159 = vpop.f32.mrb[0].mxu0
    %1160 = vdwg.mxu0
    %v1161 = vpack.c.bf16 %v1156, %v1156
    %v1163 = vsel %vm300, %v1161, 0
    %1165 = vmatprep.subr.bf16.mxu0 0
    %1166 = vmatpush1.bf16.msra.mxu0 %v530
    %1167 = vmatprep.subr.bf16.mxu0 0
    %1168 = vmatpush1.bf16.msra.mxu0 0
    %1169 = vmatprep.subr.bf16.mxu0 0
    %1170 = vmatpush1.bf16.msra.mxu0 0
    %1171 = vmatprep.subr.bf16.mxu0 0
    %1172 = vmatpush1.bf16.msra.mxu0 0
    %1173 = vmatprep.subr.bf16.mxu0 0
    %1174 = vmatpush1.bf16.msra.mxu0 0
    %1175 = vmatprep.subr.bf16.mxu0 0
    %1176 = vmatpush1.bf16.msra.mxu0 0
    %1177 = vmatprep.subr.bf16.mxu0 0
    %1178 = vmatpush1.bf16.msra.mxu0 0
    %1179 = vmatprep.subr.bf16.mxu0 0
    %1180 = vmatpush1.bf16.msra.mxu0 0
    %1181 = vmatprep.subr.bf16.mxu0 0
    %1182 = vmatpush1.bf16.msra.mxu0 0
    %1183 = vmatprep.subr.bf16.mxu0 0
    %1184 = vmatpush1.bf16.msra.mxu0 0
    %1185 = vmatprep.subr.bf16.mxu0 0
    %1186 = vmatpush1.bf16.msra.mxu0 0
    %1187 = vmatprep.subr.bf16.mxu0 0
    %1188 = vmatpush1.bf16.msra.mxu0 0
    %1189 = vmatprep.subr.bf16.mxu0 0
    %1190 = vmatpush1.bf16.msra.mxu0 0
    %1191 = vmatprep.subr.bf16.mxu0 0
    %1192 = vmatpush1.bf16.msra.mxu0 0
    %1193 = vmatprep.subr.bf16.mxu0 0
    %1194 = vmatpush1.bf16.msra.mxu0 0
    %1195 = vmatprep.subr.bf16.mxu0 0
    %1196 = vmatpush1.bf16.msra.mxu0 0
    %1197 = vmatprep.mubr.bf16.mxu0 0
    %1198 = vmatmul.mubr.bf16.gmra.mrb[0].mxu0 %v1163
    %v1199 = vpop.f32.mrb[0].mxu0
    %v1200 = vadd.f32 0.0, %v1199
    %v1201 = vpop.f32.mrb[0].mxu0
    %v1202 = vpop.f32.mrb[0].mxu0
    %v1203 = vpop.f32.mrb[0].mxu0
    %1204 = vdwg.mxu0
    %v1206 = vsel %vm300, %v1048, 0
    %1208 = vmatprep.subr.bf16.mxu0 0
    %1209 = vmatpush1.bf16.msra.mxu0 %v576
    %1210 = vmatprep.subr.bf16.mxu0 0
    %1211 = vmatpush1.bf16.msra.mxu0 0
    %1212 = vmatprep.subr.bf16.mxu0 0
    %1213 = vmatpush1.bf16.msra.mxu0 0
    %1214 = vmatprep.subr.bf16.mxu0 0
    %1215 = vmatpush1.bf16.msra.mxu0 0
    %1216 = vmatprep.subr.bf16.mxu0 0
    %1217 = vmatpush1.bf16.msra.mxu0 0
    %1218 = vmatprep.subr.bf16.mxu0 0
    %1219 = vmatpush1.bf16.msra.mxu0 0
    %1220 = vmatprep.subr.bf16.mxu0 0
    %1221 = vmatpush1.bf16.msra.mxu0 0
    %1222 = vmatprep.subr.bf16.mxu0 0
    %1223 = vmatpush1.bf16.msra.mxu0 0
    %1224 = vmatprep.subr.bf16.mxu0 0
    %1225 = vmatpush1.bf16.msra.mxu0 0
    %1226 = vmatprep.subr.bf16.mxu0 0
    %1227 = vmatpush1.bf16.msra.mxu0 0
    %1228 = vmatprep.subr.bf16.mxu0 0
    %1229 = vmatpush1.bf16.msra.mxu0 0
    %1230 = vmatprep.subr.bf16.mxu0 0
    %1231 = vmatpush1.bf16.msra.mxu0 0
    %1232 = vmatprep.subr.bf16.mxu0 0
    %1233 = vmatpush1.bf16.msra.mxu0 0
    %1234 = vmatprep.subr.bf16.mxu0 0
    %1235 = vmatpush1.bf16.msra.mxu0 0
    %1236 = vmatprep.subr.bf16.mxu0 0
    %1237 = vmatpush1.bf16.msra.mxu0 0
    %1238 = vmatprep.subr.bf16.mxu0 0
    %1239 = vmatpush1.bf16.msra.mxu0 0
    %1240 = vmatprep.mubr.bf16.mxu0 0
    %1241 = vmatmul.mubr.bf16.gmra.mrb[0].mxu0 %v1206
    %v1242 = vpop.f32.mrb[0].mxu0
    %v1243 = vadd.f32 %v1200, %v1242
    %v1244 = vpop.f32.mrb[0].mxu0
    %v1245 = vpop.f32.mrb[0].mxu0
    %v1246 = vpop.f32.mrb[0].mxu0
    %1247 = vdwg.mxu0
    %1248 = vrot.lane.b32.xlu0 %v938, 112
    %v1249 = vpop.permute.xlu0 %1248
    %1250 = vrot.lane.b32.xlu0 %v939, 112
    %v1251 = vpop.permute.xlu0 %1250
    %v1253 = vsel %vm300, %v1249, 0
    %v1256 = vsel %vm300, %v1251, 0
    %1258 = vmatprep.subr.bf16.mxu0 0
    %1259 = vmatpush1.bf16.xpose.msra.mxu0 %v1256
    %1260 = vmatprep.subr.bf16.mxu0 0
    %1261 = vmatpush1.bf16.xpose.msra.mxu0 0
    %1262 = vmatprep.subr.bf16.mxu0 0
    %1263 = vmatpush1.bf16.xpose.msra.mxu0 0
    %1264 = vmatprep.subr.bf16.mxu0 0
    %1265 = vmatpush1.bf16.xpose.msra.mxu0 0
    %1266 = vmatprep.subr.bf16.mxu0 0
    %1267 = vmatpush1.bf16.xpose.msra.mxu0 0
    %1268 = vmatprep.subr.bf16.mxu0 0
    %1269 = vmatpush1.bf16.xpose.msra.mxu0 0
    %1270 = vmatprep.subr.bf16.mxu0 0
    %1271 = vmatpush1.bf16.xpose.msra.mxu0 0
    %1272 = vmatprep.subr.bf16.mxu0 0
    %1273 = vmatpush1.bf16.xpose.msra.mxu0 0
    %1274 = vmatprep.subr.bf16.mxu0 0
    %1275 = vmatpush1.bf16.xpose.msra.mxu0 0
    %1276 = vmatprep.subr.bf16.mxu0 0
    %1277 = vmatpush1.bf16.xpose.msra.mxu0 0
    %1278 = vmatprep.subr.bf16.mxu0 0
    %1279 = vmatpush1.bf16.xpose.msra.mxu0 0
    %1280 = vmatprep.subr.bf16.mxu0 0
    %1281 = vmatpush1.bf16.xpose.msra.mxu0 0
    %1282 = vmatprep.subr.bf16.mxu0 0
    %1283 = vmatpush1.bf16.xpose.msra.mxu0 0
    %1284 = vmatprep.subr.bf16.mxu0 0
    %1285 = vmatpush1.bf16.xpose.msra.mxu0 0
    %1286 = vmatprep.subr.bf16.mxu0 0
    %1287 = vmatpush1.bf16.xpose.msra.mxu0 0
    %1288 = vmatprep.subr.bf16.mxu0 0
    %1289 = vmatpush1.bf16.xpose.msra.mxu0 0
    %1290 = vmatprep.mubr.bf16.mxu0 0
    %1291 = vmatmul.mubr.bf16.gmra.mrb[0].mxu0 %v1253
    %v1292 = vpop.f32.mrb[0].mxu0
    %v1293 = vadd.f32 0.0, %v1292
    %v1294 = vpop.f32.mrb[0].mxu0
    %v1295 = vpop.f32.mrb[0].mxu0
    %v1296 = vpop.f32.mrb[0].mxu0
    %1297 = vdwg.mxu0
    %v1298 = vmul.f32 %v1293, 0.35355338
    %v1299 = vsel %vm170, %v1298, -1000000.0
    %v1300 = vsel %vm300, %v1299, -inf
    %1301 = vmax.xlane.f32.xlu0 %v1300
    %v1302 = vpop.xlane.xlu0 %1301
    %v1303 = vsub.f32 %v1299, %v1302
    %v1304 = vmul.f32 %v1303, 1.442695
    %v1305 = vpow.pop %v1304
    %v1306 = vsel %vm300, %v1305, 0.0
    %1307 = vadd.xlane.f32.xlu0 %v1306
    %v1308 = vpop.xlane.xlu0 %1307
    %v1309 = vrcp.pop %v1308
    %v1310 = vmul.f32 %v1305, %v1309
    %v1311 = vpack.c.bf16 %v1310, %v1310
    %1312 = vrot.lane.b32.xlu0 %v939, 80
    %v1313 = vpop.permute.xlu0 %1312
    %v1315 = vsel %vm300, %v1311, 0
    %v1318 = vsel %vm367, %v1313, 0
    %1320 = vmatprep.subr.bf16.mxu0 0
    %1321 = vmatpush1.bf16.msra.mxu0 %v1318
    %1322 = vmatprep.subr.bf16.mxu0 0
    %1323 = vmatpush1.bf16.msra.mxu0 0
    %1324 = vmatprep.subr.bf16.mxu0 0
    %1325 = vmatpush1.bf16.msra.mxu0 0
    %1326 = vmatprep.subr.bf16.mxu0 0
    %1327 = vmatpush1.bf16.msra.mxu0 0
    %1328 = vmatprep.subr.bf16.mxu0 0
    %1329 = vmatpush1.bf16.msra.mxu0 0
    %1330 = vmatprep.subr.bf16.mxu0 0
    %1331 = vmatpush1.bf16.msra.mxu0 0
    %1332 = vmatprep.subr.bf16.mxu0 0
    %1333 = vmatpush1.bf16.msra.mxu0 0
    %1334 = vmatprep.subr.bf16.mxu0 0
    %1335 = vmatpush1.bf16.msra.mxu0 0
    %1336 = vmatprep.subr.bf16.mxu0 0
    %1337 = vmatpush1.bf16.msra.mxu0 0
    %1338 = vmatprep.subr.bf16.mxu0 0
    %1339 = vmatpush1.bf16.msra.mxu0 0
    %1340 = vmatprep.subr.bf16.mxu0 0
    %1341 = vmatpush1.bf16.msra.mxu0 0
    %1342 = vmatprep.subr.bf16.mxu0 0
    %1343 = vmatpush1.bf16.msra.mxu0 0
    %1344 = vmatprep.subr.bf16.mxu0 0
    %1345 = vmatpush1.bf16.msra.mxu0 0
    %1346 = vmatprep.subr.bf16.mxu0 0
    %1347 = vmatpush1.bf16.msra.mxu0 0
    %1348 = vmatprep.subr.bf16.mxu0 0
    %1349 = vmatpush1.bf16.msra.mxu0 0
    %1350 = vmatprep.subr.bf16.mxu0 0
    %1351 = vmatpush1.bf16.msra.mxu0 0
    %1352 = vmatprep.mubr.bf16.mxu0 0
    %1353 = vmatmul.mubr.bf16.gmra.mrb[0].mxu0 %v1315
    %v1354 = vpop.f32.mrb[0].mxu0
    %v1355 = vadd.f32 0.0, %v1354
    %v1356 = vpop.f32.mrb[0].mxu0
    %v1357 = vpop.f32.mrb[0].mxu0
    %v1358 = vpop.f32.mrb[0].mxu0
    %1359 = vdwg.mxu0
    %v1360 = vpack.c.bf16 %v1355, %v1355
    %v1362 = vsel %vm300, %v1360, 0
    %1364 = vmatprep.subr.bf16.mxu0 0
    %1365 = vmatpush1.bf16.msra.mxu0 %v735
    %1366 = vmatprep.subr.bf16.mxu0 0
    %1367 = vmatpush1.bf16.msra.mxu0 0
    %1368 = vmatprep.subr.bf16.mxu0 0
    %1369 = vmatpush1.bf16.msra.mxu0 0
    %1370 = vmatprep.subr.bf16.mxu0 0
    %1371 = vmatpush1.bf16.msra.mxu0 0
    %1372 = vmatprep.subr.bf16.mxu0 0
    %1373 = vmatpush1.bf16.msra.mxu0 0
    %1374 = vmatprep.subr.bf16.mxu0 0
    %1375 = vmatpush1.bf16.msra.mxu0 0
    %1376 = vmatprep.subr.bf16.mxu0 0
    %1377 = vmatpush1.bf16.msra.mxu0 0
    %1378 = vmatprep.subr.bf16.mxu0 0
    %1379 = vmatpush1.bf16.msra.mxu0 0
    %1380 = vmatprep.subr.bf16.mxu0 0
    %1381 = vmatpush1.bf16.msra.mxu0 0
    %1382 = vmatprep.subr.bf16.mxu0 0
    %1383 = vmatpush1.bf16.msra.mxu0 0
    %1384 = vmatprep.subr.bf16.mxu0 0
    %1385 = vmatpush1.bf16.msra.mxu0 0
    %1386 = vmatprep.subr.bf16.mxu0 0
    %1387 = vmatpush1.bf16.msra.mxu0 0
    %1388 = vmatprep.subr.bf16.mxu0 0
    %1389 = vmatpush1.bf16.msra.mxu0 0
    %1390 = vmatprep.subr.bf16.mxu0 0
    %1391 = vmatpush1.bf16.msra.mxu0 0
    %1392 = vmatprep.subr.bf16.mxu0 0
    %1393 = vmatpush1.bf16.msra.mxu0 0
    %1394 = vmatprep.subr.bf16.mxu0 0
    %1395 = vmatpush1.bf16.msra.mxu0 0
    %1396 = vmatprep.mubr.bf16.mxu0 0
    %1397 = vmatmul.mubr.bf16.gmra.mrb[0].mxu0 %v1362
    %v1398 = vpop.f32.mrb[0].mxu0
    %v1399 = vadd.f32 0.0, %v1398
    %v1400 = vpop.f32.mrb[0].mxu0
    %v1401 = vpop.f32.mrb[0].mxu0
    %v1402 = vpop.f32.mrb[0].mxu0
    %1403 = vdwg.mxu0
    %v1404 = vadd.f32 %v1243, %v1399
    %1405 = vrot.lane.b32.xlu0 %v938, 104
    %v1406 = vpop.permute.xlu0 %1405
    %1407 = vrot.lane.b32.xlu0 %v939, 104
    %v1408 = vpop.permute.xlu0 %1407
    %v1410 = vsel %vm300, %v1406, 0
    %v1413 = vsel %vm300, %v1408, 0
    %1415 = vmatprep.subr.bf16.mxu0 0
    %1416 = vmatpush1.bf16.xpose.msra.mxu0 %v1413
    %1417 = vmatprep.subr.bf16.mxu0 0
    %1418 = vmatpush1.bf16.xpose.msra.mxu0 0
    %1419 = vmatprep.subr.bf16.mxu0 0
    %1420 = vmatpush1.bf16.xpose.msra.mxu0 0
    %1421 = vmatprep.subr.bf16.mxu0 0
    %1422 = vmatpush1.bf16.xpose.msra.mxu0 0
    %1423 = vmatprep.subr.bf16.mxu0 0
    %1424 = vmatpush1.bf16.xpose.msra.mxu0 0
    %1425 = vmatprep.subr.bf16.mxu0 0
    %1426 = vmatpush1.bf16.xpose.msra.mxu0 0
    %1427 = vmatprep.subr.bf16.mxu0 0
    %1428 = vmatpush1.bf16.xpose.msra.mxu0 0
    %1429 = vmatprep.subr.bf16.mxu0 0
    %1430 = vmatpush1.bf16.xpose.msra.mxu0 0
    %1431 = vmatprep.subr.bf16.mxu0 0
    %1432 = vmatpush1.bf16.xpose.msra.mxu0 0
    %1433 = vmatprep.subr.bf16.mxu0 0
    %1434 = vmatpush1.bf16.xpose.msra.mxu0 0
    %1435 = vmatprep.subr.bf16.mxu0 0
    %1436 = vmatpush1.bf16.xpose.msra.mxu0 0
    %1437 = vmatprep.subr.bf16.mxu0 0
    %1438 = vmatpush1.bf16.xpose.msra.mxu0 0
    %1439 = vmatprep.subr.bf16.mxu0 0
    %1440 = vmatpush1.bf16.xpose.msra.mxu0 0
    %1441 = vmatprep.subr.bf16.mxu0 0
    %1442 = vmatpush1.bf16.xpose.msra.mxu0 0
    %1443 = vmatprep.subr.bf16.mxu0 0
    %1444 = vmatpush1.bf16.xpose.msra.mxu0 0
    %1445 = vmatprep.subr.bf16.mxu0 0
    %1446 = vmatpush1.bf16.xpose.msra.mxu0 0
    %1447 = vmatprep.mubr.bf16.mxu0 0
    %1448 = vmatmul.mubr.bf16.gmra.mrb[0].mxu0 %v1410
    %v1449 = vpop.f32.mrb[0].mxu0
    %v1450 = vadd.f32 0.0, %v1449
    %v1451 = vpop.f32.mrb[0].mxu0
    %v1452 = vpop.f32.mrb[0].mxu0
    %v1453 = vpop.f32.mrb[0].mxu0
    %1454 = vdwg.mxu0
    %v1455 = vmul.f32 %v1450, 0.35355338
    %v1456 = vsel %vm170, %v1455, -1000000.0
    %v1457 = vsel %vm300, %v1456, -inf
    %1458 = vmax.xlane.f32.xlu0 %v1457
    %v1459 = vpop.xlane.xlu0 %1458
    %v1460 = vsub.f32 %v1456, %v1459
    %v1461 = vmul.f32 %v1460, 1.442695
    %v1462 = vpow.pop %v1461
    %v1463 = vsel %vm300, %v1462, 0.0
    %1464 = vadd.xlane.f32.xlu0 %v1463
    %v1465 = vpop.xlane.xlu0 %1464
    %v1466 = vrcp.pop %v1465
    %v1467 = vmul.f32 %v1462, %v1466
    %v1468 = vpack.c.bf16 %v1467, %v1467
    %1469 = vrot.lane.b32.xlu0 %v939, 72
    %v1470 = vpop.permute.xlu0 %1469
    %v1472 = vsel %vm300, %v1468, 0
    %v1475 = vsel %vm367, %v1470, 0
    %1477 = vmatprep.subr.bf16.mxu0 0
    %1478 = vmatpush1.bf16.msra.mxu0 %v1475
    %1479 = vmatprep.subr.bf16.mxu0 0
    %1480 = vmatpush1.bf16.msra.mxu0 0
    %1481 = vmatprep.subr.bf16.mxu0 0
    %1482 = vmatpush1.bf16.msra.mxu0 0
    %1483 = vmatprep.subr.bf16.mxu0 0
    %1484 = vmatpush1.bf16.msra.mxu0 0
    %1485 = vmatprep.subr.bf16.mxu0 0
    %1486 = vmatpush1.bf16.msra.mxu0 0
    %1487 = vmatprep.subr.bf16.mxu0 0
    %1488 = vmatpush1.bf16.msra.mxu0 0
    %1489 = vmatprep.subr.bf16.mxu0 0
    %1490 = vmatpush1.bf16.msra.mxu0 0
    %1491 = vmatprep.subr.bf16.mxu0 0
    %1492 = vmatpush1.bf16.msra.mxu0 0
    %1493 = vmatprep.subr.bf16.mxu0 0
    %1494 = vmatpush1.bf16.msra.mxu0 0
    %1495 = vmatprep.subr.bf16.mxu0 0
    %1496 = vmatpush1.bf16.msra.mxu0 0
    %1497 = vmatprep.subr.bf16.mxu0 0
    %1498 = vmatpush1.bf16.msra.mxu0 0
    %1499 = vmatprep.subr.bf16.mxu0 0
    %1500 = vmatpush1.bf16.msra.mxu0 0
    %1501 = vmatprep.subr.bf16.mxu0 0
    %1502 = vmatpush1.bf16.msra.mxu0 0
    %1503 = vmatprep.subr.bf16.mxu0 0
    %1504 = vmatpush1.bf16.msra.mxu0 0
    %1505 = vmatprep.subr.bf16.mxu0 0
    %1506 = vmatpush1.bf16.msra.mxu0 0
    %1507 = vmatprep.subr.bf16.mxu0 0
    %1508 = vmatpush1.bf16.msra.mxu0 0
    %1509 = vmatprep.mubr.bf16.mxu0 0
    %1510 = vmatmul.mubr.bf16.gmra.mrb[0].mxu0 %v1472
    %v1511 = vpop.f32.mrb[0].mxu0
    %v1512 = vadd.f32 0.0, %v1511
    %v1513 = vpop.f32.mrb[0].mxu0
    %v1514 = vpop.f32.mrb[0].mxu0
    %v1515 = vpop.f32.mrb[0].mxu0
    %1516 = vdwg.mxu0
    %v1517 = vpack.c.bf16 %v1512, %v1512
    %v1519 = vsel %vm300, %v1517, 0
    %1521 = vmatprep.subr.bf16.mxu0 0
    %1522 = vmatpush1.bf16.msra.mxu0 %v895
    %1523 = vmatprep.subr.bf16.mxu0 0
    %1524 = vmatpush1.bf16.msra.mxu0 0
    %1525 = vmatprep.subr.bf16.mxu0 0
    %1526 = vmatpush1.bf16.msra.mxu0 0
    %1527 = vmatprep.subr.bf16.mxu0 0
    %1528 = vmatpush1.bf16.msra.mxu0 0
    %1529 = vmatprep.subr.bf16.mxu0 0
    %1530 = vmatpush1.bf16.msra.mxu0 0
    %1531 = vmatprep.subr.bf16.mxu0 0
    %1532 = vmatpush1.bf16.msra.mxu0 0
    %1533 = vmatprep.subr.bf16.mxu0 0
    %1534 = vmatpush1.bf16.msra.mxu0 0
    %1535 = vmatprep.subr.bf16.mxu0 0
    %1536 = vmatpush1.bf16.msra.mxu0 0
    %1537 = vmatprep.subr.bf16.mxu0 0
    %1538 = vmatpush1.bf16.msra.mxu0 0
    %1539 = vmatprep.subr.bf16.mxu0 0
    %1540 = vmatpush1.bf16.msra.mxu0 0
    %1541 = vmatprep.subr.bf16.mxu0 0
    %1542 = vmatpush1.bf16.msra.mxu0 0
    %1543 = vmatprep.subr.bf16.mxu0 0
    %1544 = vmatpush1.bf16.msra.mxu0 0
    %1545 = vmatprep.subr.bf16.mxu0 0
    %1546 = vmatpush1.bf16.msra.mxu0 0
    %1547 = vmatprep.subr.bf16.mxu0 0
    %1548 = vmatpush1.bf16.msra.mxu0 0
    %1549 = vmatprep.subr.bf16.mxu0 0
    %1550 = vmatpush1.bf16.msra.mxu0 0
    %1551 = vmatprep.subr.bf16.mxu0 0
    %1552 = vmatpush1.bf16.msra.mxu0 0
    %1553 = vmatprep.mubr.bf16.mxu0 0
    %1554 = vmatmul.mubr.bf16.gmra.mrb[0].mxu0 %v1519
    %v1555 = vpop.f32.mrb[0].mxu0
    %v1556 = vadd.f32 0.0, %v1555
    %v1557 = vpop.f32.mrb[0].mxu0
    %v1558 = vpop.f32.mrb[0].mxu0
    %v1559 = vpop.f32.mrb[0].mxu0
    %1560 = vdwg.mxu0
    %v1561 = vadd.f32 %v1404, %v1556
    %v1562 = vadd.f32 %v160, %v937
    %v1563 = vadd.f32 %v161, %v1561
    %v1564 = vsel %vm188, %v1562, 0.0
    %1565 = vadd.xlane.f32.xlu0 %v1564
    %v1566 = vpop.xlane.xlu0 %1565
    %v1567 = vsel %vm188, %v1563, 0.0
    %1568 = vadd.xlane.f32.xlu0 %v1567
    %v1569 = vpop.xlane.xlu0 %1568
    %v1570 = vrcp.pop 32.0
    %v1571 = vmul.f32 %v1566, %v1570
    %v1572 = vmul.f32 %v1569, %v1570
    %v1573 = vsub.f32 %v1562, %v1571
    %v1574 = vsub.f32 %v1563, %v1572
    %v1575 = vmul.f32 %v1573, %v1573
    %v1576 = vmul.f32 %v1574, %v1574
    %v1577 = vsel %vm188, %v1575, 0.0
    %1578 = vadd.xlane.f32.xlu0 %v1577
    %v1579 = vpop.xlane.xlu0 %1578
    %v1580 = vsel %vm188, %v1576, 0.0
    %1581 = vadd.xlane.f32.xlu0 %v1580
    %v1582 = vpop.xlane.xlu0 %1581
    %v1583 = vmul.f32 %v1579, %v1570
    %v1584 = vmul.f32 %v1582, %v1570
    %v1585 = vadd.f32 %v1583, 1e-05
    %v1586 = vadd.f32 %v1584, 1e-05
    %v1587 = vrsqrt.pop %v1585
    %v1588 = vrsqrt.pop %v1586
    %v1589 = vmul.f32 %v1573, %v1587
    %v1590 = vmul.f32 %v1574, %v1588
    %v1591 = vld [vmem:[%s14] sm:$0x1]
    %v1593 = vlaneseq
    %v1594 = vshrl.u32 %v1593, 7
    %v1595 = vsub.s32 0, %v1594
    %v1596 = vrot.slane %v1591, %v1595
    %v1598 = vmul.f32 %v1589, %v1596
    %v1599 = vmul.f32 %v1590, %v1596
    %v1600 = vld [vmem:[%s15] sm:$0x1]
    %v1602 = vlaneseq
    %v1603 = vshrl.u32 %v1602, 7
    %v1604 = vsub.s32 0, %v1603
    %v1605 = vrot.slane %v1600, %v1604
    %v1607 = vadd.f32 %v1598, %v1605
    %v1608 = vadd.f32 %v1599, %v1605
    %s1609 = smul.u32 0, 2
    %v1610 = vpack.c.bf16 %v1608, %v1607
    %v1611 = vld [vmem:[#allocation10] sm:$0xf]
    %v1612 = vld [vmem:[#allocation10 + $0x4] sm:$0xf]
    %v1613 = vld [vmem:[#allocation10 + $0x8] sm:$0xf]
    %v1614 = vld [vmem:[#allocation10 + $0xc] sm:$0xf]
    %v1619 = vunpack.c.l.b16 %v1611
    %v1620 = vunpack.c.l.b16 %v1612
    %v1621 = vunpack.c.l.b16 %v1613
    %v1622 = vunpack.c.l.b16 %v1614
    %v1623 = vpack.c.b16 %v1620, %v1619
    %v1624 = vpack.c.b16 %v1622, %v1621
    %v1628 = vsel %vm188, %v1610, 0
    %1630 = vmatprep.subr.bf16.mxu0 0
    %1631 = vmatpush1.bf16.msra.mxu0 %v1623
    %1632 = vmatprep.subr.bf16.mxu0 0
    %1633 = vmatpush1.bf16.msra.mxu0 %v1624
    %1634 = vmatprep.subr.bf16.mxu0 0
    %1635 = vmatpush1.bf16.msra.mxu0 0
    %1636 = vmatprep.subr.bf16.mxu0 0
    %1637 = vmatpush1.bf16.msra.mxu0 0
    %1638 = vmatprep.subr.bf16.mxu0 0
    %1639 = vmatpush1.bf16.msra.mxu0 0
    %1640 = vmatprep.subr.bf16.mxu0 0
    %1641 = vmatpush1.bf16.msra.mxu0 0
    %1642 = vmatprep.subr.bf16.mxu0 0
    %1643 = vmatpush1.bf16.msra.mxu0 0
    %1644 = vmatprep.subr.bf16.mxu0 0
    %1645 = vmatpush1.bf16.msra.mxu0 0
    %1646 = vmatprep.subr.bf16.mxu0 0
    %1647 = vmatpush1.bf16.msra.mxu0 0
    %1648 = vmatprep.subr.bf16.mxu0 0
    %1649 = vmatpush1.bf16.msra.mxu0 0
    %1650 = vmatprep.subr.bf16.mxu0 0
    %1651 = vmatpush1.bf16.msra.mxu0 0
    %1652 = vmatprep.subr.bf16.mxu0 0
    %1653 = vmatpush1.bf16.msra.mxu0 0
    %1654 = vmatprep.subr.bf16.mxu0 0
    %1655 = vmatpush1.bf16.msra.mxu0 0
    %1656 = vmatprep.subr.bf16.mxu0 0
    %1657 = vmatpush1.bf16.msra.mxu0 0
    %1658 = vmatprep.subr.bf16.mxu0 0
    %1659 = vmatpush1.bf16.msra.mxu0 0
    %1660 = vmatprep.subr.bf16.mxu0 0
    %1661 = vmatpush1.bf16.msra.mxu0 0
    %1662 = vmatprep.mubr.bf16.mxu0 0
    %1663 = vmatmul.mubr.bf16.gmra.mrb[0].mxu0 %v1628
    %v1664 = vpop.f32.mrb[0].mxu0
    %v1665 = vadd.f32 0.0, %v1664
    %v1666 = vpop.f32.mrb[0].mxu0
    %v1667 = vpop.f32.mrb[0].mxu0
    %v1668 = vadd.f32 0.0, %v1667
    %v1669 = vpop.f32.mrb[0].mxu0
    %1670 = vdwg.mxu0
    %v1671 = vpack.c.bf16 %v165, %v164
    %v1672 = vld [vmem:[#allocation12] sm:$0xf]
    %v1673 = vld [vmem:[#allocation12 + $0x4] sm:$0xf]
    %v1674 = vld [vmem:[#allocation12 + $0x8] sm:$0xf]
    %v1675 = vld [vmem:[#allocation12 + $0xc] sm:$0xf]
    %v1680 = vunpack.c.l.b16 %v1672
    %v1681 = vunpack.c.l.b16 %v1673
    %v1682 = vunpack.c.l.b16 %v1674
    %v1683 = vunpack.c.l.b16 %v1675
    %v1684 = vpack.c.b16 %v1681, %v1680
    %v1685 = vpack.c.b16 %v1683, %v1682
    %v1689 = vsel %vm188, %v1671, 0
    %1691 = vmatprep.subr.bf16.mxu0 0
    %1692 = vmatpush1.bf16.msra.mxu0 %v1684
    %1693 = vmatprep.subr.bf16.mxu0 0
    %1694 = vmatpush1.bf16.msra.mxu0 %v1685
    %1695 = vmatprep.subr.bf16.mxu0 0
    %1696 = vmatpush1.bf16.msra.mxu0 0
    %1697 = vmatprep.subr.bf16.mxu0 0
    %1698 = vmatpush1.bf16.msra.mxu0 0
    %1699 = vmatprep.subr.bf16.mxu0 0
    %1700 = vmatpush1.bf16.msra.mxu0 0
    %1701 = vmatprep.subr.bf16.mxu0 0
    %1702 = vmatpush1.bf16.msra.mxu0 0
    %1703 = vmatprep.subr.bf16.mxu0 0
    %1704 = vmatpush1.bf16.msra.mxu0 0
    %1705 = vmatprep.subr.bf16.mxu0 0
    %1706 = vmatpush1.bf16.msra.mxu0 0
    %1707 = vmatprep.subr.bf16.mxu0 0
    %1708 = vmatpush1.bf16.msra.mxu0 0
    %1709 = vmatprep.subr.bf16.mxu0 0
    %1710 = vmatpush1.bf16.msra.mxu0 0
    %1711 = vmatprep.subr.bf16.mxu0 0
    %1712 = vmatpush1.bf16.msra.mxu0 0
    %1713 = vmatprep.subr.bf16.mxu0 0
    %1714 = vmatpush1.bf16.msra.mxu0 0
    %1715 = vmatprep.subr.bf16.mxu0 0
    %1716 = vmatpush1.bf16.msra.mxu0 0
    %1717 = vmatprep.subr.bf16.mxu0 0
    %1718 = vmatpush1.bf16.msra.mxu0 0
    %1719 = vmatprep.subr.bf16.mxu0 0
    %1720 = vmatpush1.bf16.msra.mxu0 0
    %1721 = vmatprep.subr.bf16.mxu0 0
    %1722 = vmatpush1.bf16.msra.mxu0 0
    %1723 = vmatprep.mubr.bf16.mxu0 0
    %1724 = vmatmul.mubr.bf16.gmra.mrb[0].mxu0 %v1689
    %v1725 = vpop.f32.mrb[0].mxu0
    %v1726 = vadd.f32 0.0, %v1725
    %v1727 = vpop.f32.mrb[0].mxu0
    %v1728 = vpop.f32.mrb[0].mxu0
    %v1729 = vadd.f32 0.0, %v1728
    %v1730 = vpop.f32.mrb[0].mxu0
    %1731 = vdwg.mxu0
    %v1732 = vpack.c.bf16 %v1668, %v1665
    %v1733 = vpack.c.bf16 %v1729, %v1726
    %v1734 = vld [vmem:[%s9] sm:$0xf]
    %v1735 = vld [vmem:[%s9 + $0x4] sm:$0xf]
    %v1736 = vld [vmem:[%s9 + $0x8] sm:$0xf]
    %v1737 = vld [vmem:[%s9 + $0xc] sm:$0xf]
    %s1738 = sld [smem:[#allocation2 + %s1609]]
    %v1739 = vstv %s1738
    %vm1740 = vcmp.lt.s32.totalorder %v169, %v1739
    %v1742 = vsel %vm300, %v1732, 0
    %v1745 = vsel %vm300, %v1733, 0
    %1747 = vmatprep.subr.bf16.mxu0 0
    %1748 = vmatpush1.bf16.xpose.msra.mxu0 %v1745
    %1749 = vmatprep.subr.bf16.mxu0 0
    %1750 = vmatpush1.bf16.xpose.msra.mxu0 0
    %1751 = vmatprep.subr.bf16.mxu0 0
    %1752 = vmatpush1.bf16.xpose.msra.mxu0 0
    %1753 = vmatprep.subr.bf16.mxu0 0
    %1754 = vmatpush1.bf16.xpose.msra.mxu0 0
    %1755 = vmatprep.subr.bf16.mxu0 0
    %1756 = vmatpush1.bf16.xpose.msra.mxu0 0
    %1757 = vmatprep.subr.bf16.mxu0 0
    %1758 = vmatpush1.bf16.xpose.msra.mxu0 0
    %1759 = vmatprep.subr.bf16.mxu0 0
    %1760 = vmatpush1.bf16.xpose.msra.mxu0 0
    %1761 = vmatprep.subr.bf16.mxu0 0
    %1762 = vmatpush1.bf16.xpose.msra.mxu0 0
    %1763 = vmatprep.subr.bf16.mxu0 0
    %1764 = vmatpush1.bf16.xpose.msra.mxu0 0
    %1765 = vmatprep.subr.bf16.mxu0 0
    %1766 = vmatpush1.bf16.xpose.msra.mxu0 0
    %1767 = vmatprep.subr.bf16.mxu0 0
    %1768 = vmatpush1.bf16.xpose.msra.mxu0 0
    %1769 = vmatprep.subr.bf16.mxu0 0
    %1770 = vmatpush1.bf16.xpose.msra.mxu0 0
    %1771 = vmatprep.subr.bf16.mxu0 0
    %1772 = vmatpush1.bf16.xpose.msra.mxu0 0
    %1773 = vmatprep.subr.bf16.mxu0 0
    %1774 = vmatpush1.bf16.xpose.msra.mxu0 0
    %1775 = vmatprep.subr.bf16.mxu0 0
    %1776 = vmatpush1.bf16.xpose.msra.mxu0 0
    %1777 = vmatprep.subr.bf16.mxu0 0
    %1778 = vmatpush1.bf16.xpose.msra.mxu0 0
    %1779 = vmatprep.mubr.bf16.mxu0 0
    %1780 = vmatmul.mubr.bf16.gmra.mrb[0].mxu0 %v1742
    %v1781 = vpop.f32.mrb[0].mxu0
    %v1782 = vadd.f32 0.0, %v1781
    %v1783 = vpop.f32.mrb[0].mxu0
    %v1784 = vpop.f32.mrb[0].mxu0
    %v1785 = vpop.f32.mrb[0].mxu0
    %1786 = vdwg.mxu0
    %v1787 = vmul.f32 %v1782, 0.35355338
    %v1788 = vsel %vm1740, %v1787, -1000000.0
    %v1789 = vsel %vm300, %v1788, -inf
    %1790 = vmax.xlane.f32.xlu0 %v1789
    %v1791 = vpop.xlane.xlu0 %1790
    %v1792 = vsub.f32 %v1788, %v1791
    %v1793 = vmul.f32 %v1792, 1.442695
    %v1794 = vpow.pop %v1793
    %v1795 = vsel %vm300, %v1794, 0.0
    %1796 = vadd.xlane.f32.xlu0 %v1795
    %v1797 = vpop.xlane.xlu0 %1796
    %v1798 = vrcp.pop %v1797
    %v1799 = vmul.f32 %v1794, %v1798
    %v1800 = vpack.c.bf16 %v1799, %v1799
    %1802 = vrot.lane.b32.xlu0 %v1733, 96
    %v1803 = vpop.permute.xlu0 %1802
    %v1805 = vsel %vm300, %v1800, 0
    %v1808 = vsel %vm367, %v1803, 0
    %1810 = vmatprep.subr.bf16.mxu0 0
    %1811 = vmatpush1.bf16.msra.mxu0 %v1808
    %1812 = vmatprep.subr.bf16.mxu0 0
    %1813 = vmatpush1.bf16.msra.mxu0 0
    %1814 = vmatprep.subr.bf16.mxu0 0
    %1815 = vmatpush1.bf16.msra.mxu0 0
    %1816 = vmatprep.subr.bf16.mxu0 0
    %1817 = vmatpush1.bf16.msra.mxu0 0
    %1818 = vmatprep.subr.bf16.mxu0 0
    %1819 = vmatpush1.bf16.msra.mxu0 0
    %1820 = vmatprep.subr.bf16.mxu0 0
    %1821 = vmatpush1.bf16.msra.mxu0 0
    %1822 = vmatprep.subr.bf16.mxu0 0
    %1823 = vmatpush1.bf16.msra.mxu0 0
    %1824 = vmatprep.subr.bf16.mxu0 0
    %1825 = vmatpush1.bf16.msra.mxu0 0
    %1826 = vmatprep.subr.bf16.mxu0 0
    %1827 = vmatpush1.bf16.msra.mxu0 0
    %1828 = vmatprep.subr.bf16.mxu0 0
    %1829 = vmatpush1.bf16.msra.mxu0 0
    %1830 = vmatprep.subr.bf16.mxu0 0
    %1831 = vmatpush1.bf16.msra.mxu0 0
    %1832 = vmatprep.subr.bf16.mxu0 0
    %1833 = vmatpush1.bf16.msra.mxu0 0
    %1834 = vmatprep.subr.bf16.mxu0 0
    %1835 = vmatpush1.bf16.msra.mxu0 0
    %1836 = vmatprep.subr.bf16.mxu0 0
    %1837 = vmatpush1.bf16.msra.mxu0 0
    %1838 = vmatprep.subr.bf16.mxu0 0
    %1839 = vmatpush1.bf16.msra.mxu0 0
    %1840 = vmatprep.subr.bf16.mxu0 0
    %1841 = vmatpush1.bf16.msra.mxu0 0
    %1842 = vmatprep.mubr.bf16.mxu0 0
    %1843 = vmatmul.mubr.bf16.gmra.mrb[0].mxu0 %v1805
    %v1844 = vpop.f32.mrb[0].mxu0
    %v1845 = vadd.f32 0.0, %v1844
    %v1846 = vpop.f32.mrb[0].mxu0
    %v1847 = vpop.f32.mrb[0].mxu0
    %v1848 = vpop.f32.mrb[0].mxu0
    %1849 = vdwg.mxu0
    %v1850 = vpack.c.bf16 %v1845, %v1845
    %1852 = vrot.lane.b32.xlu0 %v1732, 120
    %v1853 = vpop.permute.xlu0 %1852
    %1854 = vrot.lane.b32.xlu0 %v1733, 120
    %v1855 = vpop.permute.xlu0 %1854
    %v1857 = vsel %vm300, %v1853, 0
    %v1860 = vsel %vm300, %v1855, 0
    %1862 = vmatprep.subr.bf16.mxu0 0
    %1863 = vmatpush1.bf16.xpose.msra.mxu0 %v1860
    %1864 = vmatprep.subr.bf16.mxu0 0
    %1865 = vmatpush1.bf16.xpose.msra.mxu0 0
    %1866 = vmatprep.subr.bf16.mxu0 0
    %1867 = vmatpush1.bf16.xpose.msra.mxu0 0
    %1868 = vmatprep.subr.bf16.mxu0 0
    %1869 = vmatpush1.bf16.xpose.msra.mxu0 0
    %1870 = vmatprep.subr.bf16.mxu0 0
    %1871 = vmatpush1.bf16.xpose.msra.mxu0 0
    %1872 = vmatprep.subr.bf16.mxu0 0
    %1873 = vmatpush1.bf16.xpose.msra.mxu0 0
    %1874 = vmatprep.subr.bf16.mxu0 0
    %1875 = vmatpush1.bf16.xpose.msra.mxu0 0
    %1876 = vmatprep.subr.bf16.mxu0 0
    %1877 = vmatpush1.bf16.xpose.msra.mxu0 0
    %1878 = vmatprep.subr.bf16.mxu0 0
    %1879 = vmatpush1.bf16.xpose.msra.mxu0 0
    %1880 = vmatprep.subr.bf16.mxu0 0
    %1881 = vmatpush1.bf16.xpose.msra.mxu0 0
    %1882 = vmatprep.subr.bf16.mxu0 0
    %1883 = vmatpush1.bf16.xpose.msra.mxu0 0
    %1884 = vmatprep.subr.bf16.mxu0 0
    %1885 = vmatpush1.bf16.xpose.msra.mxu0 0
    %1886 = vmatprep.subr.bf16.mxu0 0
    %1887 = vmatpush1.bf16.xpose.msra.mxu0 0
    %1888 = vmatprep.subr.bf16.mxu0 0
    %1889 = vmatpush1.bf16.xpose.msra.mxu0 0
    %1890 = vmatprep.subr.bf16.mxu0 0
    %1891 = vmatpush1.bf16.xpose.msra.mxu0 0
    %1892 = vmatprep.subr.bf16.mxu0 0
    %1893 = vmatpush1.bf16.xpose.msra.mxu0 0
    %1894 = vmatprep.mubr.bf16.mxu0 0
    %1895 = vmatmul.mubr.bf16.gmra.mrb[0].mxu0 %v1857
    %v1896 = vpop.f32.mrb[0].mxu0
    %v1897 = vadd.f32 0.0, %v1896
    %v1898 = vpop.f32.mrb[0].mxu0
    %v1899 = vpop.f32.mrb[0].mxu0
    %v1900 = vpop.f32.mrb[0].mxu0
    %1901 = vdwg.mxu0
    %v1902 = vmul.f32 %v1897, 0.35355338
    %v1903 = vsel %vm1740, %v1902, -1000000.0
    %v1904 = vsel %vm300, %v1903, -inf
    %1905 = vmax.xlane.f32.xlu0 %v1904
    %v1906 = vpop.xlane.xlu0 %1905
    %v1907 = vsub.f32 %v1903, %v1906
    %v1908 = vmul.f32 %v1907, 1.442695
    %v1909 = vpow.pop %v1908
    %v1910 = vsel %vm300, %v1909, 0.0
    %1911 = vadd.xlane.f32.xlu0 %v1910
    %v1912 = vpop.xlane.xlu0 %1911
    %v1913 = vrcp.pop %v1912
    %v1914 = vmul.f32 %v1909, %v1913
    %v1915 = vpack.c.bf16 %v1914, %v1914
    %1916 = vrot.lane.b32.xlu0 %v1733, 88
    %v1917 = vpop.permute.xlu0 %1916
    %v1919 = vsel %vm300, %v1915, 0
    %v1922 = vsel %vm367, %v1917, 0
    %1924 = vmatprep.subr.bf16.mxu0 0
    %1925 = vmatpush1.bf16.msra.mxu0 %v1922
    %1926 = vmatprep.subr.bf16.mxu0 0
    %1927 = vmatpush1.bf16.msra.mxu0 0
    %1928 = vmatprep.subr.bf16.mxu0 0
    %1929 = vmatpush1.bf16.msra.mxu0 0
    %1930 = vmatprep.subr.bf16.mxu0 0
    %1931 = vmatpush1.bf16.msra.mxu0 0
    %1932 = vmatprep.subr.bf16.mxu0 0
    %1933 = vmatpush1.bf16.msra.mxu0 0
    %1934 = vmatprep.subr.bf16.mxu0 0
    %1935 = vmatpush1.bf16.msra.mxu0 0
    %1936 = vmatprep.subr.bf16.mxu0 0
    %1937 = vmatpush1.bf16.msra.mxu0 0
    %1938 = vmatprep.subr.bf16.mxu0 0
    %1939 = vmatpush1.bf16.msra.mxu0 0
    %1940 = vmatprep.subr.bf16.mxu0 0
    %1941 = vmatpush1.bf16.msra.mxu0 0
    %1942 = vmatprep.subr.bf16.mxu0 0
    %1943 = vmatpush1.bf16.msra.mxu0 0
    %1944 = vmatprep.subr.bf16.mxu0 0
    %1945 = vmatpush1.bf16.msra.mxu0 0
    %1946 = vmatprep.subr.bf16.mxu0 0
    %1947 = vmatpush1.bf16.msra.mxu0 0
    %1948 = vmatprep.subr.bf16.mxu0 0
    %1949 = vmatpush1.bf16.msra.mxu0 0
    %1950 = vmatprep.subr.bf16.mxu0 0
    %1951 = vmatpush1.bf16.msra.mxu0 0
    %1952 = vmatprep.subr.bf16.mxu0 0
    %1953 = vmatpush1.bf16.msra.mxu0 0
    %1954 = vmatprep.subr.bf16.mxu0 0
    %1955 = vmatpush1.bf16.msra.mxu0 0
    %1956 = vmatprep.mubr.bf16.mxu0 0
    %1957 = vmatmul.mubr.bf16.gmra.mrb[0].mxu0 %v1919
    %v1958 = vpop.f32.mrb[0].mxu0
    %v1959 = vadd.f32 0.0, %v1958
    %v1960 = vpop.f32.mrb[0].mxu0
    %v1961 = vpop.f32.mrb[0].mxu0
    %v1962 = vpop.f32.mrb[0].mxu0
    %1963 = vdwg.mxu0
    %v1964 = vpack.c.bf16 %v1959, %v1959
    %v1966 = vsel %vm300, %v1964, 0
    %v1969 = vsel %vm367, %v1735, 0
    %1971 = vmatprep.subr.bf16.mxu0 0
    %1972 = vmatpush1.bf16.msra.mxu0 %v1969
    %1973 = vmatprep.subr.bf16.mxu0 0
    %1974 = vmatpush1.bf16.msra.mxu0 0
    %1975 = vmatprep.subr.bf16.mxu0 0
    %1976 = vmatpush1.bf16.msra.mxu0 0
    %1977 = vmatprep.subr.bf16.mxu0 0
    %1978 = vmatpush1.bf16.msra.mxu0 0
    %1979 = vmatprep.subr.bf16.mxu0 0
    %1980 = vmatpush1.bf16.msra.mxu0 0
    %1981 = vmatprep.subr.bf16.mxu0 0
    %1982 = vmatpush1.bf16.msra.mxu0 0
    %1983 = vmatprep.subr.bf16.mxu0 0
    %1984 = vmatpush1.bf16.msra.mxu0 0
    %1985 = vmatprep.subr.bf16.mxu0 0
    %1986 = vmatpush1.bf16.msra.mxu0 0
    %1987 = vmatprep.subr.bf16.mxu0 0
    %1988 = vmatpush1.bf16.msra.mxu0 0
    %1989 = vmatprep.subr.bf16.mxu0 0
    %1990 = vmatpush1.bf16.msra.mxu0 0
    %1991 = vmatprep.subr.bf16.mxu0 0
    %1992 = vmatpush1.bf16.msra.mxu0 0
    %1993 = vmatprep.subr.bf16.mxu0 0
    %1994 = vmatpush1.bf16.msra.mxu0 0
    %1995 = vmatprep.subr.bf16.mxu0 0
    %1996 = vmatpush1.bf16.msra.mxu0 0
    %1997 = vmatprep.subr.bf16.mxu0 0
    %1998 = vmatpush1.bf16.msra.mxu0 0
    %1999 = vmatprep.subr.bf16.mxu0 0
    %2000 = vmatpush1.bf16.msra.mxu0 0
    %2001 = vmatprep.subr.bf16.mxu0 0
    %2002 = vmatpush1.bf16.msra.mxu0 0
    %2003 = vmatprep.mubr.bf16.mxu0 0
    %2004 = vmatmul.mubr.bf16.gmra.mrb[0].mxu0 %v1966
    %v2005 = vpop.f32.mrb[0].mxu0
    %v2006 = vadd.f32 0.0, %v2005
    %v2007 = vpop.f32.mrb[0].mxu0
    %v2008 = vpop.f32.mrb[0].mxu0
    %v2009 = vpop.f32.mrb[0].mxu0
    %2010 = vdwg.mxu0
    %v2012 = vsel %vm300, %v1850, 0
    %v2015 = vsel %vm367, %v1734, 0
    %2017 = vmatprep.subr.bf16.mxu0 0
    %2018 = vmatpush1.bf16.msra.mxu0 %v2015
    %2019 = vmatprep.subr.bf16.mxu0 0
    %2020 = vmatpush1.bf16.msra.mxu0 0
    %2021 = vmatprep.subr.bf16.mxu0 0
    %2022 = vmatpush1.bf16.msra.mxu0 0
    %2023 = vmatprep.subr.bf16.mxu0 0
    %2024 = vmatpush1.bf16.msra.mxu0 0
    %2025 = vmatprep.subr.bf16.mxu0 0
    %2026 = vmatpush1.bf16.msra.mxu0 0
    %2027 = vmatprep.subr.bf16.mxu0 0
    %2028 = vmatpush1.bf16.msra.mxu0 0
    %2029 = vmatprep.subr.bf16.mxu0 0
    %2030 = vmatpush1.bf16.msra.mxu0 0
    %2031 = vmatprep.subr.bf16.mxu0 0
    %2032 = vmatpush1.bf16.msra.mxu0 0
    %2033 = vmatprep.subr.bf16.mxu0 0
    %2034 = vmatpush1.bf16.msra.mxu0 0
    %2035 = vmatprep.subr.bf16.mxu0 0
    %2036 = vmatpush1.bf16.msra.mxu0 0
    %2037 = vmatprep.subr.bf16.mxu0 0
    %2038 = vmatpush1.bf16.msra.mxu0 0
    %2039 = vmatprep.subr.bf16.mxu0 0
    %2040 = vmatpush1.bf16.msra.mxu0 0
    %2041 = vmatprep.subr.bf16.mxu0 0
    %2042 = vmatpush1.bf16.msra.mxu0 0
    %2043 = vmatprep.subr.bf16.mxu0 0
    %2044 = vmatpush1.bf16.msra.mxu0 0
    %2045 = vmatprep.subr.bf16.mxu0 0
    %2046 = vmatpush1.bf16.msra.mxu0 0
    %2047 = vmatprep.subr.bf16.mxu0 0
    %2048 = vmatpush1.bf16.msra.mxu0 0
    %2049 = vmatprep.mubr.bf16.mxu0 0
    %2050 = vmatmul.mubr.bf16.gmra.mrb[0].mxu0 %v2012
    %v2051 = vpop.f32.mrb[0].mxu0
    %v2052 = vadd.f32 %v2006, %v2051
    %v2053 = vpop.f32.mrb[0].mxu0
    %v2054 = vpop.f32.mrb[0].mxu0
    %v2055 = vpop.f32.mrb[0].mxu0
    %2056 = vdwg.mxu0
    %2057 = vrot.lane.b32.xlu0 %v1732, 112
    %v2058 = vpop.permute.xlu0 %2057
    %2059 = vrot.lane.b32.xlu0 %v1733, 112
    %v2060 = vpop.permute.xlu0 %2059
    %v2062 = vsel %vm300, %v2058, 0
    %v2065 = vsel %vm300, %v2060, 0
    %2067 = vmatprep.subr.bf16.mxu0 0
    %2068 = vmatpush1.bf16.xpose.msra.mxu0 %v2065
    %2069 = vmatprep.subr.bf16.mxu0 0
    %2070 = vmatpush1.bf16.xpose.msra.mxu0 0
    %2071 = vmatprep.subr.bf16.mxu0 0
    %2072 = vmatpush1.bf16.xpose.msra.mxu0 0
    %2073 = vmatprep.subr.bf16.mxu0 0
    %2074 = vmatpush1.bf16.xpose.msra.mxu0 0
    %2075 = vmatprep.subr.bf16.mxu0 0
    %2076 = vmatpush1.bf16.xpose.msra.mxu0 0
    %2077 = vmatprep.subr.bf16.mxu0 0
    %2078 = vmatpush1.bf16.xpose.msra.mxu0 0
    %2079 = vmatprep.subr.bf16.mxu0 0
    %2080 = vmatpush1.bf16.xpose.msra.mxu0 0
    %2081 = vmatprep.subr.bf16.mxu0 0
    %2082 = vmatpush1.bf16.xpose.msra.mxu0 0
    %2083 = vmatprep.subr.bf16.mxu0 0
    %2084 = vmatpush1.bf16.xpose.msra.mxu0 0
    %2085 = vmatprep.subr.bf16.mxu0 0
    %2086 = vmatpush1.bf16.xpose.msra.mxu0 0
    %2087 = vmatprep.subr.bf16.mxu0 0
    %2088 = vmatpush1.bf16.xpose.msra.mxu0 0
    %2089 = vmatprep.subr.bf16.mxu0 0
    %2090 = vmatpush1.bf16.xpose.msra.mxu0 0
    %2091 = vmatprep.subr.bf16.mxu0 0
    %2092 = vmatpush1.bf16.xpose.msra.mxu0 0
    %2093 = vmatprep.subr.bf16.mxu0 0
    %2094 = vmatpush1.bf16.xpose.msra.mxu0 0
    %2095 = vmatprep.subr.bf16.mxu0 0
    %2096 = vmatpush1.bf16.xpose.msra.mxu0 0
    %2097 = vmatprep.subr.bf16.mxu0 0
    %2098 = vmatpush1.bf16.xpose.msra.mxu0 0
    %2099 = vmatprep.mubr.bf16.mxu0 0
    %2100 = vmatmul.mubr.bf16.gmra.mrb[0].mxu0 %v2062
    %v2101 = vpop.f32.mrb[0].mxu0
    %v2102 = vadd.f32 0.0, %v2101
    %v2103 = vpop.f32.mrb[0].mxu0
    %v2104 = vpop.f32.mrb[0].mxu0
    %v2105 = vpop.f32.mrb[0].mxu0
    %2106 = vdwg.mxu0
    %v2107 = vmul.f32 %v2102, 0.35355338
    %v2108 = vsel %vm1740, %v2107, -1000000.0
    %v2109 = vsel %vm300, %v2108, -inf
    %2110 = vmax.xlane.f32.xlu0 %v2109
    %v2111 = vpop.xlane.xlu0 %2110
    %v2112 = vsub.f32 %v2108, %v2111
    %v2113 = vmul.f32 %v2112, 1.442695
    %v2114 = vpow.pop %v2113
    %v2115 = vsel %vm300, %v2114, 0.0
    %2116 = vadd.xlane.f32.xlu0 %v2115
    %v2117 = vpop.xlane.xlu0 %2116
    %v2118 = vrcp.pop %v2117
    %v2119 = vmul.f32 %v2114, %v2118
    %v2120 = vpack.c.bf16 %v2119, %v2119
    %2121 = vrot.lane.b32.xlu0 %v1733, 80
    %v2122 = vpop.permute.xlu0 %2121
    %v2124 = vsel %vm300, %v2120, 0
    %v2127 = vsel %vm367, %v2122, 0
    %2129 = vmatprep.subr.bf16.mxu0 0
    %2130 = vmatpush1.bf16.msra.mxu0 %v2127
    %2131 = vmatprep.subr.bf16.mxu0 0
    %2132 = vmatpush1.bf16.msra.mxu0 0
    %2133 = vmatprep.subr.bf16.mxu0 0
    %2134 = vmatpush1.bf16.msra.mxu0 0
    %2135 = vmatprep.subr.bf16.mxu0 0
    %2136 = vmatpush1.bf16.msra.mxu0 0
    %2137 = vmatprep.subr.bf16.mxu0 0
    %2138 = vmatpush1.bf16.msra.mxu0 0
    %2139 = vmatprep.subr.bf16.mxu0 0
    %2140 = vmatpush1.bf16.msra.mxu0 0
    %2141 = vmatprep.subr.bf16.mxu0 0
    %2142 = vmatpush1.bf16.msra.mxu0 0
    %2143 = vmatprep.subr.bf16.mxu0 0
    %2144 = vmatpush1.bf16.msra.mxu0 0
    %2145 = vmatprep.subr.bf16.mxu0 0
    %2146 = vmatpush1.bf16.msra.mxu0 0
    %2147 = vmatprep.subr.bf16.mxu0 0
    %2148 = vmatpush1.bf16.msra.mxu0 0
    %2149 = vmatprep.subr.bf16.mxu0 0
    %2150 = vmatpush1.bf16.msra.mxu0 0
    %2151 = vmatprep.subr.bf16.mxu0 0
    %2152 = vmatpush1.bf16.msra.mxu0 0
    %2153 = vmatprep.subr.bf16.mxu0 0
    %2154 = vmatpush1.bf16.msra.mxu0 0
    %2155 = vmatprep.subr.bf16.mxu0 0
    %2156 = vmatpush1.bf16.msra.mxu0 0
    %2157 = vmatprep.subr.bf16.mxu0 0
    %2158 = vmatpush1.bf16.msra.mxu0 0
    %2159 = vmatprep.subr.bf16.mxu0 0
    %2160 = vmatpush1.bf16.msra.mxu0 0
    %2161 = vmatprep.mubr.bf16.mxu0 0
    %2162 = vmatmul.mubr.bf16.gmra.mrb[0].mxu0 %v2124
    %v2163 = vpop.f32.mrb[0].mxu0
    %v2164 = vadd.f32 0.0, %v2163
    %v2165 = vpop.f32.mrb[0].mxu0
    %v2166 = vpop.f32.mrb[0].mxu0
    %v2167 = vpop.f32.mrb[0].mxu0
    %2168 = vdwg.mxu0
    %v2169 = vpack.c.bf16 %v2164, %v2164
    %v2171 = vsel %vm300, %v2169, 0
    %v2174 = vsel %vm367, %v1736, 0
    %2176 = vmatprep.subr.bf16.mxu0 0
    %2177 = vmatpush1.bf16.msra.mxu0 %v2174
    %2178 = vmatprep.subr.bf16.mxu0 0
    %2179 = vmatpush1.bf16.msra.mxu0 0
    %2180 = vmatprep.subr.bf16.mxu0 0
    %2181 = vmatpush1.bf16.msra.mxu0 0
    %2182 = vmatprep.subr.bf16.mxu0 0
    %2183 = vmatpush1.bf16.msra.mxu0 0
    %2184 = vmatprep.subr.bf16.mxu0 0
    %2185 = vmatpush1.bf16.msra.mxu0 0
    %2186 = vmatprep.subr.bf16.mxu0 0
    %2187 = vmatpush1.bf16.msra.mxu0 0
    %2188 = vmatprep.subr.bf16.mxu0 0
    %2189 = vmatpush1.bf16.msra.mxu0 0
    %2190 = vmatprep.subr.bf16.mxu0 0
    %2191 = vmatpush1.bf16.msra.mxu0 0
    %2192 = vmatprep.subr.bf16.mxu0 0
    %2193 = vmatpush1.bf16.msra.mxu0 0
    %2194 = vmatprep.subr.bf16.mxu0 0
    %2195 = vmatpush1.bf16.msra.mxu0 0
    %2196 = vmatprep.subr.bf16.mxu0 0
    %2197 = vmatpush1.bf16.msra.mxu0 0
    %2198 = vmatprep.subr.bf16.mxu0 0
    %2199 = vmatpush1.bf16.msra.mxu0 0
    %2200 = vmatprep.subr.bf16.mxu0 0
    %2201 = vmatpush1.bf16.msra.mxu0 0
    %2202 = vmatprep.subr.bf16.mxu0 0
    %2203 = vmatpush1.bf16.msra.mxu0 0
    %2204 = vmatprep.subr.bf16.mxu0 0
    %2205 = vmatpush1.bf16.msra.mxu0 0
    %2206 = vmatprep.subr.bf16.mxu0 0
    %2207 = vmatpush1.bf16.msra.mxu0 0
    %2208 = vmatprep.mubr.bf16.mxu0 0
    %2209 = vmatmul.mubr.bf16.gmra.mrb[0].mxu0 %v2171
    %v2210 = vpop.f32.mrb[0].mxu0
    %v2211 = vadd.f32 0.0, %v2210
    %v2212 = vpop.f32.mrb[0].mxu0
    %v2213 = vpop.f32.mrb[0].mxu0
    %v2214 = vpop.f32.mrb[0].mxu0
    %2215 = vdwg.mxu0
    %v2216 = vadd.f32 %v2052, %v2211
    %2217 = vrot.lane.b32.xlu0 %v1732, 104
    %v2218 = vpop.permute.xlu0 %2217
    %2219 = vrot.lane.b32.xlu0 %v1733, 104
    %v2220 = vpop.permute.xlu0 %2219
    %v2222 = vsel %vm300, %v2218, 0
    %v2225 = vsel %vm300, %v2220, 0
    %2227 = vmatprep.subr.bf16.mxu0 0
    %2228 = vmatpush1.bf16.xpose.msra.mxu0 %v2225
    %2229 = vmatprep.subr.bf16.mxu0 0
    %2230 = vmatpush1.bf16.xpose.msra.mxu0 0
    %2231 = vmatprep.subr.bf16.mxu0 0
    %2232 = vmatpush1.bf16.xpose.msra.mxu0 0
    %2233 = vmatprep.subr.bf16.mxu0 0
    %2234 = vmatpush1.bf16.xpose.msra.mxu0 0
    %2235 = vmatprep.subr.bf16.mxu0 0
    %2236 = vmatpush1.bf16.xpose.msra.mxu0 0
    %2237 = vmatprep.subr.bf16.mxu0 0
    %2238 = vmatpush1.bf16.xpose.msra.mxu0 0
    %2239 = vmatprep.subr.bf16.mxu0 0
    %2240 = vmatpush1.bf16.xpose.msra.mxu0 0
    %2241 = vmatprep.subr.bf16.mxu0 0
    %2242 = vmatpush1.bf16.xpose.msra.mxu0 0
    %2243 = vmatprep.subr.bf16.mxu0 0
    %2244 = vmatpush1.bf16.xpose.msra.mxu0 0
    %2245 = vmatprep.subr.bf16.mxu0 0
    %2246 = vmatpush1.bf16.xpose.msra.mxu0 0
    %2247 = vmatprep.subr.bf16.mxu0 0
    %2248 = vmatpush1.bf16.xpose.msra.mxu0 0
    %2249 = vmatprep.subr.bf16.mxu0 0
    %2250 = vmatpush1.bf16.xpose.msra.mxu0 0
    %2251 = vmatprep.subr.bf16.mxu0 0
    %2252 = vmatpush1.bf16.xpose.msra.mxu0 0
    %2253 = vmatprep.subr.bf16.mxu0 0
    %2254 = vmatpush1.bf16.xpose.msra.mxu0 0
    %2255 = vmatprep.subr.bf16.mxu0 0
    %2256 = vmatpush1.bf16.xpose.msra.mxu0 0
    %2257 = vmatprep.subr.bf16.mxu0 0
    %2258 = vmatpush1.bf16.xpose.msra.mxu0 0
    %2259 = vmatprep.mubr.bf16.mxu0 0
    %2260 = vmatmul.mubr.bf16.gmra.mrb[0].mxu0 %v2222
    %v2261 = vpop.f32.mrb[0].mxu0
    %v2262 = vadd.f32 0.0, %v2261
    %v2263 = vpop.f32.mrb[0].mxu0
    %v2264 = vpop.f32.mrb[0].mxu0
    %v2265 = vpop.f32.mrb[0].mxu0
    %2266 = vdwg.mxu0
    %v2267 = vmul.f32 %v2262, 0.35355338
    %v2268 = vsel %vm1740, %v2267, -1000000.0
    %v2269 = vsel %vm300, %v2268, -inf
    %2270 = vmax.xlane.f32.xlu0 %v2269
    %v2271 = vpop.xlane.xlu0 %2270
    %v2272 = vsub.f32 %v2268, %v2271
    %v2273 = vmul.f32 %v2272, 1.442695
    %v2274 = vpow.pop %v2273
    %v2275 = vsel %vm300, %v2274, 0.0
    %2276 = vadd.xlane.f32.xlu0 %v2275
    %v2277 = vpop.xlane.xlu0 %2276
    %v2278 = vrcp.pop %v2277
    %v2279 = vmul.f32 %v2274, %v2278
    %v2280 = vpack.c.bf16 %v2279, %v2279
    %2281 = vrot.lane.b32.xlu0 %v1733, 72
    %v2282 = vpop.permute.xlu0 %2281
    %v2284 = vsel %vm300, %v2280, 0
    %v2287 = vsel %vm367, %v2282, 0
    %2289 = vmatprep.subr.bf16.mxu0 0
    %2290 = vmatpush1.bf16.msra.mxu0 %v2287
    %2291 = vmatprep.subr.bf16.mxu0 0
    %2292 = vmatpush1.bf16.msra.mxu0 0
    %2293 = vmatprep.subr.bf16.mxu0 0
    %2294 = vmatpush1.bf16.msra.mxu0 0
    %2295 = vmatprep.subr.bf16.mxu0 0
    %2296 = vmatpush1.bf16.msra.mxu0 0
    %2297 = vmatprep.subr.bf16.mxu0 0
    %2298 = vmatpush1.bf16.msra.mxu0 0
    %2299 = vmatprep.subr.bf16.mxu0 0
    %2300 = vmatpush1.bf16.msra.mxu0 0
    %2301 = vmatprep.subr.bf16.mxu0 0
    %2302 = vmatpush1.bf16.msra.mxu0 0
    %2303 = vmatprep.subr.bf16.mxu0 0
    %2304 = vmatpush1.bf16.msra.mxu0 0
    %2305 = vmatprep.subr.bf16.mxu0 0
    %2306 = vmatpush1.bf16.msra.mxu0 0
    %2307 = vmatprep.subr.bf16.mxu0 0
    %2308 = vmatpush1.bf16.msra.mxu0 0
    %2309 = vmatprep.subr.bf16.mxu0 0
    %2310 = vmatpush1.bf16.msra.mxu0 0
    %2311 = vmatprep.subr.bf16.mxu0 0
    %2312 = vmatpush1.bf16.msra.mxu0 0
    %2313 = vmatprep.subr.bf16.mxu0 0
    %2314 = vmatpush1.bf16.msra.mxu0 0
    %2315 = vmatprep.subr.bf16.mxu0 0
    %2316 = vmatpush1.bf16.msra.mxu0 0
    %2317 = vmatprep.subr.bf16.mxu0 0
    %2318 = vmatpush1.bf16.msra.mxu0 0
    %2319 = vmatprep.subr.bf16.mxu0 0
    %2320 = vmatpush1.bf16.msra.mxu0 0
    %2321 = vmatprep.mubr.bf16.mxu0 0
    %2322 = vmatmul.mubr.bf16.gmra.mrb[0].mxu0 %v2284
    %v2323 = vpop.f32.mrb[0].mxu0
    %v2324 = vadd.f32 0.0, %v2323
    %v2325 = vpop.f32.mrb[0].mxu0
    %v2326 = vpop.f32.mrb[0].mxu0
    %v2327 = vpop.f32.mrb[0].mxu0
    %2328 = vdwg.mxu0
    %v2329 = vpack.c.bf16 %v2324, %v2324
    %v2331 = vsel %vm300, %v2329, 0
    %v2334 = vsel %vm367, %v1737, 0
    %2336 = vmatprep.subr.bf16.mxu0 0
    %2337 = vmatpush1.bf16.msra.mxu0 %v2334
    %2338 = vmatprep.subr.bf16.mxu0 0
    %2339 = vmatpush1.bf16.msra.mxu0 0
    %2340 = vmatprep.subr.bf16.mxu0 0
    %2341 = vmatpush1.bf16.msra.mxu0 0
    %2342 = vmatprep.subr.bf16.mxu0 0
    %2343 = vmatpush1.bf16.msra.mxu0 0
    %2344 = vmatprep.subr.bf16.mxu0 0
    %2345 = vmatpush1.bf16.msra.mxu0 0
    %2346 = vmatprep.subr.bf16.mxu0 0
    %2347 = vmatpush1.bf16.msra.mxu0 0
    %2348 = vmatprep.subr.bf16.mxu0 0
    %2349 = vmatpush1.bf16.msra.mxu0 0
    %2350 = vmatprep.subr.bf16.mxu0 0
    %2351 = vmatpush1.bf16.msra.mxu0 0
    %2352 = vmatprep.subr.bf16.mxu0 0
    %2353 = vmatpush1.bf16.msra.mxu0 0
    %2354 = vmatprep.subr.bf16.mxu0 0
    %2355 = vmatpush1.bf16.msra.mxu0 0
    %2356 = vmatprep.subr.bf16.mxu0 0
    %2357 = vmatpush1.bf16.msra.mxu0 0
    %2358 = vmatprep.subr.bf16.mxu0 0
    %2359 = vmatpush1.bf16.msra.mxu0 0
    %2360 = vmatprep.subr.bf16.mxu0 0
    %2361 = vmatpush1.bf16.msra.mxu0 0
    %2362 = vmatprep.subr.bf16.mxu0 0
    %2363 = vmatpush1.bf16.msra.mxu0 0
    %2364 = vmatprep.subr.bf16.mxu0 0
    %2365 = vmatpush1.bf16.msra.mxu0 0
    %2366 = vmatprep.subr.bf16.mxu0 0
    %2367 = vmatpush1.bf16.msra.mxu0 0
    %2368 = vmatprep.mubr.bf16.mxu0 0
    %2369 = vmatmul.mubr.bf16.gmra.mrb[0].mxu0 %v2331
    %v2370 = vpop.f32.mrb[0].mxu0
    %v2371 = vadd.f32 0.0, %v2370
    %v2372 = vpop.f32.mrb[0].mxu0
    %v2373 = vpop.f32.mrb[0].mxu0
    %v2374 = vpop.f32.mrb[0].mxu0
    %2375 = vdwg.mxu0
    %v2376 = vadd.f32 %v2216, %v2371
    %s2377 = sadd.s32 %s1609, 1
    %s2378 = sld [smem:[#allocation2 + %s2377]]
    %v2379 = vstv %s2378
    %vm2380 = vcmp.lt.s32.totalorder %v169, %v2379
    %v2381 = vrot.slane %v1732, 4
    %v2382 = vrot.slane %v1733, 4
    %v2384 = vsel %vm300, %v2381, 0
    %v2387 = vsel %vm300, %v2382, 0
    %2389 = vmatprep.subr.bf16.mxu0 0
    %2390 = vmatpush1.bf16.xpose.msra.mxu0 %v2387
    %2391 = vmatprep.subr.bf16.mxu0 0
    %2392 = vmatpush1.bf16.xpose.msra.mxu0 0
    %2393 = vmatprep.subr.bf16.mxu0 0
    %2394 = vmatpush1.bf16.xpose.msra.mxu0 0
    %2395 = vmatprep.subr.bf16.mxu0 0
    %2396 = vmatpush1.bf16.xpose.msra.mxu0 0
    %2397 = vmatprep.subr.bf16.mxu0 0
    %2398 = vmatpush1.bf16.xpose.msra.mxu0 0
    %2399 = vmatprep.subr.bf16.mxu0 0
    %2400 = vmatpush1.bf16.xpose.msra.mxu0 0
    %2401 = vmatprep.subr.bf16.mxu0 0
    %2402 = vmatpush1.bf16.xpose.msra.mxu0 0
    %2403 = vmatprep.subr.bf16.mxu0 0
    %2404 = vmatpush1.bf16.xpose.msra.mxu0 0
    %2405 = vmatprep.subr.bf16.mxu0 0
    %2406 = vmatpush1.bf16.xpose.msra.mxu0 0
    %2407 = vmatprep.subr.bf16.mxu0 0
    %2408 = vmatpush1.bf16.xpose.msra.mxu0 0
    %2409 = vmatprep.subr.bf16.mxu0 0
    %2410 = vmatpush1.bf16.xpose.msra.mxu0 0
    %2411 = vmatprep.subr.bf16.mxu0 0
    %2412 = vmatpush1.bf16.xpose.msra.mxu0 0
    %2413 = vmatprep.subr.bf16.mxu0 0
    %2414 = vmatpush1.bf16.xpose.msra.mxu0 0
    %2415 = vmatprep.subr.bf16.mxu0 0
    %2416 = vmatpush1.bf16.xpose.msra.mxu0 0
    %2417 = vmatprep.subr.bf16.mxu0 0
    %2418 = vmatpush1.bf16.xpose.msra.mxu0 0
    %2419 = vmatprep.subr.bf16.mxu0 0
    %2420 = vmatpush1.bf16.xpose.msra.mxu0 0
    %2421 = vmatprep.mubr.bf16.mxu0 0
    %2422 = vmatmul.mubr.bf16.gmra.mrb[0].mxu0 %v2384
    %v2423 = vpop.f32.mrb[0].mxu0
    %v2424 = vadd.f32 0.0, %v2423
    %v2425 = vpop.f32.mrb[0].mxu0
    %v2426 = vpop.f32.mrb[0].mxu0
    %v2427 = vpop.f32.mrb[0].mxu0
    %2428 = vdwg.mxu0
    %v2429 = vmul.f32 %v2424, 0.35355338
    %v2430 = vsel %vm2380, %v2429, -1000000.0
    %v2431 = vsel %vm300, %v2430, -inf
    %2432 = vmax.xlane.f32.xlu0 %v2431
    %v2433 = vpop.xlane.xlu0 %2432
    %v2434 = vsub.f32 %v2430, %v2433
    %v2435 = vmul.f32 %v2434, 1.442695
    %v2436 = vpow.pop %v2435
    %v2437 = vsel %vm300, %v2436, 0.0
    %2438 = vadd.xlane.f32.xlu0 %v2437
    %v2439 = vpop.xlane.xlu0 %2438
    %v2440 = vrcp.pop %v2439
    %v2441 = vmul.f32 %v2436, %v2440
    %v2442 = vpack.c.bf16 %v2441, %v2441
    %2443 = vrot.lane.b32.xlu0 %v2382, 96
    %v2444 = vpop.permute.xlu0 %2443
    %v2446 = vsel %vm300, %v2442, 0
    %v2449 = vsel %vm367, %v2444, 0
    %2451 = vmatprep.subr.bf16.mxu0 0
    %2452 = vmatpush1.bf16.msra.mxu0 %v2449
    %2453 = vmatprep.subr.bf16.mxu0 0
    %2454 = vmatpush1.bf16.msra.mxu0 0
    %2455 = vmatprep.subr.bf16.mxu0 0
    %2456 = vmatpush1.bf16.msra.mxu0 0
    %2457 = vmatprep.subr.bf16.mxu0 0
    %2458 = vmatpush1.bf16.msra.mxu0 0
    %2459 = vmatprep.subr.bf16.mxu0 0
    %2460 = vmatpush1.bf16.msra.mxu0 0
    %2461 = vmatprep.subr.bf16.mxu0 0
    %2462 = vmatpush1.bf16.msra.mxu0 0
    %2463 = vmatprep.subr.bf16.mxu0 0
    %2464 = vmatpush1.bf16.msra.mxu0 0
    %2465 = vmatprep.subr.bf16.mxu0 0
    %2466 = vmatpush1.bf16.msra.mxu0 0
    %2467 = vmatprep.subr.bf16.mxu0 0
    %2468 = vmatpush1.bf16.msra.mxu0 0
    %2469 = vmatprep.subr.bf16.mxu0 0
    %2470 = vmatpush1.bf16.msra.mxu0 0
    %2471 = vmatprep.subr.bf16.mxu0 0
    %2472 = vmatpush1.bf16.msra.mxu0 0
    %2473 = vmatprep.subr.bf16.mxu0 0
    %2474 = vmatpush1.bf16.msra.mxu0 0
    %2475 = vmatprep.subr.bf16.mxu0 0
    %2476 = vmatpush1.bf16.msra.mxu0 0
    %2477 = vmatprep.subr.bf16.mxu0 0
    %2478 = vmatpush1.bf16.msra.mxu0 0
    %2479 = vmatprep.subr.bf16.mxu0 0
    %2480 = vmatpush1.bf16.msra.mxu0 0
    %2481 = vmatprep.subr.bf16.mxu0 0
    %2482 = vmatpush1.bf16.msra.mxu0 0
    %2483 = vmatprep.mubr.bf16.mxu0 0
    %2484 = vmatmul.mubr.bf16.gmra.mrb[0].mxu0 %v2446
    %v2485 = vpop.f32.mrb[0].mxu0
    %v2486 = vadd.f32 0.0, %v2485
    %v2487 = vpop.f32.mrb[0].mxu0
    %v2488 = vpop.f32.mrb[0].mxu0
    %v2489 = vpop.f32.mrb[0].mxu0
    %2490 = vdwg.mxu0
    %v2491 = vpack.c.bf16 %v2486, %v2486
    %2492 = vrot.lane.b32.xlu0 %v2381, 120
    %v2493 = vpop.permute.xlu0 %2492
    %2494 = vrot.lane.b32.xlu0 %v2382, 120
    %v2495 = vpop.permute.xlu0 %2494
    %v2497 = vsel %vm300, %v2493, 0
    %v2500 = vsel %vm300, %v2495, 0
    %2502 = vmatprep.subr.bf16.mxu0 0
    %2503 = vmatpush1.bf16.xpose.msra.mxu0 %v2500
    %2504 = vmatprep.subr.bf16.mxu0 0
    %2505 = vmatpush1.bf16.xpose.msra.mxu0 0
    %2506 = vmatprep.subr.bf16.mxu0 0
    %2507 = vmatpush1.bf16.xpose.msra.mxu0 0
    %2508 = vmatprep.subr.bf16.mxu0 0
    %2509 = vmatpush1.bf16.xpose.msra.mxu0 0
    %2510 = vmatprep.subr.bf16.mxu0 0
    %2511 = vmatpush1.bf16.xpose.msra.mxu0 0
    %2512 = vmatprep.subr.bf16.mxu0 0
    %2513 = vmatpush1.bf16.xpose.msra.mxu0 0
    %2514 = vmatprep.subr.bf16.mxu0 0
    %2515 = vmatpush1.bf16.xpose.msra.mxu0 0
    %2516 = vmatprep.subr.bf16.mxu0 0
    %2517 = vmatpush1.bf16.xpose.msra.mxu0 0
    %2518 = vmatprep.subr.bf16.mxu0 0
    %2519 = vmatpush1.bf16.xpose.msra.mxu0 0
    %2520 = vmatprep.subr.bf16.mxu0 0
    %2521 = vmatpush1.bf16.xpose.msra.mxu0 0
    %2522 = vmatprep.subr.bf16.mxu0 0
    %2523 = vmatpush1.bf16.xpose.msra.mxu0 0
    %2524 = vmatprep.subr.bf16.mxu0 0
    %2525 = vmatpush1.bf16.xpose.msra.mxu0 0
    %2526 = vmatprep.subr.bf16.mxu0 0
    %2527 = vmatpush1.bf16.xpose.msra.mxu0 0
    %2528 = vmatprep.subr.bf16.mxu0 0
    %2529 = vmatpush1.bf16.xpose.msra.mxu0 0
    %2530 = vmatprep.subr.bf16.mxu0 0
    %2531 = vmatpush1.bf16.xpose.msra.mxu0 0
    %2532 = vmatprep.subr.bf16.mxu0 0
    %2533 = vmatpush1.bf16.xpose.msra.mxu0 0
    %2534 = vmatprep.mubr.bf16.mxu0 0
    %2535 = vmatmul.mubr.bf16.gmra.mrb[0].mxu0 %v2497
    %v2536 = vpop.f32.mrb[0].mxu0
    %v2537 = vadd.f32 0.0, %v2536
    %v2538 = vpop.f32.mrb[0].mxu0
    %v2539 = vpop.f32.mrb[0].mxu0
    %v2540 = vpop.f32.mrb[0].mxu0
    %2541 = vdwg.mxu0
    %v2542 = vmul.f32 %v2537, 0.35355338
    %v2543 = vsel %vm2380, %v2542, -1000000.0
    %v2544 = vsel %vm300, %v2543, -inf
    %2545 = vmax.xlane.f32.xlu0 %v2544
    %v2546 = vpop.xlane.xlu0 %2545
    %v2547 = vsub.f32 %v2543, %v2546
    %v2548 = vmul.f32 %v2547, 1.442695
    %v2549 = vpow.pop %v2548
    %v2550 = vsel %vm300, %v2549, 0.0
    %2551 = vadd.xlane.f32.xlu0 %v2550
    %v2552 = vpop.xlane.xlu0 %2551
    %v2553 = vrcp.pop %v2552
    %v2554 = vmul.f32 %v2549, %v2553
    %v2555 = vpack.c.bf16 %v2554, %v2554
    %2556 = vrot.lane.b32.xlu0 %v2382, 88
    %v2557 = vpop.permute.xlu0 %2556
    %v2559 = vsel %vm300, %v2555, 0
    %v2562 = vsel %vm367, %v2557, 0
    %2564 = vmatprep.subr.bf16.mxu0 0
    %2565 = vmatpush1.bf16.msra.mxu0 %v2562
    %2566 = vmatprep.subr.bf16.mxu0 0
    %2567 = vmatpush1.bf16.msra.mxu0 0
    %2568 = vmatprep.subr.bf16.mxu0 0
    %2569 = vmatpush1.bf16.msra.mxu0 0
    %2570 = vmatprep.subr.bf16.mxu0 0
    %2571 = vmatpush1.bf16.msra.mxu0 0
    %2572 = vmatprep.subr.bf16.mxu0 0
    %2573 = vmatpush1.bf16.msra.mxu0 0
    %2574 = vmatprep.subr.bf16.mxu0 0
    %2575 = vmatpush1.bf16.msra.mxu0 0
    %2576 = vmatprep.subr.bf16.mxu0 0
    %2577 = vmatpush1.bf16.msra.mxu0 0
    %2578 = vmatprep.subr.bf16.mxu0 0
    %2579 = vmatpush1.bf16.msra.mxu0 0
    %2580 = vmatprep.subr.bf16.mxu0 0
    %2581 = vmatpush1.bf16.msra.mxu0 0
    %2582 = vmatprep.subr.bf16.mxu0 0
    %2583 = vmatpush1.bf16.msra.mxu0 0
    %2584 = vmatprep.subr.bf16.mxu0 0
    %2585 = vmatpush1.bf16.msra.mxu0 0
    %2586 = vmatprep.subr.bf16.mxu0 0
    %2587 = vmatpush1.bf16.msra.mxu0 0
    %2588 = vmatprep.subr.bf16.mxu0 0
    %2589 = vmatpush1.bf16.msra.mxu0 0
    %2590 = vmatprep.subr.bf16.mxu0 0
    %2591 = vmatpush1.bf16.msra.mxu0 0
    %2592 = vmatprep.subr.bf16.mxu0 0
    %2593 = vmatpush1.bf16.msra.mxu0 0
    %2594 = vmatprep.subr.bf16.mxu0 0
    %2595 = vmatpush1.bf16.msra.mxu0 0
    %2596 = vmatprep.mubr.bf16.mxu0 0
    %2597 = vmatmul.mubr.bf16.gmra.mrb[0].mxu0 %v2559
    %v2598 = vpop.f32.mrb[0].mxu0
    %v2599 = vadd.f32 0.0, %v2598
    %v2600 = vpop.f32.mrb[0].mxu0
    %v2601 = vpop.f32.mrb[0].mxu0
    %v2602 = vpop.f32.mrb[0].mxu0
    %2603 = vdwg.mxu0
    %v2604 = vpack.c.bf16 %v2599, %v2599
    %v2606 = vsel %vm300, %v2604, 0
    %2608 = vmatprep.subr.bf16.mxu0 0
    %2609 = vmatpush1.bf16.msra.mxu0 %v1969
    %2610 = vmatprep.subr.bf16.mxu0 0
    %2611 = vmatpush1.bf16.msra.mxu0 0
    %2612 = vmatprep.subr.bf16.mxu0 0
    %2613 = vmatpush1.bf16.msra.mxu0 0
    %2614 = vmatprep.subr.bf16.mxu0 0
    %2615 = vmatpush1.bf16.msra.mxu0 0
    %2616 = vmatprep.subr.bf16.mxu0 0
    %2617 = vmatpush1.bf16.msra.mxu0 0
    %2618 = vmatprep.subr.bf16.mxu0 0
    %2619 = vmatpush1.bf16.msra.mxu0 0
    %2620 = vmatprep.subr.bf16.mxu0 0
    %2621 = vmatpush1.bf16.msra.mxu0 0
    %2622 = vmatprep.subr.bf16.mxu0 0
    %2623 = vmatpush1.bf16.msra.mxu0 0
    %2624 = vmatprep.subr.bf16.mxu0 0
    %2625 = vmatpush1.bf16.msra.mxu0 0
    %2626 = vmatprep.subr.bf16.mxu0 0
    %2627 = vmatpush1.bf16.msra.mxu0 0
    %2628 = vmatprep.subr.bf16.mxu0 0
    %2629 = vmatpush1.bf16.msra.mxu0 0
    %2630 = vmatprep.subr.bf16.mxu0 0
    %2631 = vmatpush1.bf16.msra.mxu0 0
    %2632 = vmatprep.subr.bf16.mxu0 0
    %2633 = vmatpush1.bf16.msra.mxu0 0
    %2634 = vmatprep.subr.bf16.mxu0 0
    %2635 = vmatpush1.bf16.msra.mxu0 0
    %2636 = vmatprep.subr.bf16.mxu0 0
    %2637 = vmatpush1.bf16.msra.mxu0 0
    %2638 = vmatprep.subr.bf16.mxu0 0
    %2639 = vmatpush1.bf16.msra.mxu0 0
    %2640 = vmatprep.mubr.bf16.mxu0 0
    %2641 = vmatmul.mubr.bf16.gmra.mrb[0].mxu0 %v2606
    %v2642 = vpop.f32.mrb[0].mxu0
    %v2643 = vadd.f32 0.0, %v2642
    %v2644 = vpop.f32.mrb[0].mxu0
    %v2645 = vpop.f32.mrb[0].mxu0
    %v2646 = vpop.f32.mrb[0].mxu0
    %2647 = vdwg.mxu0
    %v2649 = vsel %vm300, %v2491, 0
    %2651 = vmatprep.subr.bf16.mxu0 0
    %2652 = vmatpush1.bf16.msra.mxu0 %v2015
    %2653 = vmatprep.subr.bf16.mxu0 0
    %2654 = vmatpush1.bf16.msra.mxu0 0
    %2655 = vmatprep.subr.bf16.mxu0 0
    %2656 = vmatpush1.bf16.msra.mxu0 0
    %2657 = vmatprep.subr.bf16.mxu0 0
    %2658 = vmatpush1.bf16.msra.mxu0 0
    %2659 = vmatprep.subr.bf16.mxu0 0
    %2660 = vmatpush1.bf16.msra.mxu0 0
    %2661 = vmatprep.subr.bf16.mxu0 0
    %2662 = vmatpush1.bf16.msra.mxu0 0
    %2663 = vmatprep.subr.bf16.mxu0 0
    %2664 = vmatpush1.bf16.msra.mxu0 0
    %2665 = vmatprep.subr.bf16.mxu0 0
    %2666 = vmatpush1.bf16.msra.mxu0 0
    %2667 = vmatprep.subr.bf16.mxu0 0
    %2668 = vmatpush1.bf16.msra.mxu0 0
    %2669 = vmatprep.subr.bf16.mxu0 0
    %2670 = vmatpush1.bf16.msra.mxu0 0
    %2671 = vmatprep.subr.bf16.mxu0 0
    %2672 = vmatpush1.bf16.msra.mxu0 0
    %2673 = vmatprep.subr.bf16.mxu0 0
    %2674 = vmatpush1.bf16.msra.mxu0 0
    %2675 = vmatprep.subr.bf16.mxu0 0
    %2676 = vmatpush1.bf16.msra.mxu0 0
    %2677 = vmatprep.subr.bf16.mxu0 0
    %2678 = vmatpush1.bf16.msra.mxu0 0
    %2679 = vmatprep.subr.bf16.mxu0 0
    %2680 = vmatpush1.bf16.msra.mxu0 0
    %2681 = vmatprep.subr.bf16.mxu0 0
    %2682 = vmatpush1.bf16.msra.mxu0 0
    %2683 = vmatprep.mubr.bf16.mxu0 0
    %2684 = vmatmul.mubr.bf16.gmra.mrb[0].mxu0 %v2649
    %v2685 = vpop.f32.mrb[0].mxu0
    %v2686 = vadd.f32 %v2643, %v2685
    %v2687 = vpop.f32.mrb[0].mxu0
    %v2688 = vpop.f32.mrb[0].mxu0
    %v2689 = vpop.f32.mrb[0].mxu0
    %2690 = vdwg.mxu0
    %2691 = vrot.lane.b32.xlu0 %v2381, 112
    %v2692 = vpop.permute.xlu0 %2691
    %2693 = vrot.lane.b32.xlu0 %v2382, 112
    %v2694 = vpop.permute.xlu0 %2693
    %v2696 = vsel %vm300, %v2692, 0
    %v2699 = vsel %vm300, %v2694, 0
    %2701 = vmatprep.subr.bf16.mxu0 0
    %2702 = vmatpush1.bf16.xpose.msra.mxu0 %v2699
    %2703 = vmatprep.subr.bf16.mxu0 0
    %2704 = vmatpush1.bf16.xpose.msra.mxu0 0
    %2705 = vmatprep.subr.bf16.mxu0 0
    %2706 = vmatpush1.bf16.xpose.msra.mxu0 0
    %2707 = vmatprep.subr.bf16.mxu0 0
    %2708 = vmatpush1.bf16.xpose.msra.mxu0 0
    %2709 = vmatprep.subr.bf16.mxu0 0
    %2710 = vmatpush1.bf16.xpose.msra.mxu0 0
    %2711 = vmatprep.subr.bf16.mxu0 0
    %2712 = vmatpush1.bf16.xpose.msra.mxu0 0
    %2713 = vmatprep.subr.bf16.mxu0 0
    %2714 = vmatpush1.bf16.xpose.msra.mxu0 0
    %2715 = vmatprep.subr.bf16.mxu0 0
    %2716 = vmatpush1.bf16.xpose.msra.mxu0 0
    %2717 = vmatprep.subr.bf16.mxu0 0
    %2718 = vmatpush1.bf16.xpose.msra.mxu0 0
    %2719 = vmatprep.subr.bf16.mxu0 0
    %2720 = vmatpush1.bf16.xpose.msra.mxu0 0
    %2721 = vmatprep.subr.bf16.mxu0 0
    %2722 = vmatpush1.bf16.xpose.msra.mxu0 0
    %2723 = vmatprep.subr.bf16.mxu0 0
    %2724 = vmatpush1.bf16.xpose.msra.mxu0 0
    %2725 = vmatprep.subr.bf16.mxu0 0
    %2726 = vmatpush1.bf16.xpose.msra.mxu0 0
    %2727 = vmatprep.subr.bf16.mxu0 0
    %2728 = vmatpush1.bf16.xpose.msra.mxu0 0
    %2729 = vmatprep.subr.bf16.mxu0 0
    %2730 = vmatpush1.bf16.xpose.msra.mxu0 0
    %2731 = vmatprep.subr.bf16.mxu0 0
    %2732 = vmatpush1.bf16.xpose.msra.mxu0 0
    %2733 = vmatprep.mubr.bf16.mxu0 0
    %2734 = vmatmul.mubr.bf16.gmra.mrb[0].mxu0 %v2696
    %v2735 = vpop.f32.mrb[0].mxu0
    %v2736 = vadd.f32 0.0, %v2735
    %v2737 = vpop.f32.mrb[0].mxu0
    %v2738 = vpop.f32.mrb[0].mxu0
    %v2739 = vpop.f32.mrb[0].mxu0
    %2740 = vdwg.mxu0
    %v2741 = vmul.f32 %v2736, 0.35355338
    %v2742 = vsel %vm2380, %v2741, -1000000.0
    %v2743 = vsel %vm300, %v2742, -inf
    %2744 = vmax.xlane.f32.xlu0 %v2743
    %v2745 = vpop.xlane.xlu0 %2744
    %v2746 = vsub.f32 %v2742, %v2745
    %v2747 = vmul.f32 %v2746, 1.442695
    %v2748 = vpow.pop %v2747
    %v2749 = vsel %vm300, %v2748, 0.0
    %2750 = vadd.xlane.f32.xlu0 %v2749
    %v2751 = vpop.xlane.xlu0 %2750
    %v2752 = vrcp.pop %v2751
    %v2753 = vmul.f32 %v2748, %v2752
    %v2754 = vpack.c.bf16 %v2753, %v2753
    %2755 = vrot.lane.b32.xlu0 %v2382, 80
    %v2756 = vpop.permute.xlu0 %2755
    %v2758 = vsel %vm300, %v2754, 0
    %v2761 = vsel %vm367, %v2756, 0
    %2763 = vmatprep.subr.bf16.mxu0 0
    %2764 = vmatpush1.bf16.msra.mxu0 %v2761
    %2765 = vmatprep.subr.bf16.mxu0 0
    %2766 = vmatpush1.bf16.msra.mxu0 0
    %2767 = vmatprep.subr.bf16.mxu0 0
    %2768 = vmatpush1.bf16.msra.mxu0 0
    %2769 = vmatprep.subr.bf16.mxu0 0
    %2770 = vmatpush1.bf16.msra.mxu0 0
    %2771 = vmatprep.subr.bf16.mxu0 0
    %2772 = vmatpush1.bf16.msra.mxu0 0
    %2773 = vmatprep.subr.bf16.mxu0 0
    %2774 = vmatpush1.bf16.msra.mxu0 0
    %2775 = vmatprep.subr.bf16.mxu0 0
    %2776 = vmatpush1.bf16.msra.mxu0 0
    %2777 = vmatprep.subr.bf16.mxu0 0
    %2778 = vmatpush1.bf16.msra.mxu0 0
    %2779 = vmatprep.subr.bf16.mxu0 0
    %2780 = vmatpush1.bf16.msra.mxu0 0
    %2781 = vmatprep.subr.bf16.mxu0 0
    %2782 = vmatpush1.bf16.msra.mxu0 0
    %2783 = vmatprep.subr.bf16.mxu0 0
    %2784 = vmatpush1.bf16.msra.mxu0 0
    %2785 = vmatprep.subr.bf16.mxu0 0
    %2786 = vmatpush1.bf16.msra.mxu0 0
    %2787 = vmatprep.subr.bf16.mxu0 0
    %2788 = vmatpush1.bf16.msra.mxu0 0
    %2789 = vmatprep.subr.bf16.mxu0 0
    %2790 = vmatpush1.bf16.msra.mxu0 0
    %2791 = vmatprep.subr.bf16.mxu0 0
    %2792 = vmatpush1.bf16.msra.mxu0 0
    %2793 = vmatprep.subr.bf16.mxu0 0
    %2794 = vmatpush1.bf16.msra.mxu0 0
    %2795 = vmatprep.mubr.bf16.mxu0 0
    %2796 = vmatmul.mubr.bf16.gmra.mrb[0].mxu0 %v2758
    %v2797 = vpop.f32.mrb[0].mxu0
    %v2798 = vadd.f32 0.0, %v2797
    %v2799 = vpop.f32.mrb[0].mxu0
    %v2800 = vpop.f32.mrb[0].mxu0
    %v2801 = vpop.f32.mrb[0].mxu0
    %2802 = vdwg.mxu0
    %v2803 = vpack.c.bf16 %v2798, %v2798
    %v2805 = vsel %vm300, %v2803, 0
    %2807 = vmatprep.subr.bf16.mxu0 0
    %2808 = vmatpush1.bf16.msra.mxu0 %v2174
    %2809 = vmatprep.subr.bf16.mxu0 0
    %2810 = vmatpush1.bf16.msra.mxu0 0
    %2811 = vmatprep.subr.bf16.mxu0 0
    %2812 = vmatpush1.bf16.msra.mxu0 0
    %2813 = vmatprep.subr.bf16.mxu0 0
    %2814 = vmatpush1.bf16.msra.mxu0 0
    %2815 = vmatprep.subr.bf16.mxu0 0
    %2816 = vmatpush1.bf16.msra.mxu0 0
    %2817 = vmatprep.subr.bf16.mxu0 0
    %2818 = vmatpush1.bf16.msra.mxu0 0
    %2819 = vmatprep.subr.bf16.mxu0 0
    %2820 = vmatpush1.bf16.msra.mxu0 0
    %2821 = vmatprep.subr.bf16.mxu0 0
    %2822 = vmatpush1.bf16.msra.mxu0 0
    %2823 = vmatprep.subr.bf16.mxu0 0
    %2824 = vmatpush1.bf16.msra.mxu0 0
    %2825 = vmatprep.subr.bf16.mxu0 0
    %2826 = vmatpush1.bf16.msra.mxu0 0
    %2827 = vmatprep.subr.bf16.mxu0 0
    %2828 = vmatpush1.bf16.msra.mxu0 0
    %2829 = vmatprep.subr.bf16.mxu0 0
    %2830 = vmatpush1.bf16.msra.mxu0 0
    %2831 = vmatprep.subr.bf16.mxu0 0
    %2832 = vmatpush1.bf16.msra.mxu0 0
    %2833 = vmatprep.subr.bf16.mxu0 0
    %2834 = vmatpush1.bf16.msra.mxu0 0
    %2835 = vmatprep.subr.bf16.mxu0 0
    %2836 = vmatpush1.bf16.msra.mxu0 0
    %2837 = vmatprep.subr.bf16.mxu0 0
    %2838 = vmatpush1.bf16.msra.mxu0 0
    %2839 = vmatprep.mubr.bf16.mxu0 0
    %2840 = vmatmul.mubr.bf16.gmra.mrb[0].mxu0 %v2805
    %v2841 = vpop.f32.mrb[0].mxu0
    %v2842 = vadd.f32 0.0, %v2841
    %v2843 = vpop.f32.mrb[0].mxu0
    %v2844 = vpop.f32.mrb[0].mxu0
    %v2845 = vpop.f32.mrb[0].mxu0
    %2846 = vdwg.mxu0
    %v2847 = vadd.f32 %v2686, %v2842
    %2848 = vrot.lane.b32.xlu0 %v2381, 104
    %v2849 = vpop.permute.xlu0 %2848
    %2850 = vrot.lane.b32.xlu0 %v2382, 104
    %v2851 = vpop.permute.xlu0 %2850
    %v2853 = vsel %vm300, %v2849, 0
    %v2856 = vsel %vm300, %v2851, 0
    %2858 = vmatprep.subr.bf16.mxu0 0
    %2859 = vmatpush1.bf16.xpose.msra.mxu0 %v2856
    %2860 = vmatprep.subr.bf16.mxu0 0
    %2861 = vmatpush1.bf16.xpose.msra.mxu0 0
    %2862 = vmatprep.subr.bf16.mxu0 0
    %2863 = vmatpush1.bf16.xpose.msra.mxu0 0
    %2864 = vmatprep.subr.bf16.mxu0 0
    %2865 = vmatpush1.bf16.xpose.msra.mxu0 0
    %2866 = vmatprep.subr.bf16.mxu0 0
    %2867 = vmatpush1.bf16.xpose.msra.mxu0 0
    %2868 = vmatprep.subr.bf16.mxu0 0
    %2869 = vmatpush1.bf16.xpose.msra.mxu0 0
    %2870 = vmatprep.subr.bf16.mxu0 0
    %2871 = vmatpush1.bf16.xpose.msra.mxu0 0
    %2872 = vmatprep.subr.bf16.mxu0 0
    %2873 = vmatpush1.bf16.xpose.msra.mxu0 0
    %2874 = vmatprep.subr.bf16.mxu0 0
    %2875 = vmatpush1.bf16.xpose.msra.mxu0 0
    %2876 = vmatprep.subr.bf16.mxu0 0
    %2877 = vmatpush1.bf16.xpose.msra.mxu0 0
    %2878 = vmatprep.subr.bf16.mxu0 0
    %2879 = vmatpush1.bf16.xpose.msra.mxu0 0
    %2880 = vmatprep.subr.bf16.mxu0 0
    %2881 = vmatpush1.bf16.xpose.msra.mxu0 0
    %2882 = vmatprep.subr.bf16.mxu0 0
    %2883 = vmatpush1.bf16.xpose.msra.mxu0 0
    %2884 = vmatprep.subr.bf16.mxu0 0
    %2885 = vmatpush1.bf16.xpose.msra.mxu0 0
    %2886 = vmatprep.subr.bf16.mxu0 0
    %2887 = vmatpush1.bf16.xpose.msra.mxu0 0
    %2888 = vmatprep.subr.bf16.mxu0 0
    %2889 = vmatpush1.bf16.xpose.msra.mxu0 0
    %2890 = vmatprep.mubr.bf16.mxu0 0
    %2891 = vmatmul.mubr.bf16.gmra.mrb[0].mxu0 %v2853
    %v2892 = vpop.f32.mrb[0].mxu0
    %v2893 = vadd.f32 0.0, %v2892
    %v2894 = vpop.f32.mrb[0].mxu0
    %v2895 = vpop.f32.mrb[0].mxu0
    %v2896 = vpop.f32.mrb[0].mxu0
    %2897 = vdwg.mxu0
    %v2898 = vmul.f32 %v2893, 0.35355338
    %v2899 = vsel %vm2380, %v2898, -1000000.0
    %v2900 = vsel %vm300, %v2899, -inf
    %2901 = vmax.xlane.f32.xlu0 %v2900
    %v2902 = vpop.xlane.xlu0 %2901
    %v2903 = vsub.f32 %v2899, %v2902
    %v2904 = vmul.f32 %v2903, 1.442695
    %v2905 = vpow.pop %v2904
    %v2906 = vsel %vm300, %v2905, 0.0
    %2907 = vadd.xlane.f32.xlu0 %v2906
    %v2908 = vpop.xlane.xlu0 %2907
    %v2909 = vrcp.pop %v2908
    %v2910 = vmul.f32 %v2905, %v2909
    %v2911 = vpack.c.bf16 %v2910, %v2910
    %2912 = vrot.lane.b32.xlu0 %v2382, 72
    %v2913 = vpop.permute.xlu0 %2912
    %v2915 = vsel %vm300, %v2911, 0
    %v2918 = vsel %vm367, %v2913, 0
    %2920 = vmatprep.subr.bf16.mxu0 0
    %2921 = vmatpush1.bf16.msra.mxu0 %v2918
    %2922 = vmatprep.subr.bf16.mxu0 0
    %2923 = vmatpush1.bf16.msra.mxu0 0
    %2924 = vmatprep.subr.bf16.mxu0 0
    %2925 = vmatpush1.bf16.msra.mxu0 0
    %2926 = vmatprep.subr.bf16.mxu0 0
    %2927 = vmatpush1.bf16.msra.mxu0 0
    %2928 = vmatprep.subr.bf16.mxu0 0
    %2929 = vmatpush1.bf16.msra.mxu0 0
    %2930 = vmatprep.subr.bf16.mxu0 0
    %2931 = vmatpush1.bf16.msra.mxu0 0
    %2932 = vmatprep.subr.bf16.mxu0 0
    %2933 = vmatpush1.bf16.msra.mxu0 0
    %2934 = vmatprep.subr.bf16.mxu0 0
    %2935 = vmatpush1.bf16.msra.mxu0 0
    %2936 = vmatprep.subr.bf16.mxu0 0
    %2937 = vmatpush1.bf16.msra.mxu0 0
    %2938 = vmatprep.subr.bf16.mxu0 0
    %2939 = vmatpush1.bf16.msra.mxu0 0
    %2940 = vmatprep.subr.bf16.mxu0 0
    %2941 = vmatpush1.bf16.msra.mxu0 0
    %2942 = vmatprep.subr.bf16.mxu0 0
    %2943 = vmatpush1.bf16.msra.mxu0 0
    %2944 = vmatprep.subr.bf16.mxu0 0
    %2945 = vmatpush1.bf16.msra.mxu0 0
    %2946 = vmatprep.subr.bf16.mxu0 0
    %2947 = vmatpush1.bf16.msra.mxu0 0
    %2948 = vmatprep.subr.bf16.mxu0 0
    %2949 = vmatpush1.bf16.msra.mxu0 0
    %2950 = vmatprep.subr.bf16.mxu0 0
    %2951 = vmatpush1.bf16.msra.mxu0 0
    %2952 = vmatprep.mubr.bf16.mxu0 0
    %2953 = vmatmul.mubr.bf16.gmra.mrb[0].mxu0 %v2915
    %v2954 = vpop.f32.mrb[0].mxu0
    %v2955 = vadd.f32 0.0, %v2954
    %v2956 = vpop.f32.mrb[0].mxu0
    %v2957 = vpop.f32.mrb[0].mxu0
    %v2958 = vpop.f32.mrb[0].mxu0
    %2959 = vdwg.mxu0
    %v2960 = vpack.c.bf16 %v2955, %v2955
    %v2962 = vsel %vm300, %v2960, 0
    %2964 = vmatprep.subr.bf16.mxu0 0
    %2965 = vmatpush1.bf16.msra.mxu0 %v2334
    %2966 = vmatprep.subr.bf16.mxu0 0
    %2967 = vmatpush1.bf16.msra.mxu0 0
    %2968 = vmatprep.subr.bf16.mxu0 0
    %2969 = vmatpush1.bf16.msra.mxu0 0
    %2970 = vmatprep.subr.bf16.mxu0 0
    %2971 = vmatpush1.bf16.msra.mxu0 0
    %2972 = vmatprep.subr.bf16.mxu0 0
    %2973 = vmatpush1.bf16.msra.mxu0 0
    %2974 = vmatprep.subr.bf16.mxu0 0
    %2975 = vmatpush1.bf16.msra.mxu0 0
    %2976 = vmatprep.subr.bf16.mxu0 0
    %2977 = vmatpush1.bf16.msra.mxu0 0
    %2978 = vmatprep.subr.bf16.mxu0 0
    %2979 = vmatpush1.bf16.msra.mxu0 0
    %2980 = vmatprep.subr.bf16.mxu0 0
    %2981 = vmatpush1.bf16.msra.mxu0 0
    %2982 = vmatprep.subr.bf16.mxu0 0
    %2983 = vmatpush1.bf16.msra.mxu0 0
    %2984 = vmatprep.subr.bf16.mxu0 0
    %2985 = vmatpush1.bf16.msra.mxu0 0
    %2986 = vmatprep.subr.bf16.mxu0 0
    %2987 = vmatpush1.bf16.msra.mxu0 0
    %2988 = vmatprep.subr.bf16.mxu0 0
    %2989 = vmatpush1.bf16.msra.mxu0 0
    %2990 = vmatprep.subr.bf16.mxu0 0
    %2991 = vmatpush1.bf16.msra.mxu0 0
    %2992 = vmatprep.subr.bf16.mxu0 0
    %2993 = vmatpush1.bf16.msra.mxu0 0
    %2994 = vmatprep.subr.bf16.mxu0 0
    %2995 = vmatpush1.bf16.msra.mxu0 0
    %2996 = vmatprep.mubr.bf16.mxu0 0
    %2997 = vmatmul.mubr.bf16.gmra.mrb[0].mxu0 %v2962
    %v2998 = vpop.f32.mrb[0].mxu0
    %v2999 = vadd.f32 0.0, %v2998
    %v3000 = vpop.f32.mrb[0].mxu0
    %v3001 = vpop.f32.mrb[0].mxu0
    %v3002 = vpop.f32.mrb[0].mxu0
    %3003 = vdwg.mxu0
    %v3004 = vadd.f32 %v2847, %v2999
    %v3005 = vadd.f32 %v1607, %v2376
    %v3006 = vadd.f32 %v1608, %v3004
    %v3007 = vsel %vm188, %v3005, 0.0
    %3008 = vadd.xlane.f32.xlu0 %v3007
    %v3009 = vpop.xlane.xlu0 %3008
    %v3010 = vsel %vm188, %v3006, 0.0
    %3011 = vadd.xlane.f32.xlu0 %v3010
    %v3012 = vpop.xlane.xlu0 %3011
    %v3013 = vmul.f32 %v3009, %v1570
    %v3014 = vmul.f32 %v3012, %v1570
    %v3015 = vsub.f32 %v3005, %v3013
    %v3016 = vsub.f32 %v3006, %v3014
    %v3017 = vmul.f32 %v3015, %v3015
    %v3018 = vmul.f32 %v3016, %v3016
    %v3019 = vsel %vm188, %v3017, 0.0
    %3020 = vadd.xlane.f32.xlu0 %v3019
    %v3021 = vpop.xlane.xlu0 %3020
    %v3022 = vsel %vm188, %v3018, 0.0
    %3023 = vadd.xlane.f32.xlu0 %v3022
    %v3024 = vpop.xlane.xlu0 %3023
    %v3025 = vmul.f32 %v3021, %v1570
    %v3026 = vmul.f32 %v3024, %v1570
    %v3027 = vadd.f32 %v3025, 1e-05
    %v3028 = vadd.f32 %v3026, 1e-05
    %v3029 = vrsqrt.pop %v3027
    %v3030 = vrsqrt.pop %v3028
    %v3031 = vmul.f32 %v3015, %v3029
    %v3032 = vmul.f32 %v3016, %v3030
    %v3033 = vld [vmem:[%s16] sm:$0x1]
    %v3035 = vlaneseq
    %v3036 = vshrl.u32 %v3035, 7
    %v3037 = vsub.s32 0, %v3036
    %v3038 = vrot.slane %v3033, %v3037
    %v3040 = vmul.f32 %v3031, %v3038
    %v3041 = vmul.f32 %v3032, %v3038
    %v3042 = vld [vmem:[%s17] sm:$0x1]
    %v3044 = vlaneseq
    %v3045 = vshrl.u32 %v3044, 7
    %v3046 = vsub.s32 0, %v3045
    %v3047 = vrot.slane %v3042, %v3046
    %v3049 = vadd.f32 %v3040, %v3047
    %v3050 = vadd.f32 %v3041, %v3047
    %v3051 = vpack.c.bf16 %v3050, %v3049
    %v3052 = vld [vmem:[#allocation13] sm:$0xf]
    %v3053 = vld [vmem:[#allocation13 + $0x4] sm:$0xf]
    %v3054 = vld [vmem:[#allocation13 + $0x8] sm:$0xf]
    %v3055 = vld [vmem:[#allocation13 + $0xc] sm:$0xf]
    %v3056 = vld [vmem:[%s11] sm:$0x1]
    %v3058 = vlaneseq
    %v3059 = vshrl.u32 %v3058, 7
    %v3060 = vsub.s32 0, %v3059
    %v3061 = vrot.slane %v3056, %v3060
    %v3067 = vunpack.c.l.b16 %v3052
    %v3068 = vunpack.c.l.b16 %v3053
    %v3069 = vunpack.c.l.b16 %v3054
    %v3070 = vunpack.c.l.b16 %v3055
    %v3071 = vpack.c.b16 %v3068, %v3067
    %v3072 = vpack.c.b16 %v3070, %v3069
    %v3076 = vsel %vm188, %v3051, 0
    %3078 = vmatprep.subr.bf16.mxu0 0
    %3079 = vmatpush1.bf16.msra.mxu0 %v3071
    %3080 = vmatprep.subr.bf16.mxu0 0
    %3081 = vmatpush1.bf16.msra.mxu0 %v3072
    %3082 = vmatprep.subr.bf16.mxu0 0
    %3083 = vmatpush1.bf16.msra.mxu0 0
    %3084 = vmatprep.subr.bf16.mxu0 0
    %3085 = vmatpush1.bf16.msra.mxu0 0
    %3086 = vmatprep.subr.bf16.mxu0 0
    %3087 = vmatpush1.bf16.msra.mxu0 0
    %3088 = vmatprep.subr.bf16.mxu0 0
    %3089 = vmatpush1.bf16.msra.mxu0 0
    %3090 = vmatprep.subr.bf16.mxu0 0
    %3091 = vmatpush1.bf16.msra.mxu0 0
    %3092 = vmatprep.subr.bf16.mxu0 0
    %3093 = vmatpush1.bf16.msra.mxu0 0
    %3094 = vmatprep.subr.bf16.mxu0 0
    %3095 = vmatpush1.bf16.msra.mxu0 0
    %3096 = vmatprep.subr.bf16.mxu0 0
    %3097 = vmatpush1.bf16.msra.mxu0 0
    %3098 = vmatprep.subr.bf16.mxu0 0
    %3099 = vmatpush1.bf16.msra.mxu0 0
    %3100 = vmatprep.subr.bf16.mxu0 0
    %3101 = vmatpush1.bf16.msra.mxu0 0
    %3102 = vmatprep.subr.bf16.mxu0 0
    %3103 = vmatpush1.bf16.msra.mxu0 0
    %3104 = vmatprep.subr.bf16.mxu0 0
    %3105 = vmatpush1.bf16.msra.mxu0 0
    %3106 = vmatprep.subr.bf16.mxu0 0
    %3107 = vmatpush1.bf16.msra.mxu0 0
    %3108 = vmatprep.subr.bf16.mxu0 0
    %3109 = vmatpush1.bf16.msra.mxu0 0
    %3110 = vmatprep.mubr.bf16.mxu0 0
    %3111 = vmatmul.mubr.bf16.gmra.mrb[0].mxu0 %v3076
    %v3112 = vpop.f32.mrb[0].mxu0
    %v3113 = vadd.f32 %v3061, %v3112
    %v3114 = vpop.f32.mrb[0].mxu0
    %v3115 = vpop.f32.mrb[0].mxu0
    %v3116 = vadd.f32 %v3061, %v3115
    %v3117 = vpop.f32.mrb[0].mxu0
    %3118 = vdwg.mxu0
    %v3119 = vmax.f32 %v3113, 0.0
    %v3120 = vmax.f32 %v3116, 0.0
    %v3121 = vpack.c.bf16 %v3120, %v3119
    %v3122 = vld [vmem:[%s12] sm:$0xf]
    %v3123 = vld [vmem:[%s12 + $0x4] sm:$0xf]
    %v3124 = vld [vmem:[%s12 + $0x8] sm:$0xf]
    %v3125 = vld [vmem:[%s12 + $0xc] sm:$0xf]
    %v3126 = vld [vmem:[%s12 + $0x10] sm:$0xf]
    %v3127 = vld [vmem:[%s12 + $0x14] sm:$0xf]
    %v3128 = vld [vmem:[%s12 + $0x18] sm:$0xf]
    %v3129 = vld [vmem:[%s12 + $0x1c] sm:$0xf]
    %v3130 = vld [vmem:[%s13] sm:$0x1]
    %v3132 = vlaneseq
    %v3133 = vshrl.u32 %v3132, 7
    %v3134 = vsub.s32 0, %v3133
    %v3135 = vrot.slane %v3130, %v3134
    %v3145 = vunpack.c.l.b16 %v3122
    %v3146 = vunpack.c.l.b16 %v3123
    %v3147 = vunpack.c.l.b16 %v3124
    %v3148 = vunpack.c.l.b16 %v3125
    %v3149 = vunpack.c.l.b16 %v3126
    %v3150 = vunpack.c.l.b16 %v3127
    %v3151 = vunpack.c.l.b16 %v3128
    %v3152 = vunpack.c.l.b16 %v3129
    %v3153 = vpack.c.b16 %v3146, %v3145
    %v3154 = vpack.c.b16 %v3148, %v3147
    %v3155 = vpack.c.b16 %v3150, %v3149
    %v3156 = vpack.c.b16 %v3152, %v3151
    %vm3161 = vcmask 523264
    %v3163 = vsel %vm3161, %v3121, 0
    %3165 = vmatprep.subr.bf16.mxu0 0
    %3166 = vmatpush1.bf16.msra.mxu0 %v3153
    %3167 = vmatprep.subr.bf16.mxu0 0
    %3168 = vmatpush1.bf16.msra.mxu0 %v3154
    %3169 = vmatprep.subr.bf16.mxu0 0
    %3170 = vmatpush1.bf16.msra.mxu0 %v3155
    %3171 = vmatprep.subr.bf16.mxu0 0
    %3172 = vmatpush1.bf16.msra.mxu0 %v3156
    %3173 = vmatprep.subr.bf16.mxu0 0
    %3174 = vmatpush1.bf16.msra.mxu0 0
    %3175 = vmatprep.subr.bf16.mxu0 0
    %3176 = vmatpush1.bf16.msra.mxu0 0
    %3177 = vmatprep.subr.bf16.mxu0 0
    %3178 = vmatpush1.bf16.msra.mxu0 0
    %3179 = vmatprep.subr.bf16.mxu0 0
    %3180 = vmatpush1.bf16.msra.mxu0 0
    %3181 = vmatprep.subr.bf16.mxu0 0
    %3182 = vmatpush1.bf16.msra.mxu0 0
    %3183 = vmatprep.subr.bf16.mxu0 0
    %3184 = vmatpush1.bf16.msra.mxu0 0
    %3185 = vmatprep.subr.bf16.mxu0 0
    %3186 = vmatpush1.bf16.msra.mxu0 0
    %3187 = vmatprep.subr.bf16.mxu0 0
    %3188 = vmatpush1.bf16.msra.mxu0 0
    %3189 = vmatprep.subr.bf16.mxu0 0
    %3190 = vmatpush1.bf16.msra.mxu0 0
    %3191 = vmatprep.subr.bf16.mxu0 0
    %3192 = vmatpush1.bf16.msra.mxu0 0
    %3193 = vmatprep.subr.bf16.mxu0 0
    %3194 = vmatpush1.bf16.msra.mxu0 0
    %3195 = vmatprep.subr.bf16.mxu0 0
    %3196 = vmatpush1.bf16.msra.mxu0 0
    %3197 = vmatprep.mubr.bf16.mxu0 0
    %3198 = vmatmul.mubr.bf16.gmra.mrb[0].mxu0 %v3163
    %v3199 = vpop.f32.mrb[0].mxu0
    %v3200 = vadd.f32 %v3135, %v3199
    %v3201 = vpop.f32.mrb[0].mxu0
    %v3202 = vpop.f32.mrb[0].mxu0
    %v3203 = vadd.f32 %v3135, %v3202
    %v3204 = vpop.f32.mrb[0].mxu0
    %3205 = vdwg.mxu0
    %v3206 = vadd.f32 %v3049, %v3200
    %v3207 = vadd.f32 %v3050, %v3203
    %v3208 = vsel %vm188, %v3206, 0.0
    %3209 = vadd.xlane.f32.xlu0 %v3208
    %v3210 = vpop.xlane.xlu0 %3209
    %v3211 = vsel %vm188, %v3207, 0.0
    %3212 = vadd.xlane.f32.xlu0 %v3211
    %v3213 = vpop.xlane.xlu0 %3212
    %v3214 = vmul.f32 %v3210, %v1570
    %v3215 = vmul.f32 %v3213, %v1570
    %v3216 = vsub.f32 %v3206, %v3214
    %v3217 = vsub.f32 %v3207, %v3215
    %v3218 = vmul.f32 %v3216, %v3216
    %v3219 = vmul.f32 %v3217, %v3217
    %v3220 = vsel %vm188, %v3218, 0.0
    %3221 = vadd.xlane.f32.xlu0 %v3220
    %v3222 = vpop.xlane.xlu0 %3221
    %v3223 = vsel %vm188, %v3219, 0.0
    %3224 = vadd.xlane.f32.xlu0 %v3223
    %v3225 = vpop.xlane.xlu0 %3224
    %v3226 = vmul.f32 %v3222, %v1570
    %v3227 = vmul.f32 %v3225, %v1570
    %v3228 = vadd.f32 %v3226, 1e-05
    %v3229 = vadd.f32 %v3227, 1e-05
    %v3230 = vrsqrt.pop %v3228
    %v3231 = vrsqrt.pop %v3229
    %v3232 = vmul.f32 %v3216, %v3230
    %v3233 = vmul.f32 %v3217, %v3231
    %v3234 = vld [vmem:[%s18] sm:$0x1]
    %v3236 = vlaneseq
    %v3237 = vshrl.u32 %v3236, 7
    %v3238 = vsub.s32 0, %v3237
    %v3239 = vrot.slane %v3234, %v3238
    %v3241 = vmul.f32 %v3232, %v3239
    %v3242 = vmul.f32 %v3233, %v3239
    %v3243 = vld [vmem:[%s19] sm:$0x1]
    %v3245 = vlaneseq
    %v3246 = vshrl.u32 %v3245, 7
    %v3247 = vsub.s32 0, %v3246
    %v3248 = vrot.slane %v3243, %v3247
    %v3250 = vadd.f32 %v3241, %v3248
    %v3251 = vadd.f32 %v3242, %v3248
    %3252 = vst.msk [vmem:[#allocation15] sm:$0xff] %vm188, %v3250
    %3253 = vst.msk [vmem:[#allocation15 + $0x8] sm:$0xff] %vm188, %v3251
    // Predicated region
    $region110: #{tpu_custom_call.1} parent=1 // pred_check
      _
    $region111: #{tpu_custom_call.1} parent=1 // pred_check_branch
      %3255 = sbr.rel (0) target = $region113
    $region112: #{tpu_custom_call.1} parent=1 // pred_region
      %s3257 = ssub.s32 256, 256
      %3258 = vsyncadd [#allocation4], %s3257
      %s3259 = sshll.u32 [#allocation15], 4
      %s3260 = int_to_ptr.vmem [resolvable:$true] %s3259
      %3265 = dma.vmem_to_hbm [thread:$0]  %s3260, 256, %s20, [#allocation4], 128, 128, 8
    $region113: #{tpu_custom_call.1} parent=1 // pred_fallthru
      _
    // Predicated region
    $region114: #{tpu_custom_call.1} parent=1 // pred_check
      _
    $region115: #{tpu_custom_call.1} parent=1 // pred_check_branch
      %3267 = sbr.rel (0) target = $region117
    $region116: #{tpu_custom_call.1} parent=1 // pred_region
      %3268 = dma.done [#allocation4], 256
    $region117: #{tpu_custom_call.1} parent=1 // pred_fallthru
      _
    %3269 = vsyncpa [#allocation3], 1
    %3270 = vsyncpa [#allocation8], 1
    %3271 = vsyncpa [#allocation11], 1
    %3272 = vsyncpa [#allocation14], 1
    %3273 = vsyncpa [#allocation4], 1
    %3274 = vsyncpa [#allocation5], 1

</llo_original>
